<compile_context>
chip_gen: v7x
topology: tpu7x:2x2x1
jax: 0.10.0
libtpu: 0.0.40
codegen_flags: <defaults>
</compile_context>

<pallas_src>
import math
from functools import partial

import jax
import jax.numpy as jnp
from jax import lax
from jax.experimental import pallas as pl
from jax.experimental.pallas import tpu as pltpu


# ---------------------------------------------------------------------------
# Config
# ---------------------------------------------------------------------------

TM = 512                      # L-tile (sublane) size for all fused conv kernels
COMPUTE_DTYPE = jnp.bfloat16  # operand / intermediate-activation dtype (f32 accum kept)
NEG = -1e30                   # finite "-inf" for max-pool padding (gelu(NEG) == -0.0, no NaN)


def _round_up(a, b):
    return -(-a // b) * b


def _cdiv(a, b):
    return -(-a // b)


def _gelu_exact(x):
    # Matches torch.nn.functional.gelu default (erf-based, not tanh approx).
    return 0.5 * x * (1.0 + lax.erf(x * 0.7071067811865476))


# ---------------------------------------------------------------------------
# Pallas kernels
# ---------------------------------------------------------------------------

def _conv_kernel(*refs, taps, dilation, n_win, apply_gelu, has_skip, has_skip_w):
    """Fused SamePadConv tile:
        out = [GELU](sum_k window[k*d : k*d+tm] @ W[k] + b) [+ skip | + skip@Wskip+bskip]
    refs: x_win_0 .. x_win_{n_win-1}, W, b, [skip, [Wskip, bskip]], out
    """
    xs, rest = refs[:n_win], refs[n_win:]
    w_ref, b_ref = rest[0], rest[1]
    pos = 2
    skip_ref = skw_ref = skb_ref = None
    if has_skip:
        skip_ref = rest[pos]
        pos += 1
        if has_skip_w:
            skw_ref, skb_ref = rest[pos], rest[pos + 1]
            pos += 2
    o_ref = rest[pos]

    tm, cout = o_ref.shape[1], o_ref.shape[2]

    # Halo window in VMEM: n_win adjacent tm-row blocks of the padded input.
    if n_win == 1:
        window = xs[0][0]
    else:
        window = jnp.concatenate([r[0] for r in xs], axis=0)       # (n_win*tm, Cin)

    acc = jnp.zeros((tm, cout), jnp.float32)
    for k in range(taps):                                           # taps fused: no HBM im2col
        off = k * dilation
        acc = acc + jnp.dot(window[off:off + tm, :], w_ref[k],
                            preferred_element_type=jnp.float32)
    acc = acc + b_ref[...].astype(jnp.float32)

    if apply_gelu:
        acc = _gelu_exact(acc)

    if has_skip:
        s = skip_ref[0]
        if has_skip_w:                                              # fused 1x1 projection
            s = (jnp.dot(s, skw_ref[...], preferred_element_type=jnp.float32)
                 + skb_ref[...].astype(jnp.float32))
        acc = acc + s.astype(jnp.float32)

    o_ref[0] = acc.astype(o_ref.dtype)


def _pool_gelu_conv_kernel(*refs, n_win):
    """Fused MaxPool1d(3,1,1) -> GELU -> Conv1d(Cin, Cout, 1) tile."""
    xs, rest = refs[:n_win], refs[n_win:]
    w_ref, b_ref, o_ref = rest
    tm = o_ref.shape[1]

    if n_win == 1:
        window = xs[0][0]
    else:
        window = jnp.concatenate([r[0] for r in xs], axis=0)       # (n_win*tm, Cin)

    m = jnp.maximum(jnp.maximum(window[0:tm, :], window[1:tm + 1, :]),
                    window[2:tm + 2, :])
    g = _gelu_exact(m.astype(jnp.float32))
    acc = (jnp.dot(g.astype(w_ref.dtype), w_ref[...],
                   preferred_element_type=jnp.float32)
           + b_ref[...].astype(jnp.float32))
    o_ref[0] = acc.astype(o_ref.dtype)


# ---------------------------------------------------------------------------
# Wrappers
# ---------------------------------------------------------------------------

def conv1d_same(x_cl, w, b, *, dilation=1, apply_gelu=False,
                skip=None, skip_w=None, skip_b=None, out_dtype=None):
    """PyTorch SamePadConv (stride=1) in channels-last layout, fully fused.

    x_cl: (B, L, Cin); w: (Cout, Cin, K) [PyTorch layout]; b: (Cout,)
    skip: (B, L_out, Cs) fused-added in the epilogue; if skip_w/skip_b are given
          it is first projected by a fused 1x1 conv (Cs -> Cout).
    Returns (B, L_out, Cout).
    """
    B, L, Cin = x_cl.shape
    Cout, Cin_w, K = w.shape
    assert Cin_w == Cin, (Cin_w, Cin)

    rf = (K - 1) * dilation + 1
    pad = rf // 2
    remove = 1 if rf % 2 == 0 else 0
    halo = (K - 1) * dilation
    L_out = L + 2 * pad - halo - remove            # == L for odd rf (always here)

    tm = min(TM, _round_up(L_out, 8))
    n_tiles = _cdiv(L_out, tm)
    n_win = 1 + _cdiv(halo, tm)                    # adjacent blocks covering tm + halo rows
    Lp = (n_tiles + n_win - 1) * tm                # padded input length (all blocks in-bounds)

    xp = jnp.pad(x_cl.astype(COMPUTE_DTYPE), ((0, 0), (pad, Lp - pad - L), (0, 0)))
    wt = jnp.transpose(w, (2, 1, 0)).astype(COMPUTE_DTYPE)        # (K, Cin, Cout)
    b2 = b.reshape(1, Cout).astype(jnp.float32)

    in_specs = [pl.BlockSpec((1, tm, Cin), (lambda bb, i, s=s: (bb, i + s, 0)))
                for s in range(n_win)]
    inputs = [xp] * n_win
    in_specs += [pl.BlockSpec((K, Cin, Cout), lambda bb, i: (0, 0, 0)),
                 pl.BlockSpec((1, Cout), lambda bb, i: (0, 0))]
    inputs += [wt, b2]

    has_skip = skip is not None
    has_skip_w = skip_w is not None
    if has_skip:
        if skip.shape[0] != B or skip.shape[1] != L_out:
            raise ValueError(f"skip shape {skip.shape} incompatible with output "
                             f"({B}, {L_out}, ...)")
        Cs = skip.shape[-1]
        sp = skip.astype(COMPUTE_DTYPE) if has_skip_w else skip
        sp = jnp.pad(sp, ((0, 0), (0, n_tiles * tm - L_out), (0, 0)))
        in_specs.append(pl.BlockSpec((1, tm, Cs), lambda bb, i: (bb, i, 0)))
        inputs.append(sp)
        if has_skip_w:
            skw = skip_w.reshape(Cout, Cs).T.astype(COMPUTE_DTYPE)   # (Cs, Cout)
            skb = skip_b.reshape(1, Cout).astype(jnp.float32)
            in_specs += [pl.BlockSpec((Cs, Cout), lambda bb, i: (0, 0)),
                         pl.BlockSpec((1, Cout), lambda bb, i: (0, 0))]
            inputs += [skw, skb]

    out_dtype = COMPUTE_DTYPE if out_dtype is None else out_dtype
    kern = partial(_conv_kernel, taps=K, dilation=dilation, n_win=n_win,
                   apply_gelu=apply_gelu, has_skip=has_skip, has_skip_w=has_skip_w)
    return pl.pallas_call(
        kern,
        out_shape=jax.ShapeDtypeStruct((B, L_out, Cout), out_dtype),
        grid=(B, n_tiles),
        in_specs=in_specs,
        out_specs=pl.BlockSpec((1, tm, Cout), lambda bb, i: (bb, i, 0)),
        compiler_params=pltpu.CompilerParams(
            dimension_semantics=("parallel", "parallel")),
    )(*inputs)


def maxpool3_gelu_conv1x1(x_cl, w, b, *, out_dtype=None):
    """nn.MaxPool1d(3,1,1) -> nn.GELU -> nn.Conv1d(Cin, Cout, 1), fused & L-tiled.

    x_cl: (B, L, Cin); w: (Cout, Cin, 1); b: (Cout,).  Returns (B, L, Cout).
    """
    B, L, Cin = x_cl.shape
    Cout = w.shape[0]

    halo = 2
    tm = min(TM, _round_up(L, 8))
    n_tiles = _cdiv(L, tm)
    n_win = 1 + _cdiv(halo, tm)
    Lp = (n_tiles + n_win - 1) * tm

    xp = jnp.pad(x_cl.astype(COMPUTE_DTYPE), ((0, 0), (1, Lp - 1 - L), (0, 0)),
                 constant_values=NEG)
    wt = w.reshape(Cout, Cin).T.astype(COMPUTE_DTYPE)             # (Cin, Cout)
    b2 = b.reshape(1, Cout).astype(jnp.float32)

    in_specs = [pl.BlockSpec((1, tm, Cin), (lambda bb, i, s=s: (bb, i + s, 0)))
                for s in range(n_win)]
    in_specs += [pl.BlockSpec((Cin, Cout), lambda bb, i: (0, 0)),
                 pl.BlockSpec((1, Cout), lambda bb, i: (0, 0))]

    out_dtype = COMPUTE_DTYPE if out_dtype is None else out_dtype
    return pl.pallas_call(
        partial(_pool_gelu_conv_kernel, n_win=n_win),
        out_shape=jax.ShapeDtypeStruct((B, L, Cout), out_dtype),
        grid=(B, n_tiles),
        in_specs=in_specs,
        out_specs=pl.BlockSpec((1, tm, Cout), lambda bb, i: (bb, i, 0)),
        compiler_params=pltpu.CompilerParams(
            dimension_semantics=("parallel", "parallel")),
    )(*([xp] * n_win), wt, b2)


# ---------------------------------------------------------------------------
# Parameter init (deterministic, mirrors nn.Conv1d default init shapes/bounds)
# ---------------------------------------------------------------------------

def _conv_params(key, cout, cin, k):
    kw, kb = jax.random.split(key)
    bound = 1.0 / math.sqrt(cin * k)
    w = jax.random.uniform(kw, (cout, cin, k), jnp.float32, -bound, bound)
    b = jax.random.uniform(kb, (cout,), jnp.float32, -bound, bound)
    return w, b


def init_inception_params(key, in_channels, out_channels, hidden_channels,
                          kernel_sizes, residual):
    keys = jax.random.split(key, 2 * len(kernel_sizes) + 4)
    it = iter(keys)
    params = {}
    for i, k in enumerate(kernel_sizes):
        params[f"unit{i}_w1"], params[f"unit{i}_b1"] = _conv_params(
            next(it), hidden_channels, in_channels, k)
        params[f"unit{i}_w2"], params[f"unit{i}_b2"] = _conv_params(
            next(it), hidden_channels, hidden_channels, k)
    params["mp_w"], params["mp_b"] = _conv_params(next(it), hidden_channels, in_channels, 1)
    params["rfin_w"], params["rfin_b"] = _conv_params(next(it), hidden_channels, hidden_channels, 1)
    params["agg_w"], params["agg_b"] = _conv_params(
        next(it), out_channels, hidden_channels * (len(kernel_sizes) + 1), 3)
    if residual and in_channels != out_channels:
        params["res_w"], params["res_b"] = _conv_params(next(it), out_channels, in_channels, 1)
    return params


# ---------------------------------------------------------------------------
# InceptionBlock forward (public tensors use PyTorch NCL convention)
# ---------------------------------------------------------------------------

def inception_block_forward(params, x, res_prev=None, *, in_channels, out_channels,
                            index, residual, stride=1, kernel_sizes=(3, 5)):
    if stride != 1:
        # TODO(synk): strided residual_fin needs strided tap gathers; not implemented.
        raise NotImplementedError("Pallas InceptionBlock path supports stride=1 only")

    use_residual = residual and in_channels != out_channels
    last_idx = max(0, index - 1)

    x_cl = jnp.transpose(x, (0, 2, 1))                 # NCL -> NLC, once at entry

    res_cl = []
    for i, k in enumerate(kernel_sizes):
        dil = (2 * k - 1) ** last_idx
        # BasicUnit: SamePadConv -> SamePadConv -> GELU (GELU fused in 2nd conv epilogue)
        h = conv1d_same(x_cl, params[f"unit{i}_w1"], params[f"unit{i}_b1"], dilation=dil)
        h = conv1d_same(h, params[f"unit{i}_w2"], params[f"unit{i}_b2"],
                        dilation=dil, apply_gelu=True)
        if res_prev is not None:
            # conv(x) + residual_fin(res_prev[i]); the add is fused into the 1x1 conv epilogue
            rp_cl = jnp.transpose(res_prev[i], (0, 2, 1))
            h = conv1d_same(rp_cl, params["rfin_w"], params["rfin_b"], skip=h)
        res_cl.append(h)

    # max_pool_layers: MaxPool1d(3,1,1) -> GELU -> Conv1d(in, hidden, 1), one kernel
    res_mp = maxpool3_gelu_conv1x1(x_cl, params["mp_w"], params["mp_b"])

    # channel concat is the last (lane) dim in channels-last layout
    x_cat = jnp.concatenate(res_cl + [res_mp], axis=-1)   # (B, L, hidden*(n+1)) bf16

    # aggregator: Conv1d(hidden*(n+1), out, 3, padding=1) with the skip fused in-kernel
    if use_residual:
        out_cl = conv1d_same(x_cat, params["agg_w"], params["agg_b"],
                             skip=x_cl, skip_w=params["res_w"], skip_b=params["res_b"],
                             out_dtype=jnp.float32)
    else:
        # x + org_x  (requires in_channels == out_channels, as in the PyTorch module)
        out_cl = conv1d_same(x_cat, params["agg_w"], params["agg_b"],
                             skip=x_cl, out_dtype=jnp.float32)

    out = jnp.transpose(out_cl, (0, 2, 1))                 # NLC -> NCL at exit
    res_ncl = [jnp.transpose(r, (0, 2, 1)).astype(jnp.float32) for r in res_cl]
    return out, res_ncl


# ---------------------------------------------------------------------------
# Demo
# ---------------------------------------------------------------------------

if __name__ == "__main__":
    B, C_IN, C_OUT, L = 2, 8, 8, 16
    HIDDEN = 32
    KERNEL_SIZES = (3, 5)
    INDEX = 1            # -> dilation 1 inside the BasicUnits
    RESIDUAL = False     # in == out, so forward does x + org_x

    key = jax.random.PRNGKey(0)
    k_params, k_x = jax.random.split(key)
    params = init_inception_params(k_params, C_IN, C_OUT, HIDDEN, KERNEL_SIZES, RESIDUAL)
    x = jax.random.normal(k_x, (B, C_IN, L), jnp.float32)

    fwd = jax.jit(partial(
        inception_block_forward,
        in_channels=C_IN, out_channels=C_OUT, index=INDEX,
        residual=RESIDUAL, stride=1, kernel_sizes=KERNEL_SIZES))

    out, res_list = fwd(params, x)

    jax.block_until_ready(out)
    for r in res_list:
        jax.block_until_ready(r)

    assert out.shape == (B, C_OUT, L), out.shape
    assert out.dtype == jnp.float32
    assert len(res_list) == len(KERNEL_SIZES)
    assert all(r.shape == (B, HIDDEN, L) for r in res_list)
    assert bool(jnp.all(jnp.isfinite(out)))
    assert all(bool(jnp.all(jnp.isfinite(r))) for r in res_list)
    print("KERNEL_OK")
</pallas_src>

<mosaic_0001>
module attributes {stable_mosaic.version = 11 : i64} {
  func.func @_conv_kernel(%arg0: i32, %arg1: i32, %arg2: memref<1x16x8xbf16, #tpu.memory_space<vmem>>, %arg3: memref<1x16x8xbf16, #tpu.memory_space<vmem>>, %arg4: memref<3x8x32xbf16, #tpu.memory_space<vmem>>, %arg5: memref<1x32xf32, #tpu.memory_space<vmem>>, %arg6: memref<1x16x32xbf16, #tpu.memory_space<vmem>>) attributes {dimension_semantics = [#tpu.dimension_semantics<parallel>, #tpu.dimension_semantics<parallel>], iteration_bounds = array<i64: 2, 1>, scalar_prefetch = 0 : i64, scratch_operands = 0 : i64, tpu.core_type = #tpu.core_type<tc>, window_params = [{transform_indices = @transform_0, window_bounds = array<i64: 1, 16, 8>}, {transform_indices = @transform_1, window_bounds = array<i64: 1, 16, 8>}, {pipeline_mode = #tpu.pipeline_mode<synchronous>, transform_indices = @transform_2, window_bounds = array<i64: 3, 8, 32>}, {pipeline_mode = #tpu.pipeline_mode<synchronous>, transform_indices = @transform_3, window_bounds = array<i64: 1, 32>}, {transform_indices = @transform_4, window_bounds = array<i64: 1, 16, 32>}]} {
    %c0 = arith.constant 0 : index
    %c0_0 = arith.constant 0 : index
    %c0_1 = arith.constant 0 : index
    %0 = vector.load %arg2[%c0, %c0_0, %c0_1] : memref<1x16x8xbf16, #tpu.memory_space<vmem>>, vector<1x16x8xbf16>
    %1 = vector.shape_cast %0 : vector<1x16x8xbf16> to vector<16x8xbf16>
    %c0_2 = arith.constant 0 : index
    %c0_3 = arith.constant 0 : index
    %c0_4 = arith.constant 0 : index
    %2 = vector.load %arg3[%c0_2, %c0_3, %c0_4] : memref<1x16x8xbf16, #tpu.memory_space<vmem>>, vector<1x16x8xbf16>
    %3 = vector.shape_cast %2 : vector<1x16x8xbf16> to vector<16x8xbf16>
    %4 = tpu.concatenate %1, %3 in 0 : vector<16x8xbf16>, vector<16x8xbf16> -> vector<32x8xbf16>
    %cst = arith.constant 0.000000e+00 : f32
    %5 = vector.broadcast %cst : f32 to vector<16x32xf32>
    %6 = vector.extract_strided_slice %4 {offsets = [0, 0], sizes = [16, 8], strides = [1, 1]} : vector<32x8xbf16> to vector<16x8xbf16>
    %c0_5 = arith.constant 0 : index
    %c0_6 = arith.constant 0 : index
    %c0_7 = arith.constant 0 : index
    %7 = vector.load %arg4[%c0_5, %c0_6, %c0_7] : memref<3x8x32xbf16, #tpu.memory_space<vmem>>, vector<1x8x32xbf16>
    %8 = vector.shape_cast %7 : vector<1x8x32xbf16> to vector<8x32xbf16>
    %cst_8 = arith.constant dense<0.000000e+00> : vector<16x32xf32>
    %9 = tpu.matmul %6, %8, %cst_8 {dimension_numbers = #tpu.dot_dimension_numbers<[1], [0], [0], [1], [0, 0, 1, 1], [], []>} : vector<16x8xbf16>, vector<8x32xbf16>, vector<16x32xf32> -> vector<16x32xf32>
    %10 = arith.addf %5, %9 : vector<16x32xf32>
    %11 = vector.extract_strided_slice %4 {offsets = [1, 0], sizes = [16, 8], strides = [1, 1]} : vector<32x8xbf16> to vector<16x8xbf16>
    %c1 = arith.constant 1 : index
    %c0_9 = arith.constant 0 : index
    %c0_10 = arith.constant 0 : index
    %12 = vector.load %arg4[%c1, %c0_9, %c0_10] : memref<3x8x32xbf16, #tpu.memory_space<vmem>>, vector<1x8x32xbf16>
    %13 = vector.shape_cast %12 : vector<1x8x32xbf16> to vector<8x32xbf16>
    %cst_11 = arith.constant dense<0.000000e+00> : vector<16x32xf32>
    %14 = tpu.matmul %11, %13, %cst_11 {dimension_numbers = #tpu.dot_dimension_numbers<[1], [0], [0], [1], [0, 0, 1, 1], [], []>} : vector<16x8xbf16>, vector<8x32xbf16>, vector<16x32xf32> -> vector<16x32xf32>
    %15 = arith.addf %10, %14 : vector<16x32xf32>
    %16 = vector.extract_strided_slice %4 {offsets = [2, 0], sizes = [16, 8], strides = [1, 1]} : vector<32x8xbf16> to vector<16x8xbf16>
    %c2 = arith.constant 2 : index
    %c0_12 = arith.constant 0 : index
    %c0_13 = arith.constant 0 : index
    %17 = vector.load %arg4[%c2, %c0_12, %c0_13] : memref<3x8x32xbf16, #tpu.memory_space<vmem>>, vector<1x8x32xbf16>
    %18 = vector.shape_cast %17 : vector<1x8x32xbf16> to vector<8x32xbf16>
    %cst_14 = arith.constant dense<0.000000e+00> : vector<16x32xf32>
    %19 = tpu.matmul %16, %18, %cst_14 {dimension_numbers = #tpu.dot_dimension_numbers<[1], [0], [0], [1], [0, 0, 1, 1], [], []>} : vector<16x8xbf16>, vector<8x32xbf16>, vector<16x32xf32> -> vector<16x32xf32>
    %20 = arith.addf %15, %19 : vector<16x32xf32>
    %c0_15 = arith.constant 0 : index
    %c0_16 = arith.constant 0 : index
    %21 = vector.load %arg5[%c0_15, %c0_16] : memref<1x32xf32, #tpu.memory_space<vmem>>, vector<1x32xf32>
    %22 = vector.broadcast %21 : vector<1x32xf32> to vector<16x32xf32>
    %23 = arith.addf %20, %22 : vector<16x32xf32>
    %24 = arith.truncf %23 : vector<16x32xf32> to vector<16x32xbf16>
    %c0_17 = arith.constant 0 : index
    %c0_18 = arith.constant 0 : index
    %c0_19 = arith.constant 0 : index
    %25 = vector.load %arg6[%c0_17, %c0_18, %c0_19] : memref<1x16x32xbf16, #tpu.memory_space<vmem>>, vector<1x16x32xbf16>
    %26 = vector.shape_cast %25 : vector<1x16x32xbf16> to vector<16x32xbf16>
    %27 = vector.shape_cast %24 : vector<16x32xbf16> to vector<1x16x32xbf16>
    tpu.vector_store %arg6[%c0_17, %c0_18, %c0_19], %27 {strides = array<i32>} : memref<1x16x32xbf16, #tpu.memory_space<vmem>>, vector<1x16x32xbf16>,
    return
  }
  func.func @transform_0(%arg0: i32, %arg1: i32) -> (i32, i32, i32) {
    %c0_i32 = arith.constant 0 : i32
    %0 = arith.addi %arg1, %c0_i32 : i32
    %c0_i32_0 = arith.constant 0 : i32
    %c0_i32_1 = arith.constant 0 : i32
    return %arg0, %0, %c0_i32_0 : i32, i32, i32
  }
  func.func @transform_1(%arg0: i32, %arg1: i32) -> (i32, i32, i32) {
    %c1_i32 = arith.constant 1 : i32
    %0 = arith.addi %arg1, %c1_i32 : i32
    %c0_i32 = arith.constant 0 : i32
    %c0_i32_0 = arith.constant 0 : i32
    return %arg0, %0, %c0_i32 : i32, i32, i32
  }
  func.func @transform_2(%arg0: i32, %arg1: i32) -> (i32, i32, i32) {
    %c0_i32 = arith.constant 0 : i32
    %c0_i32_0 = arith.constant 0 : i32
    %c0_i32_1 = arith.constant 0 : i32
    %c0_i32_2 = arith.constant 0 : i32
    return %c0_i32, %c0_i32_0, %c0_i32_1 : i32, i32, i32
  }
  func.func @transform_3(%arg0: i32, %arg1: i32) -> (i32, i32) {
    %c0_i32 = arith.constant 0 : i32
    %c0_i32_0 = arith.constant 0 : i32
    %c0_i32_1 = arith.constant 0 : i32
    return %c0_i32, %c0_i32_0 : i32, i32
  }
  func.func @transform_4(%arg0: i32, %arg1: i32) -> (i32, i32, i32) {
    %c0_i32 = arith.constant 0 : i32
    %c0_i32_0 = arith.constant 0 : i32
    return %arg0, %arg1, %c0_i32 : i32, i32, i32
  }
}

module attributes {stable_mosaic.version = 11 : i64} {
  func.func @_conv_kernel(%arg0: i32, %arg1: i32, %arg2: memref<1x16x8xbf16, #tpu.memory_space<vmem>>, %arg3: memref<1x16x8xbf16, #tpu.memory_space<vmem>>, %arg4: memref<5x8x32xbf16, #tpu.memory_space<vmem>>, %arg5: memref<1x32xf32, #tpu.memory_space<vmem>>, %arg6: memref<1x16x32xbf16, #tpu.memory_space<vmem>>) attributes {dimension_semantics = [#tpu.dimension_semantics<parallel>, #tpu.dimension_semantics<parallel>], iteration_bounds = array<i64: 2, 1>, scalar_prefetch = 0 : i64, scratch_operands = 0 : i64, tpu.core_type = #tpu.core_type<tc>, window_params = [{transform_indices = @transform_0, window_bounds = array<i64: 1, 16, 8>}, {transform_indices = @transform_1, window_bounds = array<i64: 1, 16, 8>}, {pipeline_mode = #tpu.pipeline_mode<synchronous>, transform_indices = @transform_2, window_bounds = array<i64: 5, 8, 32>}, {pipeline_mode = #tpu.pipeline_mode<synchronous>, transform_indices = @transform_3, window_bounds = array<i64: 1, 32>}, {transform_indices = @transform_4, window_bounds = array<i64: 1, 16, 32>}]} {
    %c0 = arith.constant 0 : index
    %c0_0 = arith.constant 0 : index
    %c0_1 = arith.constant 0 : index
    %0 = vector.load %arg2[%c0, %c0_0, %c0_1] : memref<1x16x8xbf16, #tpu.memory_space<vmem>>, vector<1x16x8xbf16>
    %1 = vector.shape_cast %0 : vector<1x16x8xbf16> to vector<16x8xbf16>
    %c0_2 = arith.constant 0 : index
    %c0_3 = arith.constant 0 : index
    %c0_4 = arith.constant 0 : index
    %2 = vector.load %arg3[%c0_2, %c0_3, %c0_4] : memref<1x16x8xbf16, #tpu.memory_space<vmem>>, vector<1x16x8xbf16>
    %3 = vector.shape_cast %2 : vector<1x16x8xbf16> to vector<16x8xbf16>
    %4 = tpu.concatenate %1, %3 in 0 : vector<16x8xbf16>, vector<16x8xbf16> -> vector<32x8xbf16>
    %cst = arith.constant 0.000000e+00 : f32
    %5 = vector.broadcast %cst : f32 to vector<16x32xf32>
    %6 = vector.extract_strided_slice %4 {offsets = [0, 0], sizes = [16, 8], strides = [1, 1]} : vector<32x8xbf16> to vector<16x8xbf16>
    %c0_5 = arith.constant 0 : index
    %c0_6 = arith.constant 0 : index
    %c0_7 = arith.constant 0 : index
    %7 = vector.load %arg4[%c0_5, %c0_6, %c0_7] : memref<5x8x32xbf16, #tpu.memory_space<vmem>>, vector<1x8x32xbf16>
    %8 = vector.shape_cast %7 : vector<1x8x32xbf16> to vector<8x32xbf16>
    %cst_8 = arith.constant dense<0.000000e+00> : vector<16x32xf32>
    %9 = tpu.matmul %6, %8, %cst_8 {dimension_numbers = #tpu.dot_dimension_numbers<[1], [0], [0], [1], [0, 0, 1, 1], [], []>} : vector<16x8xbf16>, vector<8x32xbf16>, vector<16x32xf32> -> vector<16x32xf32>
    %10 = arith.addf %5, %9 : vector<16x32xf32>
    %11 = vector.extract_strided_slice %4 {offsets = [1, 0], sizes = [16, 8], strides = [1, 1]} : vector<32x8xbf16> to vector<16x8xbf16>
    %c1 = arith.constant 1 : index
    %c0_9 = arith.constant 0 : index
    %c0_10 = arith.constant 0 : index
    %12 = vector.load %arg4[%c1, %c0_9, %c0_10] : memref<5x8x32xbf16, #tpu.memory_space<vmem>>, vector<1x8x32xbf16>
    %13 = vector.shape_cast %12 : vector<1x8x32xbf16> to vector<8x32xbf16>
    %cst_11 = arith.constant dense<0.000000e+00> : vector<16x32xf32>
    %14 = tpu.matmul %11, %13, %cst_11 {dimension_numbers = #tpu.dot_dimension_numbers<[1], [0], [0], [1], [0, 0, 1, 1], [], []>} : vector<16x8xbf16>, vector<8x32xbf16>, vector<16x32xf32> -> vector<16x32xf32>
    %15 = arith.addf %10, %14 : vector<16x32xf32>
    %16 = vector.extract_strided_slice %4 {offsets = [2, 0], sizes = [16, 8], strides = [1, 1]} : vector<32x8xbf16> to vector<16x8xbf16>
    %c2 = arith.constant 2 : index
    %c0_12 = arith.constant 0 : index
    %c0_13 = arith.constant 0 : index
    %17 = vector.load %arg4[%c2, %c0_12, %c0_13] : memref<5x8x32xbf16, #tpu.memory_space<vmem>>, vector<1x8x32xbf16>
    %18 = vector.shape_cast %17 : vector<1x8x32xbf16> to vector<8x32xbf16>
    %cst_14 = arith.constant dense<0.000000e+00> : vector<16x32xf32>
    %19 = tpu.matmul %16, %18, %cst_14 {dimension_numbers = #tpu.dot_dimension_numbers<[1], [0], [0], [1], [0, 0, 1, 1], [], []>} : vector<16x8xbf16>, vector<8x32xbf16>, vector<16x32xf32> -> vector<16x32xf32>
    %20 = arith.addf %15, %19 : vector<16x32xf32>
    %21 = vector.extract_strided_slice %4 {offsets = [3, 0], sizes = [16, 8], strides = [1, 1]} : vector<32x8xbf16> to vector<16x8xbf16>
    %c3 = arith.constant 3 : index
    %c0_15 = arith.constant 0 : index
    %c0_16 = arith.constant 0 : index
    %22 = vector.load %arg4[%c3, %c0_15, %c0_16] : memref<5x8x32xbf16, #tpu.memory_space<vmem>>, vector<1x8x32xbf16>
    %23 = vector.shape_cast %22 : vector<1x8x32xbf16> to vector<8x32xbf16>
    %cst_17 = arith.constant dense<0.000000e+00> : vector<16x32xf32>
    %24 = tpu.matmul %21, %23, %cst_17 {dimension_numbers = #tpu.dot_dimension_numbers<[1], [0], [0], [1], [0, 0, 1, 1], [], []>} : vector<16x8xbf16>, vector<8x32xbf16>, vector<16x32xf32> -> vector<16x32xf32>
    %25 = arith.addf %20, %24 : vector<16x32xf32>
    %26 = vector.extract_strided_slice %4 {offsets = [4, 0], sizes = [16, 8], strides = [1, 1]} : vector<32x8xbf16> to vector<16x8xbf16>
    %c4 = arith.constant 4 : index
    %c0_18 = arith.constant 0 : index
    %c0_19 = arith.constant 0 : index
    %27 = vector.load %arg4[%c4, %c0_18, %c0_19] : memref<5x8x32xbf16, #tpu.memory_space<vmem>>, vector<1x8x32xbf16>
    %28 = vector.shape_cast %27 : vector<1x8x32xbf16> to vector<8x32xbf16>
    %cst_20 = arith.constant dense<0.000000e+00> : vector<16x32xf32>
    %29 = tpu.matmul %26, %28, %cst_20 {dimension_numbers = #tpu.dot_dimension_numbers<[1], [0], [0], [1], [0, 0, 1, 1], [], []>} : vector<16x8xbf16>, vector<8x32xbf16>, vector<16x32xf32> -> vector<16x32xf32>
    %30 = arith.addf %25, %29 : vector<16x32xf32>
    %c0_21 = arith.constant 0 : index
    %c0_22 = arith.constant 0 : index
    %31 = vector.load %arg5[%c0_21, %c0_22] : memref<1x32xf32, #tpu.memory_space<vmem>>, vector<1x32xf32>
    %32 = vector.broadcast %31 : vector<1x32xf32> to vector<16x32xf32>
    %33 = arith.addf %30, %32 : vector<16x32xf32>
    %34 = arith.truncf %33 : vector<16x32xf32> to vector<16x32xbf16>
    %c0_23 = arith.constant 0 : index
    %c0_24 = arith.constant 0 : index
    %c0_25 = arith.constant 0 : index
    %35 = vector.load %arg6[%c0_23, %c0_24, %c0_25] : memref<1x16x32xbf16, #tpu.memory_space<vmem>>, vector<1x16x32xbf16>
    %36 = vector.shape_cast %35 : vector<1x16x32xbf16> to vector<16x32xbf16>
    %37 = vector.shape_cast %34 : vector<16x32xbf16> to vector<1x16x32xbf16>
    tpu.vector_store %arg6[%c0_23, %c0_24, %c0_25], %37 {strides = array<i32>} : memref<1x16x32xbf16, #tpu.memory_space<vmem>>, vector<1x16x32xbf16>,
    return
  }
  func.func @transform_0(%arg0: i32, %arg1: i32) -> (i32, i32, i32) {
    %c0_i32 = arith.constant 0 : i32
    %0 = arith.addi %arg1, %c0_i32 : i32
    %c0_i32_0 = arith.constant 0 : i32
    %c0_i32_1 = arith.constant 0 : i32
    return %arg0, %0, %c0_i32_0 : i32, i32, i32
  }
  func.func @transform_1(%arg0: i32, %arg1: i32) -> (i32, i32, i32) {
    %c1_i32 = arith.constant 1 : i32
    %0 = arith.addi %arg1, %c1_i32 : i32
    %c0_i32 = arith.constant 0 : i32
    %c0_i32_0 = arith.constant 0 : i32
    return %arg0, %0, %c0_i32 : i32, i32, i32
  }
  func.func @transform_2(%arg0: i32, %arg1: i32) -> (i32, i32, i32) {
    %c0_i32 = arith.constant 0 : i32
    %c0_i32_0 = arith.constant 0 : i32
    %c0_i32_1 = arith.constant 0 : i32
    %c0_i32_2 = arith.constant 0 : i32
    return %c0_i32, %c0_i32_0, %c0_i32_1 : i32, i32, i32
  }
  func.func @transform_3(%arg0: i32, %arg1: i32) -> (i32, i32) {
    %c0_i32 = arith.constant 0 : i32
    %c0_i32_0 = arith.constant 0 : i32
    %c0_i32_1 = arith.constant 0 : i32
    return %c0_i32, %c0_i32_0 : i32, i32
  }
  func.func @transform_4(%arg0: i32, %arg1: i32) -> (i32, i32, i32) {
    %c0_i32 = arith.constant 0 : i32
    %c0_i32_0 = arith.constant 0 : i32
    return %arg0, %arg1, %c0_i32 : i32, i32, i32
  }
}

module attributes {stable_mosaic.version = 11 : i64} {
  func.func @_conv_kernel(%arg0: i32, %arg1: i32, %arg2: memref<1x16x32xbf16, #tpu.memory_space<vmem>>, %arg3: memref<1x16x32xbf16, #tpu.memory_space<vmem>>, %arg4: memref<5x32x32xbf16, #tpu.memory_space<vmem>>, %arg5: memref<1x32xf32, #tpu.memory_space<vmem>>, %arg6: memref<1x16x32xbf16, #tpu.memory_space<vmem>>) attributes {dimension_semantics = [#tpu.dimension_semantics<parallel>, #tpu.dimension_semantics<parallel>], iteration_bounds = array<i64: 2, 1>, scalar_prefetch = 0 : i64, scratch_operands = 0 : i64, tpu.core_type = #tpu.core_type<tc>, window_params = [{transform_indices = @transform_0, window_bounds = array<i64: 1, 16, 32>}, {transform_indices = @transform_1, window_bounds = array<i64: 1, 16, 32>}, {pipeline_mode = #tpu.pipeline_mode<synchronous>, transform_indices = @transform_2, window_bounds = array<i64: 5, 32, 32>}, {pipeline_mode = #tpu.pipeline_mode<synchronous>, transform_indices = @transform_3, window_bounds = array<i64: 1, 32>}, {transform_indices = @transform_4, window_bounds = array<i64: 1, 16, 32>}]} {
    %c0 = arith.constant 0 : index
    %c0_0 = arith.constant 0 : index
    %c0_1 = arith.constant 0 : index
    %0 = vector.load %arg2[%c0, %c0_0, %c0_1] : memref<1x16x32xbf16, #tpu.memory_space<vmem>>, vector<1x16x32xbf16>
    %1 = vector.shape_cast %0 : vector<1x16x32xbf16> to vector<16x32xbf16>
    %c0_2 = arith.constant 0 : index
    %c0_3 = arith.constant 0 : index
    %c0_4 = arith.constant 0 : index
    %2 = vector.load %arg3[%c0_2, %c0_3, %c0_4] : memref<1x16x32xbf16, #tpu.memory_space<vmem>>, vector<1x16x32xbf16>
    %3 = vector.shape_cast %2 : vector<1x16x32xbf16> to vector<16x32xbf16>
    %4 = tpu.concatenate %1, %3 in 0 : vector<16x32xbf16>, vector<16x32xbf16> -> vector<32x32xbf16>
    %cst = arith.constant 0.000000e+00 : f32
    %5 = vector.broadcast %cst : f32 to vector<16x32xf32>
    %6 = vector.extract_strided_slice %4 {offsets = [0, 0], sizes = [16, 32], strides = [1, 1]} : vector<32x32xbf16> to vector<16x32xbf16>
    %c0_5 = arith.constant 0 : index
    %c0_6 = arith.constant 0 : index
    %c0_7 = arith.constant 0 : index
    %7 = vector.load %arg4[%c0_5, %c0_6, %c0_7] : memref<5x32x32xbf16, #tpu.memory_space<vmem>>, vector<1x32x32xbf16>
    %8 = vector.shape_cast %7 : vector<1x32x32xbf16> to vector<32x32xbf16>
    %cst_8 = arith.constant dense<0.000000e+00> : vector<16x32xf32>
    %9 = tpu.matmul %6, %8, %cst_8 {dimension_numbers = #tpu.dot_dimension_numbers<[1], [0], [0], [1], [0, 0, 1, 1], [], []>} : vector<16x32xbf16>, vector<32x32xbf16>, vector<16x32xf32> -> vector<16x32xf32>
    %10 = arith.addf %5, %9 : vector<16x32xf32>
    %11 = vector.extract_strided_slice %4 {offsets = [1, 0], sizes = [16, 32], strides = [1, 1]} : vector<32x32xbf16> to vector<16x32xbf16>
    %c1 = arith.constant 1 : index
    %c0_9 = arith.constant 0 : index
    %c0_10 = arith.constant 0 : index
    %12 = vector.load %arg4[%c1, %c0_9, %c0_10] : memref<5x32x32xbf16, #tpu.memory_space<vmem>>, vector<1x32x32xbf16>
    %13 = vector.shape_cast %12 : vector<1x32x32xbf16> to vector<32x32xbf16>
    %cst_11 = arith.constant dense<0.000000e+00> : vector<16x32xf32>
    %14 = tpu.matmul %11, %13, %cst_11 {dimension_numbers = #tpu.dot_dimension_numbers<[1], [0], [0], [1], [0, 0, 1, 1], [], []>} : vector<16x32xbf16>, vector<32x32xbf16>, vector<16x32xf32> -> vector<16x32xf32>
    %15 = arith.addf %10, %14 : vector<16x32xf32>
    %16 = vector.extract_strided_slice %4 {offsets = [2, 0], sizes = [16, 32], strides = [1, 1]} : vector<32x32xbf16> to vector<16x32xbf16>
    %c2 = arith.constant 2 : index
    %c0_12 = arith.constant 0 : index
    %c0_13 = arith.constant 0 : index
    %17 = vector.load %arg4[%c2, %c0_12, %c0_13] : memref<5x32x32xbf16, #tpu.memory_space<vmem>>, vector<1x32x32xbf16>
    %18 = vector.shape_cast %17 : vector<1x32x32xbf16> to vector<32x32xbf16>
    %cst_14 = arith.constant dense<0.000000e+00> : vector<16x32xf32>
    %19 = tpu.matmul %16, %18, %cst_14 {dimension_numbers = #tpu.dot_dimension_numbers<[1], [0], [0], [1], [0, 0, 1, 1], [], []>} : vector<16x32xbf16>, vector<32x32xbf16>, vector<16x32xf32> -> vector<16x32xf32>
    %20 = arith.addf %15, %19 : vector<16x32xf32>
    %21 = vector.extract_strided_slice %4 {offsets = [3, 0], sizes = [16, 32], strides = [1, 1]} : vector<32x32xbf16> to vector<16x32xbf16>
    %c3 = arith.constant 3 : index
    %c0_15 = arith.constant 0 : index
    %c0_16 = arith.constant 0 : index
    %22 = vector.load %arg4[%c3, %c0_15, %c0_16] : memref<5x32x32xbf16, #tpu.memory_space<vmem>>, vector<1x32x32xbf16>
    %23 = vector.shape_cast %22 : vector<1x32x32xbf16> to vector<32x32xbf16>
    %cst_17 = arith.constant dense<0.000000e+00> : vector<16x32xf32>
    %24 = tpu.matmul %21, %23, %cst_17 {dimension_numbers = #tpu.dot_dimension_numbers<[1], [0], [0], [1], [0, 0, 1, 1], [], []>} : vector<16x32xbf16>, vector<32x32xbf16>, vector<16x32xf32> -> vector<16x32xf32>
    %25 = arith.addf %20, %24 : vector<16x32xf32>
    %26 = vector.extract_strided_slice %4 {offsets = [4, 0], sizes = [16, 32], strides = [1, 1]} : vector<32x32xbf16> to vector<16x32xbf16>
    %c4 = arith.constant 4 : index
    %c0_18 = arith.constant 0 : index
    %c0_19 = arith.constant 0 : index
    %27 = vector.load %arg4[%c4, %c0_18, %c0_19] : memref<5x32x32xbf16, #tpu.memory_space<vmem>>, vector<1x32x32xbf16>
    %28 = vector.shape_cast %27 : vector<1x32x32xbf16> to vector<32x32xbf16>
    %cst_20 = arith.constant dense<0.000000e+00> : vector<16x32xf32>
    %29 = tpu.matmul %26, %28, %cst_20 {dimension_numbers = #tpu.dot_dimension_numbers<[1], [0], [0], [1], [0, 0, 1, 1], [], []>} : vector<16x32xbf16>, vector<32x32xbf16>, vector<16x32xf32> -> vector<16x32xf32>
    %30 = arith.addf %25, %29 : vector<16x32xf32>
    %c0_21 = arith.constant 0 : index
    %c0_22 = arith.constant 0 : index
    %31 = vector.load %arg5[%c0_21, %c0_22] : memref<1x32xf32, #tpu.memory_space<vmem>>, vector<1x32xf32>
    %32 = vector.broadcast %31 : vector<1x32xf32> to vector<16x32xf32>
    %33 = arith.addf %30, %32 : vector<16x32xf32>
    %cst_23 = arith.constant 5.000000e-01 : f32
    %34 = vector.broadcast %cst_23 : f32 to vector<16x32xf32>
    %35 = arith.mulf %34, %33 : vector<16x32xf32>
    %cst_24 = arith.constant 0.707106769 : f32
    %36 = vector.broadcast %cst_24 : f32 to vector<16x32xf32>
    %37 = arith.mulf %33, %36 : vector<16x32xf32>
    %38 = math.erf %37 : vector<16x32xf32>
    %cst_25 = arith.constant 1.000000e+00 : f32
    %39 = vector.broadcast %cst_25 : f32 to vector<16x32xf32>
    %40 = arith.addf %39, %38 : vector<16x32xf32>
    %41 = arith.mulf %35, %40 : vector<16x32xf32>
    %42 = arith.truncf %41 : vector<16x32xf32> to vector<16x32xbf16>
    %c0_26 = arith.constant 0 : index
    %c0_27 = arith.constant 0 : index
    %c0_28 = arith.constant 0 : index
    %43 = vector.load %arg6[%c0_26, %c0_27, %c0_28] : memref<1x16x32xbf16, #tpu.memory_space<vmem>>, vector<1x16x32xbf16>
    %44 = vector.shape_cast %43 : vector<1x16x32xbf16> to vector<16x32xbf16>
    %45 = vector.shape_cast %42 : vector<16x32xbf16> to vector<1x16x32xbf16>
    tpu.vector_store %arg6[%c0_26, %c0_27, %c0_28], %45 {strides = array<i32>} : memref<1x16x32xbf16, #tpu.memory_space<vmem>>, vector<1x16x32xbf16>,
    return
  }
  func.func @transform_0(%arg0: i32, %arg1: i32) -> (i32, i32, i32) {
    %c0_i32 = arith.constant 0 : i32
    %0 = arith.addi %arg1, %c0_i32 : i32
    %c0_i32_0 = arith.constant 0 : i32
    %c0_i32_1 = arith.constant 0 : i32
    return %arg0, %0, %c0_i32_0 : i32, i32, i32
  }
  func.func @transform_1(%arg0: i32, %arg1: i32) -> (i32, i32, i32) {
    %c1_i32 = arith.constant 1 : i32
    %0 = arith.addi %arg1, %c1_i32 : i32
    %c0_i32 = arith.constant 0 : i32
    %c0_i32_0 = arith.constant 0 : i32
    return %arg0, %0, %c0_i32 : i32, i32, i32
  }
  func.func @transform_2(%arg0: i32, %arg1: i32) -> (i32, i32, i32) {
    %c0_i32 = arith.constant 0 : i32
    %c0_i32_0 = arith.constant 0 : i32
    %c0_i32_1 = arith.constant 0 : i32
    %c0_i32_2 = arith.constant 0 : i32
    return %c0_i32, %c0_i32_0, %c0_i32_1 : i32, i32, i32
  }
  func.func @transform_3(%arg0: i32, %arg1: i32) -> (i32, i32) {
    %c0_i32 = arith.constant 0 : i32
    %c0_i32_0 = arith.constant 0 : i32
    %c0_i32_1 = arith.constant 0 : i32
    return %c0_i32, %c0_i32_0 : i32, i32
  }
  func.func @transform_4(%arg0: i32, %arg1: i32) -> (i32, i32, i32) {
    %c0_i32 = arith.constant 0 : i32
    %c0_i32_0 = arith.constant 0 : i32
    return %arg0, %arg1, %c0_i32 : i32, i32, i32
  }
}

module attributes {stable_mosaic.version = 11 : i64} {
  func.func @_conv_kernel(%arg0: i32, %arg1: i32, %arg2: memref<1x16x32xbf16, #tpu.memory_space<vmem>>, %arg3: memref<1x16x32xbf16, #tpu.memory_space<vmem>>, %arg4: memref<3x32x32xbf16, #tpu.memory_space<vmem>>, %arg5: memref<1x32xf32, #tpu.memory_space<vmem>>, %arg6: memref<1x16x32xbf16, #tpu.memory_space<vmem>>) attributes {dimension_semantics = [#tpu.dimension_semantics<parallel>, #tpu.dimension_semantics<parallel>], iteration_bounds = array<i64: 2, 1>, scalar_prefetch = 0 : i64, scratch_operands = 0 : i64, tpu.core_type = #tpu.core_type<tc>, window_params = [{transform_indices = @transform_0, window_bounds = array<i64: 1, 16, 32>}, {transform_indices = @transform_1, window_bounds = array<i64: 1, 16, 32>}, {pipeline_mode = #tpu.pipeline_mode<synchronous>, transform_indices = @transform_2, window_bounds = array<i64: 3, 32, 32>}, {pipeline_mode = #tpu.pipeline_mode<synchronous>, transform_indices = @transform_3, window_bounds = array<i64: 1, 32>}, {transform_indices = @transform_4, window_bounds = array<i64: 1, 16, 32>}]} {
    %c0 = arith.constant 0 : index
    %c0_0 = arith.constant 0 : index
    %c0_1 = arith.constant 0 : index
    %0 = vector.load %arg2[%c0, %c0_0, %c0_1] : memref<1x16x32xbf16, #tpu.memory_space<vmem>>, vector<1x16x32xbf16>
    %1 = vector.shape_cast %0 : vector<1x16x32xbf16> to vector<16x32xbf16>
    %c0_2 = arith.constant 0 : index
    %c0_3 = arith.constant 0 : index
    %c0_4 = arith.constant 0 : index
    %2 = vector.load %arg3[%c0_2, %c0_3, %c0_4] : memref<1x16x32xbf16, #tpu.memory_space<vmem>>, vector<1x16x32xbf16>
    %3 = vector.shape_cast %2 : vector<1x16x32xbf16> to vector<16x32xbf16>
    %4 = tpu.concatenate %1, %3 in 0 : vector<16x32xbf16>, vector<16x32xbf16> -> vector<32x32xbf16>
    %cst = arith.constant 0.000000e+00 : f32
    %5 = vector.broadcast %cst : f32 to vector<16x32xf32>
    %6 = vector.extract_strided_slice %4 {offsets = [0, 0], sizes = [16, 32], strides = [1, 1]} : vector<32x32xbf16> to vector<16x32xbf16>
    %c0_5 = arith.constant 0 : index
    %c0_6 = arith.constant 0 : index
    %c0_7 = arith.constant 0 : index
    %7 = vector.load %arg4[%c0_5, %c0_6, %c0_7] : memref<3x32x32xbf16, #tpu.memory_space<vmem>>, vector<1x32x32xbf16>
    %8 = vector.shape_cast %7 : vector<1x32x32xbf16> to vector<32x32xbf16>
    %cst_8 = arith.constant dense<0.000000e+00> : vector<16x32xf32>
    %9 = tpu.matmul %6, %8, %cst_8 {dimension_numbers = #tpu.dot_dimension_numbers<[1], [0], [0], [1], [0, 0, 1, 1], [], []>} : vector<16x32xbf16>, vector<32x32xbf16>, vector<16x32xf32> -> vector<16x32xf32>
    %10 = arith.addf %5, %9 : vector<16x32xf32>
    %11 = vector.extract_strided_slice %4 {offsets = [1, 0], sizes = [16, 32], strides = [1, 1]} : vector<32x32xbf16> to vector<16x32xbf16>
    %c1 = arith.constant 1 : index
    %c0_9 = arith.constant 0 : index
    %c0_10 = arith.constant 0 : index
    %12 = vector.load %arg4[%c1, %c0_9, %c0_10] : memref<3x32x32xbf16, #tpu.memory_space<vmem>>, vector<1x32x32xbf16>
    %13 = vector.shape_cast %12 : vector<1x32x32xbf16> to vector<32x32xbf16>
    %cst_11 = arith.constant dense<0.000000e+00> : vector<16x32xf32>
    %14 = tpu.matmul %11, %13, %cst_11 {dimension_numbers = #tpu.dot_dimension_numbers<[1], [0], [0], [1], [0, 0, 1, 1], [], []>} : vector<16x32xbf16>, vector<32x32xbf16>, vector<16x32xf32> -> vector<16x32xf32>
    %15 = arith.addf %10, %14 : vector<16x32xf32>
    %16 = vector.extract_strided_slice %4 {offsets = [2, 0], sizes = [16, 32], strides = [1, 1]} : vector<32x32xbf16> to vector<16x32xbf16>
    %c2 = arith.constant 2 : index
    %c0_12 = arith.constant 0 : index
    %c0_13 = arith.constant 0 : index
    %17 = vector.load %arg4[%c2, %c0_12, %c0_13] : memref<3x32x32xbf16, #tpu.memory_space<vmem>>, vector<1x32x32xbf16>
    %18 = vector.shape_cast %17 : vector<1x32x32xbf16> to vector<32x32xbf16>
    %cst_14 = arith.constant dense<0.000000e+00> : vector<16x32xf32>
    %19 = tpu.matmul %16, %18, %cst_14 {dimension_numbers = #tpu.dot_dimension_numbers<[1], [0], [0], [1], [0, 0, 1, 1], [], []>} : vector<16x32xbf16>, vector<32x32xbf16>, vector<16x32xf32> -> vector<16x32xf32>
    %20 = arith.addf %15, %19 : vector<16x32xf32>
    %c0_15 = arith.constant 0 : index
    %c0_16 = arith.constant 0 : index
    %21 = vector.load %arg5[%c0_15, %c0_16] : memref<1x32xf32, #tpu.memory_space<vmem>>, vector<1x32xf32>
    %22 = vector.broadcast %21 : vector<1x32xf32> to vector<16x32xf32>
    %23 = arith.addf %20, %22 : vector<16x32xf32>
    %cst_17 = arith.constant 5.000000e-01 : f32
    %24 = vector.broadcast %cst_17 : f32 to vector<16x32xf32>
    %25 = arith.mulf %24, %23 : vector<16x32xf32>
    %cst_18 = arith.constant 0.707106769 : f32
    %26 = vector.broadcast %cst_18 : f32 to vector<16x32xf32>
    %27 = arith.mulf %23, %26 : vector<16x32xf32>
    %28 = math.erf %27 : vector<16x32xf32>
    %cst_19 = arith.constant 1.000000e+00 : f32
    %29 = vector.broadcast %cst_19 : f32 to vector<16x32xf32>
    %30 = arith.addf %29, %28 : vector<16x32xf32>
    %31 = arith.mulf %25, %30 : vector<16x32xf32>
    %32 = arith.truncf %31 : vector<16x32xf32> to vector<16x32xbf16>
    %c0_20 = arith.constant 0 : index
    %c0_21 = arith.constant 0 : index
    %c0_22 = arith.constant 0 : index
    %33 = vector.load %arg6[%c0_20, %c0_21, %c0_22] : memref<1x16x32xbf16, #tpu.memory_space<vmem>>, vector<1x16x32xbf16>
    %34 = vector.shape_cast %33 : vector<1x16x32xbf16> to vector<16x32xbf16>
    %35 = vector.shape_cast %32 : vector<16x32xbf16> to vector<1x16x32xbf16>
    tpu.vector_store %arg6[%c0_20, %c0_21, %c0_22], %35 {strides = array<i32>} : memref<1x16x32xbf16, #tpu.memory_space<vmem>>, vector<1x16x32xbf16>,
    return
  }
  func.func @transform_0(%arg0: i32, %arg1: i32) -> (i32, i32, i32) {
    %c0_i32 = arith.constant 0 : i32
    %0 = arith.addi %arg1, %c0_i32 : i32
    %c0_i32_0 = arith.constant 0 : i32
    %c0_i32_1 = arith.constant 0 : i32
    return %arg0, %0, %c0_i32_0 : i32, i32, i32
  }
  func.func @transform_1(%arg0: i32, %arg1: i32) -> (i32, i32, i32) {
    %c1_i32 = arith.constant 1 : i32
    %0 = arith.addi %arg1, %c1_i32 : i32
    %c0_i32 = arith.constant 0 : i32
    %c0_i32_0 = arith.constant 0 : i32
    return %arg0, %0, %c0_i32 : i32, i32, i32
  }
  func.func @transform_2(%arg0: i32, %arg1: i32) -> (i32, i32, i32) {
    %c0_i32 = arith.constant 0 : i32
    %c0_i32_0 = arith.constant 0 : i32
    %c0_i32_1 = arith.constant 0 : i32
    %c0_i32_2 = arith.constant 0 : i32
    return %c0_i32, %c0_i32_0, %c0_i32_1 : i32, i32, i32
  }
  func.func @transform_3(%arg0: i32, %arg1: i32) -> (i32, i32) {
    %c0_i32 = arith.constant 0 : i32
    %c0_i32_0 = arith.constant 0 : i32
    %c0_i32_1 = arith.constant 0 : i32
    return %c0_i32, %c0_i32_0 : i32, i32
  }
  func.func @transform_4(%arg0: i32, %arg1: i32) -> (i32, i32, i32) {
    %c0_i32 = arith.constant 0 : i32
    %c0_i32_0 = arith.constant 0 : i32
    return %arg0, %arg1, %c0_i32 : i32, i32, i32
  }
}

module attributes {stable_mosaic.version = 11 : i64} {
  func.func @_pool_gelu_conv_kernel(%arg0: i32, %arg1: i32, %arg2: memref<1x16x8xbf16, #tpu.memory_space<vmem>>, %arg3: memref<1x16x8xbf16, #tpu.memory_space<vmem>>, %arg4: memref<8x32xbf16, #tpu.memory_space<vmem>>, %arg5: memref<1x32xf32, #tpu.memory_space<vmem>>, %arg6: memref<1x16x32xbf16, #tpu.memory_space<vmem>>) attributes {dimension_semantics = [#tpu.dimension_semantics<parallel>, #tpu.dimension_semantics<parallel>], iteration_bounds = array<i64: 2, 1>, scalar_prefetch = 0 : i64, scratch_operands = 0 : i64, tpu.core_type = #tpu.core_type<tc>, window_params = [{transform_indices = @transform_0, window_bounds = array<i64: 1, 16, 8>}, {transform_indices = @transform_1, window_bounds = array<i64: 1, 16, 8>}, {pipeline_mode = #tpu.pipeline_mode<synchronous>, transform_indices = @transform_2, window_bounds = array<i64: 8, 32>}, {pipeline_mode = #tpu.pipeline_mode<synchronous>, transform_indices = @transform_3, window_bounds = array<i64: 1, 32>}, {transform_indices = @transform_4, window_bounds = array<i64: 1, 16, 32>}]} {
    %c0 = arith.constant 0 : index
    %c0_0 = arith.constant 0 : index
    %c0_1 = arith.constant 0 : index
    %0 = vector.load %arg2[%c0, %c0_0, %c0_1] : memref<1x16x8xbf16, #tpu.memory_space<vmem>>, vector<1x16x8xbf16>
    %1 = vector.shape_cast %0 : vector<1x16x8xbf16> to vector<16x8xbf16>
    %c0_2 = arith.constant 0 : index
    %c0_3 = arith.constant 0 : index
    %c0_4 = arith.constant 0 : index
    %2 = vector.load %arg3[%c0_2, %c0_3, %c0_4] : memref<1x16x8xbf16, #tpu.memory_space<vmem>>, vector<1x16x8xbf16>
    %3 = vector.shape_cast %2 : vector<1x16x8xbf16> to vector<16x8xbf16>
    %4 = tpu.concatenate %1, %3 in 0 : vector<16x8xbf16>, vector<16x8xbf16> -> vector<32x8xbf16>
    %5 = vector.extract_strided_slice %4 {offsets = [0, 0], sizes = [16, 8], strides = [1, 1]} : vector<32x8xbf16> to vector<16x8xbf16>
    %6 = vector.extract_strided_slice %4 {offsets = [1, 0], sizes = [16, 8], strides = [1, 1]} : vector<32x8xbf16> to vector<16x8xbf16>
    %7 = arith.maximumf %5, %6 : vector<16x8xbf16>
    %8 = vector.extract_strided_slice %4 {offsets = [2, 0], sizes = [16, 8], strides = [1, 1]} : vector<32x8xbf16> to vector<16x8xbf16>
    %9 = arith.maximumf %7, %8 : vector<16x8xbf16>
    %10 = arith.extf %9 : vector<16x8xbf16> to vector<16x8xf32>
    %cst = arith.constant 5.000000e-01 : f32
    %11 = vector.broadcast %cst : f32 to vector<16x8xf32>
    %12 = arith.mulf %11, %10 : vector<16x8xf32>
    %cst_5 = arith.constant 0.707106769 : f32
    %13 = vector.broadcast %cst_5 : f32 to vector<16x8xf32>
    %14 = arith.mulf %10, %13 : vector<16x8xf32>
    %15 = math.erf %14 : vector<16x8xf32>
    %cst_6 = arith.constant 1.000000e+00 : f32
    %16 = vector.broadcast %cst_6 : f32 to vector<16x8xf32>
    %17 = arith.addf %16, %15 : vector<16x8xf32>
    %18 = arith.mulf %12, %17 : vector<16x8xf32>
    %19 = arith.truncf %18 : vector<16x8xf32> to vector<16x8xbf16>
    %c0_7 = arith.constant 0 : index
    %c0_8 = arith.constant 0 : index
    %20 = vector.load %arg4[%c0_7, %c0_8] : memref<8x32xbf16, #tpu.memory_space<vmem>>, vector<8x32xbf16>
    %cst_9 = arith.constant dense<0.000000e+00> : vector<16x32xf32>
    %21 = tpu.matmul %19, %20, %cst_9 {dimension_numbers = #tpu.dot_dimension_numbers<[1], [0], [0], [1], [0, 0, 1, 1], [], []>} : vector<16x8xbf16>, vector<8x32xbf16>, vector<16x32xf32> -> vector<16x32xf32>
    %c0_10 = arith.constant 0 : index
    %c0_11 = arith.constant 0 : index
    %22 = vector.load %arg5[%c0_10, %c0_11] : memref<1x32xf32, #tpu.memory_space<vmem>>, vector<1x32xf32>
    %23 = vector.broadcast %22 : vector<1x32xf32> to vector<16x32xf32>
    %24 = arith.addf %21, %23 : vector<16x32xf32>
    %25 = arith.truncf %24 : vector<16x32xf32> to vector<16x32xbf16>
    %c0_12 = arith.constant 0 : index
    %c0_13 = arith.constant 0 : index
    %c0_14 = arith.constant 0 : index
    %26 = vector.load %arg6[%c0_12, %c0_13, %c0_14] : memref<1x16x32xbf16, #tpu.memory_space<vmem>>, vector<1x16x32xbf16>
    %27 = vector.shape_cast %26 : vector<1x16x32xbf16> to vector<16x32xbf16>
    %28 = vector.shape_cast %25 : vector<16x32xbf16> to vector<1x16x32xbf16>
    tpu.vector_store %arg6[%c0_12, %c0_13, %c0_14], %28 {strides = array<i32>} : memref<1x16x32xbf16, #tpu.memory_space<vmem>>, vector<1x16x32xbf16>,
    return
  }
  func.func @transform_0(%arg0: i32, %arg1: i32) -> (i32, i32, i32) {
    %c0_i32 = arith.constant 0 : i32
    %0 = arith.addi %arg1, %c0_i32 : i32
    %c0_i32_0 = arith.constant 0 : i32
    %c0_i32_1 = arith.constant 0 : i32
    return %arg0, %0, %c0_i32_0 : i32, i32, i32
  }
  func.func @transform_1(%arg0: i32, %arg1: i32) -> (i32, i32, i32) {
    %c1_i32 = arith.constant 1 : i32
    %0 = arith.addi %arg1, %c1_i32 : i32
    %c0_i32 = arith.constant 0 : i32
    %c0_i32_0 = arith.constant 0 : i32
    return %arg0, %0, %c0_i32 : i32, i32, i32
  }
  func.func @transform_2(%arg0: i32, %arg1: i32) -> (i32, i32) {
    %c0_i32 = arith.constant 0 : i32
    %c0_i32_0 = arith.constant 0 : i32
    %c0_i32_1 = arith.constant 0 : i32
    return %c0_i32, %c0_i32_0 : i32, i32
  }
  func.func @transform_3(%arg0: i32, %arg1: i32) -> (i32, i32) {
    %c0_i32 = arith.constant 0 : i32
    %c0_i32_0 = arith.constant 0 : i32
    %c0_i32_1 = arith.constant 0 : i32
    return %c0_i32, %c0_i32_0 : i32, i32
  }
  func.func @transform_4(%arg0: i32, %arg1: i32) -> (i32, i32, i32) {
    %c0_i32 = arith.constant 0 : i32
    %c0_i32_0 = arith.constant 0 : i32
    return %arg0, %arg1, %c0_i32 : i32, i32, i32
  }
}

module attributes {stable_mosaic.version = 11 : i64} {
  func.func @_conv_kernel(%arg0: i32, %arg1: i32, %arg2: memref<1x16x96xbf16, #tpu.memory_space<vmem>>, %arg3: memref<1x16x96xbf16, #tpu.memory_space<vmem>>, %arg4: memref<3x96x8xbf16, #tpu.memory_space<vmem>>, %arg5: memref<1x8xf32, #tpu.memory_space<vmem>>, %arg6: memref<1x16x8xf32, #tpu.memory_space<vmem>>, %arg7: memref<1x16x8xf32, #tpu.memory_space<vmem>>) attributes {dimension_semantics = [#tpu.dimension_semantics<parallel>, #tpu.dimension_semantics<parallel>], iteration_bounds = array<i64: 2, 1>, scalar_prefetch = 0 : i64, scratch_operands = 0 : i64, tpu.core_type = #tpu.core_type<tc>, window_params = [{transform_indices = @transform_0, window_bounds = array<i64: 1, 16, 96>}, {transform_indices = @transform_1, window_bounds = array<i64: 1, 16, 96>}, {pipeline_mode = #tpu.pipeline_mode<synchronous>, transform_indices = @transform_2, window_bounds = array<i64: 3, 96, 8>}, {pipeline_mode = #tpu.pipeline_mode<synchronous>, transform_indices = @transform_3, window_bounds = array<i64: 1, 8>}, {transform_indices = @transform_4, window_bounds = array<i64: 1, 16, 8>}, {transform_indices = @transform_5, window_bounds = array<i64: 1, 16, 8>}]} {
    %c0 = arith.constant 0 : index
    %c0_0 = arith.constant 0 : index
    %c0_1 = arith.constant 0 : index
    %0 = vector.load %arg2[%c0, %c0_0, %c0_1] : memref<1x16x96xbf16, #tpu.memory_space<vmem>>, vector<1x16x96xbf16>
    %1 = vector.shape_cast %0 : vector<1x16x96xbf16> to vector<16x96xbf16>
    %c0_2 = arith.constant 0 : index
    %c0_3 = arith.constant 0 : index
    %c0_4 = arith.constant 0 : index
    %2 = vector.load %arg3[%c0_2, %c0_3, %c0_4] : memref<1x16x96xbf16, #tpu.memory_space<vmem>>, vector<1x16x96xbf16>
    %3 = vector.shape_cast %2 : vector<1x16x96xbf16> to vector<16x96xbf16>
    %4 = tpu.concatenate %1, %3 in 0 : vector<16x96xbf16>, vector<16x96xbf16> -> vector<32x96xbf16>
    %cst = arith.constant 0.000000e+00 : f32
    %5 = vector.broadcast %cst : f32 to vector<16x8xf32>
    %6 = vector.extract_strided_slice %4 {offsets = [0, 0], sizes = [16, 96], strides = [1, 1]} : vector<32x96xbf16> to vector<16x96xbf16>
    %c0_5 = arith.constant 0 : index
    %c0_6 = arith.constant 0 : index
    %c0_7 = arith.constant 0 : index
    %7 = vector.load %arg4[%c0_5, %c0_6, %c0_7] : memref<3x96x8xbf16, #tpu.memory_space<vmem>>, vector<1x96x8xbf16>
    %8 = vector.shape_cast %7 : vector<1x96x8xbf16> to vector<96x8xbf16>
    %cst_8 = arith.constant dense<0.000000e+00> : vector<16x8xf32>
    %9 = tpu.matmul %6, %8, %cst_8 {dimension_numbers = #tpu.dot_dimension_numbers<[1], [0], [0], [1], [0, 0, 1, 1], [], []>} : vector<16x96xbf16>, vector<96x8xbf16>, vector<16x8xf32> -> vector<16x8xf32>
    %10 = arith.addf %5, %9 : vector<16x8xf32>
    %11 = vector.extract_strided_slice %4 {offsets = [1, 0], sizes = [16, 96], strides = [1, 1]} : vector<32x96xbf16> to vector<16x96xbf16>
    %c1 = arith.constant 1 : index
    %c0_9 = arith.constant 0 : index
    %c0_10 = arith.constant 0 : index
    %12 = vector.load %arg4[%c1, %c0_9, %c0_10] : memref<3x96x8xbf16, #tpu.memory_space<vmem>>, vector<1x96x8xbf16>
    %13 = vector.shape_cast %12 : vector<1x96x8xbf16> to vector<96x8xbf16>
    %cst_11 = arith.constant dense<0.000000e+00> : vector<16x8xf32>
    %14 = tpu.matmul %11, %13, %cst_11 {dimension_numbers = #tpu.dot_dimension_numbers<[1], [0], [0], [1], [0, 0, 1, 1], [], []>} : vector<16x96xbf16>, vector<96x8xbf16>, vector<16x8xf32> -> vector<16x8xf32>
    %15 = arith.addf %10, %14 : vector<16x8xf32>
    %16 = vector.extract_strided_slice %4 {offsets = [2, 0], sizes = [16, 96], strides = [1, 1]} : vector<32x96xbf16> to vector<16x96xbf16>
    %c2 = arith.constant 2 : index
    %c0_12 = arith.constant 0 : index
    %c0_13 = arith.constant 0 : index
    %17 = vector.load %arg4[%c2, %c0_12, %c0_13] : memref<3x96x8xbf16, #tpu.memory_space<vmem>>, vector<1x96x8xbf16>
    %18 = vector.shape_cast %17 : vector<1x96x8xbf16> to vector<96x8xbf16>
    %cst_14 = arith.constant dense<0.000000e+00> : vector<16x8xf32>
    %19 = tpu.matmul %16, %18, %cst_14 {dimension_numbers = #tpu.dot_dimension_numbers<[1], [0], [0], [1], [0, 0, 1, 1], [], []>} : vector<16x96xbf16>, vector<96x8xbf16>, vector<16x8xf32> -> vector<16x8xf32>
    %20 = arith.addf %15, %19 : vector<16x8xf32>
    %c0_15 = arith.constant 0 : index
    %c0_16 = arith.constant 0 : index
    %21 = vector.load %arg5[%c0_15, %c0_16] : memref<1x8xf32, #tpu.memory_space<vmem>>, vector<1x8xf32>
    %22 = vector.broadcast %21 : vector<1x8xf32> to vector<16x8xf32>
    %23 = arith.addf %20, %22 : vector<16x8xf32>
    %c0_17 = arith.constant 0 : index
    %c0_18 = arith.constant 0 : index
    %c0_19 = arith.constant 0 : index
    %24 = vector.load %arg6[%c0_17, %c0_18, %c0_19] : memref<1x16x8xf32, #tpu.memory_space<vmem>>, vector<1x16x8xf32>
    %25 = vector.shape_cast %24 : vector<1x16x8xf32> to vector<16x8xf32>
    %26 = arith.addf %23, %25 : vector<16x8xf32>
    %c0_20 = arith.constant 0 : index
    %c0_21 = arith.constant 0 : index
    %c0_22 = arith.constant 0 : index
    %27 = vector.load %arg7[%c0_20, %c0_21, %c0_22] : memref<1x16x8xf32, #tpu.memory_space<vmem>>, vector<1x16x8xf32>
    %28 = vector.shape_cast %27 : vector<1x16x8xf32> to vector<16x8xf32>
    %29 = vector.shape_cast %26 : vector<16x8xf32> to vector<1x16x8xf32>
    tpu.vector_store %arg7[%c0_20, %c0_21, %c0_22], %29 {strides = array<i32>} : memref<1x16x8xf32, #tpu.memory_space<vmem>>, vector<1x16x8xf32>,
    return
  }
  func.func @transform_0(%arg0: i32, %arg1: i32) -> (i32, i32, i32) {
    %c0_i32 = arith.constant 0 : i32
    %0 = arith.addi %arg1, %c0_i32 : i32
    %c0_i32_0 = arith.constant 0 : i32
    %c0_i32_1 = arith.constant 0 : i32
    return %arg0, %0, %c0_i32_0 : i32, i32, i32
  }
  func.func @transform_1(%arg0: i32, %arg1: i32) -> (i32, i32, i32) {
    %c1_i32 = arith.constant 1 : i32
    %0 = arith.addi %arg1, %c1_i32 : i32
    %c0_i32 = arith.constant 0 : i32
    %c0_i32_0 = arith.constant 0 : i32
    return %arg0, %0, %c0_i32 : i32, i32, i32
  }
  func.func @transform_2(%arg0: i32, %arg1: i32) -> (i32, i32, i32) {
    %c0_i32 = arith.constant 0 : i32
    %c0_i32_0 = arith.constant 0 : i32
    %c0_i32_1 = arith.constant 0 : i32
    %c0_i32_2 = arith.constant 0 : i32
    return %c0_i32, %c0_i32_0, %c0_i32_1 : i32, i32, i32
  }
  func.func @transform_3(%arg0: i32, %arg1: i32) -> (i32, i32) {
    %c0_i32 = arith.constant 0 : i32
    %c0_i32_0 = arith.constant 0 : i32
    %c0_i32_1 = arith.constant 0 : i32
    return %c0_i32, %c0_i32_0 : i32, i32
  }
  func.func @transform_4(%arg0: i32, %arg1: i32) -> (i32, i32, i32) {
    %c0_i32 = arith.constant 0 : i32
    %c0_i32_0 = arith.constant 0 : i32
    return %arg0, %arg1, %c0_i32 : i32, i32, i32
  }
  func.func @transform_5(%arg0: i32, %arg1: i32) -> (i32, i32, i32) {
    %c0_i32 = arith.constant 0 : i32
    %c0_i32_0 = arith.constant 0 : i32
    return %arg0, %arg1, %c0_i32 : i32, i32, i32
  }
}

</mosaic_0001>

<llo_original>
// kernel: inception_block_forward.8
$region0: #{inception_block_forward.8}
  #allocation0 [shape = 'u32[]', space=smem, size = 0x4, offset = 0x4, fixed_abs, tag = 'smem constant byte address 0x4 - core index']
  #allocation1 [shape = 'u32[144,128]{1,0:T(1,128)}', space=vmem, size = 0x12000, scoped, tag = 'internal scratch']
  %s0 = inlined_call_operand.vmem [shape: bf16[2,32,8], index: 0, kind: input, shape index: {}, may-alias: {0,1}]
  %s1 = inlined_call_operand.vmem [shape: bf16[2,32,8], index: 1, kind: input, shape index: {}, may-alias: {0,1}]
  %s2 = inlined_call_operand.vmem [shape: bf16[5,8,32], index: 2, kind: input, shape index: {}]
  %s3 = inlined_call_operand.vmem [shape: f32[1,32], index: 3, kind: input, shape index: {}]
  %s4 = inlined_call_operand.vmem [shape: bf16[2,16,32], index: 4, kind: output, shape index: {}]
  %s5 = sld [smem:[#allocation0]]
  $region49: #{inception_block_forward.8} parent=0
    _
  %s7 = ssub.s32 1, %s5
  %s8 = scalar_select 0, %s7, %s5
  loop: start=0, step=1, limit=4
  $region2: #{inception_block_forward.8} parent=0 // loop_pre_header
    _
  $region3: #{inception_block_forward.8} parent=0 // loop_header
    %s10 = sphi 0, %s14
    %p11 = scmp.ge.s32.totalorder %s10, 4
    %s17 = sphi 0, %s29
    %s18 = sphi 0, %s25
    %s19 = sphi 0, %s17
    %s20 = sphi 0, %s18
    %s21 = sphi 0, %s19
    %s22 = sphi 0, %s20
    %s34 = sphi 0, %s36
    %s37 = sphi 0, %s34
    %s38 = sphi 0, %s37
    %s54 = sphi 0, %s38
    %s64 = sphi 0, %s66
    %s67 = sphi 0, %s64
    %s68 = sphi 0, %s67
    %s84 = sphi 0, %s68
    %s88 = sphi 0, %s88
    %s90 = sphi 0, %s88
    %s91 = sphi 0, %s90
    %s105 = sphi 0, %s91
    %s109 = sphi 0, %s109
    %s111 = sphi 0, %s109
    %s112 = sphi 0, %s111
    %s126 = sphi 0, %s112
    %s134 = sphi 0, %s136
    %s137 = sphi 0, %s134
    %s138 = sphi 0, %s137
    %s154 = sphi 0, %s138
  $region4: #{inception_block_forward.8} parent=0 // loop_header_branch
    %13 = sbr.rel (%p11) target = $region8
  $region5: #{inception_block_forward.8} parent=0 // loop_body
    %s15 = ssub.s32 %s10, 1
    %s16 = ssub.s32 %s10, 2
    %s23 = sadd.s32 1, %s18
    %p24 = scmp.ge.s32.totalorder %s23, 1
    %s25 = scalar_select %p24, 0, %s23
    %s26 = sadd.s32 1, %s17
    %s27 = scalar_select %p24, %s26, %s17
    %p28 = scmp.ge.s32.totalorder %s27, 2
    %s29 = scalar_select %p28, 0, %s27
    %s30 = ssub.s32 %s17, %s29
    %s31 = ssub.s32 %s18, %s25
    %s32 = sor.u32 %s30, %s31
    %p33 = scmp.eq.s32.totalorder %s32, 0
    %s35 = sadd.s32 %s34, 1
    %s36 = scalar_select %p33, %s34, %s35
    %p39 = pneg %p33
    %p40 = scmp.eq.s32.totalorder %s10, 1
    %p41 = por %p39, %p40
    %p42 = scmp.ne.s32.totalorder %s34, %s37
    %p43 = scmp.eq.s32.totalorder %s10, 0
    %p44 = por %p42, %p43
    %p45 = scmp.ne.s32.totalorder %s34, %s37
    %p46 = scmp.eq.s32.totalorder %s15, 1
    %p47 = por %p45, %p46
    %p48 = scmp.ne.s32.totalorder %s37, %s38
    %p49 = scmp.eq.s32.totalorder %s15, 0
    %p50 = por %p48, %p49
    %p51 = scmp.ne.s32.totalorder %s37, %s38
    %p52 = scmp.eq.s32.totalorder %s16, 1
    %p53 = por %p51, %p52
    %p55 = scmp.ne.s32.totalorder %s38, %s54
    %p56 = scmp.eq.s32.totalorder %s16, 0
    %p57 = por %p55, %p56
    %s58 = sadd.s32 %s18, 1
    %s59 = sadd.s32 %s25, 1
    %s60 = ssub.s32 %s17, %s29
    %s61 = ssub.s32 %s58, %s59
    %s62 = sor.u32 %s60, %s61
    %p63 = scmp.eq.s32.totalorder %s62, 0
    %s65 = sadd.s32 %s64, 1
    %s66 = scalar_select %p63, %s64, %s65
    %p69 = pneg %p63
    %p70 = scmp.eq.s32.totalorder %s10, 1
    %p71 = por %p69, %p70
    %p72 = scmp.ne.s32.totalorder %s64, %s67
    %p73 = scmp.eq.s32.totalorder %s10, 0
    %p74 = por %p72, %p73
    %p75 = scmp.ne.s32.totalorder %s64, %s67
    %p76 = scmp.eq.s32.totalorder %s15, 1
    %p77 = por %p75, %p76
    %p78 = scmp.ne.s32.totalorder %s67, %s68
    %p79 = scmp.eq.s32.totalorder %s15, 0
    %p80 = por %p78, %p79
    %p81 = scmp.ne.s32.totalorder %s67, %s68
    %p82 = scmp.eq.s32.totalorder %s16, 1
    %p83 = por %p81, %p82
    %p85 = scmp.ne.s32.totalorder %s68, %s84
    %p86 = scmp.eq.s32.totalorder %s16, 0
    %p87 = por %p85, %p86
    %s89 = sadd.s32 %s88, 1
    %p92 = scmp.eq.s32.totalorder %s10, 1
    %p93 = scmp.ne.s32.totalorder %s88, %s90
    %p94 = scmp.eq.s32.totalorder %s10, 0
    %p95 = por %p93, %p94
    %p96 = scmp.ne.s32.totalorder %s88, %s90
    %p97 = scmp.eq.s32.totalorder %s15, 1
    %p98 = por %p96, %p97
    %p99 = scmp.ne.s32.totalorder %s90, %s91
    %p100 = scmp.eq.s32.totalorder %s15, 0
    %p101 = por %p99, %p100
    %p102 = scmp.ne.s32.totalorder %s90, %s91
    %p103 = scmp.eq.s32.totalorder %s16, 1
    %p104 = por %p102, %p103
    %p106 = scmp.ne.s32.totalorder %s91, %s105
    %p107 = scmp.eq.s32.totalorder %s16, 0
    %p108 = por %p106, %p107
    %s110 = sadd.s32 %s109, 1
    %p113 = scmp.eq.s32.totalorder %s10, 1
    %p114 = scmp.ne.s32.totalorder %s109, %s111
    %p115 = scmp.eq.s32.totalorder %s10, 0
    %p116 = por %p114, %p115
    %p117 = scmp.ne.s32.totalorder %s109, %s111
    %p118 = scmp.eq.s32.totalorder %s15, 1
    %p119 = por %p117, %p118
    %p120 = scmp.ne.s32.totalorder %s111, %s112
    %p121 = scmp.eq.s32.totalorder %s15, 0
    %p122 = por %p120, %p121
    %p123 = scmp.ne.s32.totalorder %s111, %s112
    %p124 = scmp.eq.s32.totalorder %s16, 1
    %p125 = por %p123, %p124
    %p127 = scmp.ne.s32.totalorder %s112, %s126
    %p128 = scmp.eq.s32.totalorder %s16, 0
    %p129 = por %p127, %p128
    %s130 = ssub.s32 %s17, %s29
    %s131 = ssub.s32 %s18, %s25
    %s132 = sor.u32 %s130, %s131
    %p133 = scmp.eq.s32.totalorder %s132, 0
    %s135 = sadd.s32 %s134, 1
    %s136 = scalar_select %p133, %s134, %s135
    %p139 = pneg %p133
    %p140 = scmp.eq.s32.totalorder %s10, 1
    %p141 = por %p139, %p140
    %p142 = scmp.ne.s32.totalorder %s134, %s137
    %p143 = scmp.eq.s32.totalorder %s10, 0
    %p144 = por %p142, %p143
    %p145 = scmp.ne.s32.totalorder %s134, %s137
    %p146 = scmp.eq.s32.totalorder %s15, 1
    %p147 = por %p145, %p146
    %p148 = scmp.ne.s32.totalorder %s137, %s138
    %p149 = scmp.eq.s32.totalorder %s15, 0
    %p150 = por %p148, %p149
    %p151 = scmp.ne.s32.totalorder %s137, %s138
    %p152 = scmp.eq.s32.totalorder %s16, 1
    %p153 = por %p151, %p152
    %p155 = scmp.ne.s32.totalorder %s138, %s154
    %p156 = scmp.eq.s32.totalorder %s16, 0
    %p157 = por %p155, %p156
    %p158 = scmp.le.s32.totalorder 1, %s10
    %p159 = scmp.lt.s32.totalorder %s10, 3
    %p160 = pnand %p158, %p159
    %p161 = pneg %p160
    // Predicated region
    $region9: #{inception_block_forward.8} parent=5 // pred_check
      _
    $region10: #{inception_block_forward.8} parent=5 // pred_check_branch
      %163 = sbr.rel (%p160) target = $region12
    $region11: #{inception_block_forward.8} parent=5 // pred_region
      %s164 = ssub.s32 %s10, 1
      // Predicated region
      $region13: #{inception_block_forward.8} parent=11 // pred_check
        %p165 = pneg %p101
      $region14: #{inception_block_forward.8} parent=11 // pred_check_branch
        %167 = sbr.rel (%p165) target = $region16
      $region15: #{inception_block_forward.8} parent=11 // pred_region
        _
      $region16: #{inception_block_forward.8} parent=11 // pred_fallthru
        _
      // Predicated region
      $region17: #{inception_block_forward.8} parent=11 // pred_check
        %p168 = pneg %p122
      $region18: #{inception_block_forward.8} parent=11 // pred_check_branch
        %170 = sbr.rel (%p168) target = $region20
      $region19: #{inception_block_forward.8} parent=11 // pred_region
        _
      $region20: #{inception_block_forward.8} parent=11 // pred_fallthru
        _
    $region12: #{inception_block_forward.8} parent=5 // pred_fallthru
      _
    %p171 = scmp.lt.s32.totalorder %s10, 2
    // Predicated region
    $region21: #{inception_block_forward.8} parent=5 // pred_check
      %p172 = pneg %p171
    $region22: #{inception_block_forward.8} parent=5 // pred_check_branch
      %174 = sbr.rel (%p172) target = $region24
    $region23: #{inception_block_forward.8} parent=5 // pred_region
      // Predicated region
      $region25: #{inception_block_forward.8} parent=23 // pred_check
        %p175 = pneg %p44
      $region26: #{inception_block_forward.8} parent=23 // pred_check_branch
        %177 = sbr.rel (%p175) target = $region28
      $region27: #{inception_block_forward.8} parent=23 // pred_region
        %s178 = smul.u32 2, %s18
        %p179 = scmp.lt.s32.totalorder %s17, 1
        %s180 = scalar_select %p179, %s17, 1
        %p181 = scmp.lt.s32.totalorder %s178, 3
        %s182 = scalar_select %p181, %s178, 3
        %s183 = smul.addr %s180, 4
        %s184 = sadd.s32 %s182, %s183
        %s185 = smul.addr %s184, 4
        %s186 = scalar_lea.vmem %s0, %s185
        %s187 = smul.u32 2, %s18
      $region28: #{inception_block_forward.8} parent=23 // pred_fallthru
        _
      // Predicated region
      $region29: #{inception_block_forward.8} parent=23 // pred_check
        %p188 = pneg %p74
      $region30: #{inception_block_forward.8} parent=23 // pred_check_branch
        %190 = sbr.rel (%p188) target = $region32
      $region31: #{inception_block_forward.8} parent=23 // pred_region
        %s191 = sadd.s32 %s18, 1
        %s192 = smul.u32 2, %s191
        %p193 = scmp.lt.s32.totalorder %s17, 1
        %s194 = scalar_select %p193, %s17, 1
        %p195 = scmp.lt.s32.totalorder %s192, 3
        %s196 = scalar_select %p195, %s192, 3
        %s197 = smul.addr %s194, 4
        %s198 = sadd.s32 %s196, %s197
        %s199 = smul.addr %s198, 4
        %s200 = scalar_lea.vmem %s1, %s199
        %s201 = sadd.s32 %s18, 1
        %s202 = smul.u32 2, %s201
      $region32: #{inception_block_forward.8} parent=23 // pred_fallthru
        _
    $region24: #{inception_block_forward.8} parent=5 // pred_fallthru
      _
    %p203 = scmp.le.s32.totalorder 1, %s10
    %p204 = scmp.lt.s32.totalorder %s10, 3
    %p205 = pnand %p203, %p204
    %p206 = pneg %p205
    // Predicated region
    $region33: #{inception_block_forward.8} parent=5 // pred_check
      _
    $region34: #{inception_block_forward.8} parent=5 // pred_check_branch
      %208 = sbr.rel (%p205) target = $region36
    $region35: #{inception_block_forward.8} parent=5 // pred_region
      %s209 = ssub.s32 %s10, 1
      %s210 = smul.u32 2, %s20
      %p211 = scmp.lt.s32.totalorder %s19, 1
      %s212 = scalar_select %p211, %s19, 1
      %p213 = scmp.lt.s32.totalorder %s210, 3
      %s214 = scalar_select %p213, %s210, 3
      %s215 = smul.addr %s212, 4
      %s216 = sadd.s32 %s214, %s215
      %s217 = smul.addr %s216, 4
      %s218 = scalar_lea.vmem %s0, %s217
      %p219 = pneg %p50
      %p220 = pneg %p47
      %s221 = sadd.s32 %s20, 1
      %s222 = smul.u32 2, %s221
      %p223 = scmp.lt.s32.totalorder %s19, 1
      %s224 = scalar_select %p223, %s19, 1
      %p225 = scmp.lt.s32.totalorder %s222, 3
      %s226 = scalar_select %p225, %s222, 3
      %s227 = smul.addr %s224, 4
      %s228 = sadd.s32 %s226, %s227
      %s229 = smul.addr %s228, 4
      %s230 = scalar_lea.vmem %s1, %s229
      %p231 = pneg %p80
      %p232 = pneg %p77
      %p233 = pneg %p101
      %p234 = pneg %p98
      %p235 = pneg %p122
      %p236 = pneg %p119
      %p237 = pneg %p150
      %p238 = pneg %p147
      %s239 = smul.u32 2, %s20
      %p240 = scmp.lt.s32.totalorder %s19, 1
      %s241 = scalar_select %p240, %s19, 1
      %p242 = scmp.lt.s32.totalorder %s239, 1
      %s243 = scalar_select %p242, %s239, 1
      %s244 = smul.addr %s241, 2
      %s245 = sadd.s32 %s243, %s244
      %s246 = smul.addr %s245, 4
      %s247 = scalar_lea.vmem %s4, %s246
      %s248 = smul.u32 2, %s20
      %p249 = scmp.lt.s32.totalorder %s19, 1
      %s250 = scalar_select %p249, %s19, 1
      %p251 = scmp.lt.s32.totalorder %s248, 3
      %s252 = scalar_select %p251, %s248, 3
      %s253 = smul.addr %s250, 4
      %s254 = sadd.s32 %s252, %s253
      %s255 = smul.addr %s254, 4
      %s256 = scalar_lea.vmem %s0, %s255
      %s257 = smul.u32 2, %s20
      %s258 = sadd.s32 %s20, 1
      %s259 = smul.u32 2, %s258
      %p260 = scmp.lt.s32.totalorder %s19, 1
      %s261 = scalar_select %p260, %s19, 1
      %p262 = scmp.lt.s32.totalorder %s259, 3
      %s263 = scalar_select %p262, %s259, 3
      %s264 = smul.addr %s261, 4
      %s265 = sadd.s32 %s263, %s264
      %s266 = smul.addr %s265, 4
      %s267 = scalar_lea.vmem %s1, %s266
      %s268 = sadd.s32 %s20, 1
      %s269 = smul.u32 2, %s268
      %s270 = smul.u32 2, %s20
      %p271 = scmp.lt.s32.totalorder %s19, 1
      %s272 = scalar_select %p271, %s19, 1
      %p273 = scmp.lt.s32.totalorder %s270, 1
      %s274 = scalar_select %p273, %s270, 1
      %s275 = smul.addr %s272, 2
      %s276 = sadd.s32 %s274, %s275
      %s277 = smul.addr %s276, 4
      %s278 = scalar_lea.vmem %s4, %s277
      %s279 = smul.u32 2, %s20
      %v281 = vld [vmem:[%s256] sm:$0xf]
      %v282 = vld [vmem:[%s256 + $0x4] sm:$0xf]
      %v283 = vld [vmem:[%s267] sm:$0xf]
      %v284 = vld [vmem:[%s267 + $0x4] sm:$0xf]
      %v287 = vunpack.c.l.b16 %v281
      %v288 = vunpack.c.l.b16 %v282
      %v289 = vpack.c.b16 %v288, %v287
      %v292 = vunpack.c.l.b16 %v283
      %v293 = vunpack.c.l.b16 %v284
      %v294 = vpack.c.b16 %v293, %v292
      %v295 = vld [vmem:[%s2] sm:$0xf]
      %s296 = scalar_lea.vmem %s2, 4
      %v297 = vld [vmem:[%s296] sm:$0xf]
      %vm298 = vsmask.f32 7424
      %v300 = vshrl.u32 %v289, 16
      %v302 = vshll.u32 %v289, 16
      %v304 = vrot.slane %v302, 1
      %v305 = vor.u32 %v300, %v304
      %v307 = vshll.u32 %v294, 16
      %v309 = vrot.slane %v307, 1
      %v310 = vsel %vm298, %v305, %v309
      %vm311 = vcmask 64512
      %v313 = vsel %vm311, %v310, 0
      %vm315 = vcmask 1043456
      %v317 = vsel %vm315, %v297, 0
      %319 = vmatprep.subr.bf16.mxu0 0
      %320 = vmatpush1.bf16.msra.mxu0 %v317
      %321 = vmatprep.subr.bf16.mxu0 0
      %322 = vmatpush1.bf16.msra.mxu0 0
      %323 = vmatprep.subr.bf16.mxu0 0
      %324 = vmatpush1.bf16.msra.mxu0 0
      %325 = vmatprep.subr.bf16.mxu0 0
      %326 = vmatpush1.bf16.msra.mxu0 0
      %327 = vmatprep.subr.bf16.mxu0 0
      %328 = vmatpush1.bf16.msra.mxu0 0
      %329 = vmatprep.subr.bf16.mxu0 0
      %330 = vmatpush1.bf16.msra.mxu0 0
      %331 = vmatprep.subr.bf16.mxu0 0
      %332 = vmatpush1.bf16.msra.mxu0 0
      %333 = vmatprep.subr.bf16.mxu0 0
      %334 = vmatpush1.bf16.msra.mxu0 0
      %335 = vmatprep.subr.bf16.mxu0 0
      %336 = vmatpush1.bf16.msra.mxu0 0
      %337 = vmatprep.subr.bf16.mxu0 0
      %338 = vmatpush1.bf16.msra.mxu0 0
      %339 = vmatprep.subr.bf16.mxu0 0
      %340 = vmatpush1.bf16.msra.mxu0 0
      %341 = vmatprep.subr.bf16.mxu0 0
      %342 = vmatpush1.bf16.msra.mxu0 0
      %343 = vmatprep.subr.bf16.mxu0 0
      %344 = vmatpush1.bf16.msra.mxu0 0
      %345 = vmatprep.subr.bf16.mxu0 0
      %346 = vmatpush1.bf16.msra.mxu0 0
      %347 = vmatprep.subr.bf16.mxu0 0
      %348 = vmatpush1.bf16.msra.mxu0 0
      %349 = vmatprep.subr.bf16.mxu0 0
      %350 = vmatpush1.bf16.msra.mxu0 0
      %351 = vmatprep.mubr.bf16.mxu0 0
      %352 = vmatmul.mubr.bf16.gmra.mrb[0].mxu0 %v313
      %v353 = vpop.f32.mrb[0].mxu0
      %v354 = vadd.f32 0.0, %v353
      %v355 = vpop.f32.mrb[0].mxu0
      %v356 = vpop.f32.mrb[0].mxu0
      %v357 = vadd.f32 0.0, %v356
      %v358 = vpop.f32.mrb[0].mxu0
      %359 = vdwg.mxu0
      %v360 = vsel %vm311, %v289, 0
      %v363 = vsel %vm315, %v295, 0
      %365 = vmatprep.subr.bf16.mxu0 0
      %366 = vmatpush1.bf16.msra.mxu0 %v363
      %367 = vmatprep.subr.bf16.mxu0 0
      %368 = vmatpush1.bf16.msra.mxu0 0
      %369 = vmatprep.subr.bf16.mxu0 0
      %370 = vmatpush1.bf16.msra.mxu0 0
      %371 = vmatprep.subr.bf16.mxu0 0
      %372 = vmatpush1.bf16.msra.mxu0 0
      %373 = vmatprep.subr.bf16.mxu0 0
      %374 = vmatpush1.bf16.msra.mxu0 0
      %375 = vmatprep.subr.bf16.mxu0 0
      %376 = vmatpush1.bf16.msra.mxu0 0
      %377 = vmatprep.subr.bf16.mxu0 0
      %378 = vmatpush1.bf16.msra.mxu0 0
      %379 = vmatprep.subr.bf16.mxu0 0
      %380 = vmatpush1.bf16.msra.mxu0 0
      %381 = vmatprep.subr.bf16.mxu0 0
      %382 = vmatpush1.bf16.msra.mxu0 0
      %383 = vmatprep.subr.bf16.mxu0 0
      %384 = vmatpush1.bf16.msra.mxu0 0
      %385 = vmatprep.subr.bf16.mxu0 0
      %386 = vmatpush1.bf16.msra.mxu0 0
      %387 = vmatprep.subr.bf16.mxu0 0
      %388 = vmatpush1.bf16.msra.mxu0 0
      %389 = vmatprep.subr.bf16.mxu0 0
      %390 = vmatpush1.bf16.msra.mxu0 0
      %391 = vmatprep.subr.bf16.mxu0 0
      %392 = vmatpush1.bf16.msra.mxu0 0
      %393 = vmatprep.subr.bf16.mxu0 0
      %394 = vmatpush1.bf16.msra.mxu0 0
      %395 = vmatprep.subr.bf16.mxu0 0
      %396 = vmatpush1.bf16.msra.mxu0 0
      %397 = vmatprep.mubr.bf16.mxu0 0
      %398 = vmatmul.mubr.bf16.gmra.mrb[0].mxu0 %v360
      %v399 = vpop.f32.mrb[0].mxu0
      %v400 = vadd.f32 %v354, %v399
      %v401 = vpop.f32.mrb[0].mxu0
      %v402 = vpop.f32.mrb[0].mxu0
      %v403 = vadd.f32 %v357, %v402
      %v404 = vpop.f32.mrb[0].mxu0
      %405 = vdwg.mxu0
      %s406 = scalar_lea.vmem %s2, 8
      %v407 = vld [vmem:[%s406] sm:$0xf]
      %vm408 = vcmask 1046528
      %v409 = vrot.slane %v289, 1
      %v410 = vrot.slane %v294, 1
      %v411 = vsel %vm408, %v409, %v410
      %v413 = vsel %vm311, %v411, 0
      %v416 = vsel %vm315, %v407, 0
      %418 = vmatprep.subr.bf16.mxu0 0
      %419 = vmatpush1.bf16.msra.mxu0 %v416
      %420 = vmatprep.subr.bf16.mxu0 0
      %421 = vmatpush1.bf16.msra.mxu0 0
      %422 = vmatprep.subr.bf16.mxu0 0
      %423 = vmatpush1.bf16.msra.mxu0 0
      %424 = vmatprep.subr.bf16.mxu0 0
      %425 = vmatpush1.bf16.msra.mxu0 0
      %426 = vmatprep.subr.bf16.mxu0 0
      %427 = vmatpush1.bf16.msra.mxu0 0
      %428 = vmatprep.subr.bf16.mxu0 0
      %429 = vmatpush1.bf16.msra.mxu0 0
      %430 = vmatprep.subr.bf16.mxu0 0
      %431 = vmatpush1.bf16.msra.mxu0 0
      %432 = vmatprep.subr.bf16.mxu0 0
      %433 = vmatpush1.bf16.msra.mxu0 0
      %434 = vmatprep.subr.bf16.mxu0 0
      %435 = vmatpush1.bf16.msra.mxu0 0
      %436 = vmatprep.subr.bf16.mxu0 0
      %437 = vmatpush1.bf16.msra.mxu0 0
      %438 = vmatprep.subr.bf16.mxu0 0
      %439 = vmatpush1.bf16.msra.mxu0 0
      %440 = vmatprep.subr.bf16.mxu0 0
      %441 = vmatpush1.bf16.msra.mxu0 0
      %442 = vmatprep.subr.bf16.mxu0 0
      %443 = vmatpush1.bf16.msra.mxu0 0
      %444 = vmatprep.subr.bf16.mxu0 0
      %445 = vmatpush1.bf16.msra.mxu0 0
      %446 = vmatprep.subr.bf16.mxu0 0
      %447 = vmatpush1.bf16.msra.mxu0 0
      %448 = vmatprep.subr.bf16.mxu0 0
      %449 = vmatpush1.bf16.msra.mxu0 0
      %450 = vmatprep.mubr.bf16.mxu0 0
      %451 = vmatmul.mubr.bf16.gmra.mrb[0].mxu0 %v413
      %v452 = vpop.f32.mrb[0].mxu0
      %v453 = vadd.f32 0.0, %v452
      %v454 = vpop.f32.mrb[0].mxu0
      %v455 = vpop.f32.mrb[0].mxu0
      %v456 = vadd.f32 0.0, %v455
      %v457 = vpop.f32.mrb[0].mxu0
      %458 = vdwg.mxu0
      %v459 = vadd.f32 %v400, %v453
      %v460 = vadd.f32 %v403, %v456
      %s461 = scalar_lea.vmem %s2, 12
      %v462 = vld [vmem:[%s461] sm:$0xf]
      %vm463 = vsmask.f32 6400
      %v464 = vrot.slane %v300, 1
      %v465 = vrot.slane %v302, 2
      %v466 = vor.u32 %v464, %v465
      %v467 = vshrl.u32 %v294, 16
      %v469 = vrot.slane %v467, 1
      %v470 = vrot.slane %v307, 2
      %v471 = vor.u32 %v469, %v470
      %v472 = vsel %vm463, %v466, %v471
      %v474 = vsel %vm311, %v472, 0
      %v477 = vsel %vm315, %v462, 0
      %479 = vmatprep.subr.bf16.mxu0 0
      %480 = vmatpush1.bf16.msra.mxu0 %v477
      %481 = vmatprep.subr.bf16.mxu0 0
      %482 = vmatpush1.bf16.msra.mxu0 0
      %483 = vmatprep.subr.bf16.mxu0 0
      %484 = vmatpush1.bf16.msra.mxu0 0
      %485 = vmatprep.subr.bf16.mxu0 0
      %486 = vmatpush1.bf16.msra.mxu0 0
      %487 = vmatprep.subr.bf16.mxu0 0
      %488 = vmatpush1.bf16.msra.mxu0 0
      %489 = vmatprep.subr.bf16.mxu0 0
      %490 = vmatpush1.bf16.msra.mxu0 0
      %491 = vmatprep.subr.bf16.mxu0 0
      %492 = vmatpush1.bf16.msra.mxu0 0
      %493 = vmatprep.subr.bf16.mxu0 0
      %494 = vmatpush1.bf16.msra.mxu0 0
      %495 = vmatprep.subr.bf16.mxu0 0
      %496 = vmatpush1.bf16.msra.mxu0 0
      %497 = vmatprep.subr.bf16.mxu0 0
      %498 = vmatpush1.bf16.msra.mxu0 0
      %499 = vmatprep.subr.bf16.mxu0 0
      %500 = vmatpush1.bf16.msra.mxu0 0
      %501 = vmatprep.subr.bf16.mxu0 0
      %502 = vmatpush1.bf16.msra.mxu0 0
      %503 = vmatprep.subr.bf16.mxu0 0
      %504 = vmatpush1.bf16.msra.mxu0 0
      %505 = vmatprep.subr.bf16.mxu0 0
      %506 = vmatpush1.bf16.msra.mxu0 0
      %507 = vmatprep.subr.bf16.mxu0 0
      %508 = vmatpush1.bf16.msra.mxu0 0
      %509 = vmatprep.subr.bf16.mxu0 0
      %510 = vmatpush1.bf16.msra.mxu0 0
      %511 = vmatprep.mubr.bf16.mxu0 0
      %512 = vmatmul.mubr.bf16.gmra.mrb[0].mxu0 %v474
      %v513 = vpop.f32.mrb[0].mxu0
      %v514 = vadd.f32 0.0, %v513
      %v515 = vpop.f32.mrb[0].mxu0
      %v516 = vpop.f32.mrb[0].mxu0
      %v517 = vadd.f32 0.0, %v516
      %v518 = vpop.f32.mrb[0].mxu0
      %519 = vdwg.mxu0
      %v520 = vadd.f32 %v459, %v514
      %v521 = vadd.f32 %v460, %v517
      %s522 = scalar_lea.vmem %s2, 16
      %v523 = vld [vmem:[%s522] sm:$0xf]
      %vm524 = vcmask 1045504
      %v525 = vrot.slane %v289, 2
      %v526 = vrot.slane %v294, 2
      %v527 = vsel %vm524, %v525, %v526
      %v529 = vsel %vm311, %v527, 0
      %v532 = vsel %vm315, %v523, 0
      %534 = vmatprep.subr.bf16.mxu0 0
      %535 = vmatpush1.bf16.msra.mxu0 %v532
      %536 = vmatprep.subr.bf16.mxu0 0
      %537 = vmatpush1.bf16.msra.mxu0 0
      %538 = vmatprep.subr.bf16.mxu0 0
      %539 = vmatpush1.bf16.msra.mxu0 0
      %540 = vmatprep.subr.bf16.mxu0 0
      %541 = vmatpush1.bf16.msra.mxu0 0
      %542 = vmatprep.subr.bf16.mxu0 0
      %543 = vmatpush1.bf16.msra.mxu0 0
      %544 = vmatprep.subr.bf16.mxu0 0
      %545 = vmatpush1.bf16.msra.mxu0 0
      %546 = vmatprep.subr.bf16.mxu0 0
      %547 = vmatpush1.bf16.msra.mxu0 0
      %548 = vmatprep.subr.bf16.mxu0 0
      %549 = vmatpush1.bf16.msra.mxu0 0
      %550 = vmatprep.subr.bf16.mxu0 0
      %551 = vmatpush1.bf16.msra.mxu0 0
      %552 = vmatprep.subr.bf16.mxu0 0
      %553 = vmatpush1.bf16.msra.mxu0 0
      %554 = vmatprep.subr.bf16.mxu0 0
      %555 = vmatpush1.bf16.msra.mxu0 0
      %556 = vmatprep.subr.bf16.mxu0 0
      %557 = vmatpush1.bf16.msra.mxu0 0
      %558 = vmatprep.subr.bf16.mxu0 0
      %559 = vmatpush1.bf16.msra.mxu0 0
      %560 = vmatprep.subr.bf16.mxu0 0
      %561 = vmatpush1.bf16.msra.mxu0 0
      %562 = vmatprep.subr.bf16.mxu0 0
      %563 = vmatpush1.bf16.msra.mxu0 0
      %564 = vmatprep.subr.bf16.mxu0 0
      %565 = vmatpush1.bf16.msra.mxu0 0
      %566 = vmatprep.mubr.bf16.mxu0 0
      %567 = vmatmul.mubr.bf16.gmra.mrb[0].mxu0 %v529
      %v568 = vpop.f32.mrb[0].mxu0
      %v569 = vadd.f32 0.0, %v568
      %v570 = vpop.f32.mrb[0].mxu0
      %v571 = vpop.f32.mrb[0].mxu0
      %v572 = vadd.f32 0.0, %v571
      %v573 = vpop.f32.mrb[0].mxu0
      %574 = vdwg.mxu0
      %v575 = vadd.f32 %v520, %v569
      %v576 = vadd.f32 %v521, %v572
      %v577 = vld [vmem:[%s3] sm:$0x1]
      %v579 = vlaneseq
      %v580 = vshrl.u32 %v579, 7
      %v581 = vsub.s32 0, %v580
      %v582 = vrot.slane %v577, %v581
      %v584 = vadd.f32 %v575, %v582
      %v585 = vadd.f32 %v576, %v582
      %v586 = vpack.c.bf16 %v585, %v584
      %v588 = vunpack.c.l.b16 %v586
      %v589 = vunpack.c.h.b16 %v586
      %v590 = vpack.c.b16 %v588, %v588
      %v591 = vpack.c.b16 %v589, %v589
      %vm594 = vcmask 257024
      %595 = vst.msk [vmem:[%s278] sm:$0xf] %vm594, %v590
      %596 = vst.msk [vmem:[%s278 + $0x4] sm:$0xf] %vm594, %v591
      %s597 = smul.u32 2, %s20
      %p598 = scmp.lt.s32.totalorder %s19, 1
      %s599 = scalar_select %p598, %s19, 1
      %p600 = scmp.lt.s32.totalorder %s597, 1
      %s601 = scalar_select %p600, %s597, 1
      %s602 = smul.addr %s599, 2
      %s603 = sadd.s32 %s601, %s602
      %s604 = smul.addr %s603, 4
      %s605 = scalar_lea.vmem %s4, %s604
      // Predicated region
      $region37: #{inception_block_forward.8} parent=35 // pred_check
        %p606 = pneg %p147
      $region38: #{inception_block_forward.8} parent=35 // pred_check_branch
        %608 = sbr.rel (%p606) target = $region40
      $region39: #{inception_block_forward.8} parent=35 // pred_region
        %s609 = smul.u32 2, %s20
      $region40: #{inception_block_forward.8} parent=35 // pred_fallthru
        _
    $region36: #{inception_block_forward.8} parent=5 // pred_fallthru
      _
    %p610 = scmp.le.s32.totalorder 2, %s10
    // Predicated region
    $region41: #{inception_block_forward.8} parent=5 // pred_check
      %p611 = pneg %p610
    $region42: #{inception_block_forward.8} parent=5 // pred_check_branch
      %613 = sbr.rel (%p611) target = $region44
    $region43: #{inception_block_forward.8} parent=5 // pred_region
      %s614 = ssub.s32 %s10, 2
      // Predicated region
      $region45: #{inception_block_forward.8} parent=43 // pred_check
        %p615 = pneg %p153
      $region46: #{inception_block_forward.8} parent=43 // pred_check_branch
        %617 = sbr.rel (%p615) target = $region48
      $region47: #{inception_block_forward.8} parent=43 // pred_region
        %s618 = smul.u32 2, %s22
        %p619 = scmp.lt.s32.totalorder %s21, 1
        %s620 = scalar_select %p619, %s21, 1
        %p621 = scmp.lt.s32.totalorder %s618, 1
        %s622 = scalar_select %p621, %s618, 1
        %s623 = smul.addr %s620, 2
        %s624 = sadd.s32 %s622, %s623
        %s625 = smul.addr %s624, 4
        %s626 = scalar_lea.vmem %s4, %s625
      $region48: #{inception_block_forward.8} parent=43 // pred_fallthru
        _
    $region44: #{inception_block_forward.8} parent=5 // pred_fallthru
      _
  $region6: #{inception_block_forward.8} parent=0 // loop_footer
    %s14 = sadd.s32 1, %s10
  $region7: #{inception_block_forward.8} parent=0 // loop_footer_branch
    %9 = sbr.rel target = $region3
  $region8: #{inception_block_forward.8} parent=0 // loop_exit
    _

// kernel: inception_block_forward.6
$region0: #{inception_block_forward.6}
  #allocation0 [shape = 'u32[]', space=smem, size = 0x4, offset = 0x4, fixed_abs, tag = 'smem constant byte address 0x4 - core index']
  #allocation1 [shape = 'u32[144,128]{1,0:T(1,128)}', space=vmem, size = 0x12000, scoped, tag = 'internal scratch']
  %s0 = inlined_call_operand.vmem [shape: bf16[2,32,8], index: 0, kind: input, shape index: {}, may-alias: {0,1}]
  %s1 = inlined_call_operand.vmem [shape: bf16[2,32,8], index: 1, kind: input, shape index: {}, may-alias: {0,1}]
  %s2 = inlined_call_operand.vmem [shape: bf16[3,8,32], index: 2, kind: input, shape index: {}]
  %s3 = inlined_call_operand.vmem [shape: f32[1,32], index: 3, kind: input, shape index: {}]
  %s4 = inlined_call_operand.vmem [shape: bf16[2,16,32], index: 4, kind: output, shape index: {}]
  %s5 = sld [smem:[#allocation0]]
  $region49: #{inception_block_forward.6} parent=0
    _
  %s7 = ssub.s32 1, %s5
  %s8 = scalar_select 0, %s7, %s5
  loop: start=0, step=1, limit=4
  $region2: #{inception_block_forward.6} parent=0 // loop_pre_header
    _
  $region3: #{inception_block_forward.6} parent=0 // loop_header
    %s10 = sphi 0, %s14
    %p11 = scmp.ge.s32.totalorder %s10, 4
    %s17 = sphi 0, %s29
    %s18 = sphi 0, %s25
    %s19 = sphi 0, %s17
    %s20 = sphi 0, %s18
    %s21 = sphi 0, %s19
    %s22 = sphi 0, %s20
    %s34 = sphi 0, %s36
    %s37 = sphi 0, %s34
    %s38 = sphi 0, %s37
    %s54 = sphi 0, %s38
    %s64 = sphi 0, %s66
    %s67 = sphi 0, %s64
    %s68 = sphi 0, %s67
    %s84 = sphi 0, %s68
    %s88 = sphi 0, %s88
    %s90 = sphi 0, %s88
    %s91 = sphi 0, %s90
    %s105 = sphi 0, %s91
    %s109 = sphi 0, %s109
    %s111 = sphi 0, %s109
    %s112 = sphi 0, %s111
    %s126 = sphi 0, %s112
    %s134 = sphi 0, %s136
    %s137 = sphi 0, %s134
    %s138 = sphi 0, %s137
    %s154 = sphi 0, %s138
  $region4: #{inception_block_forward.6} parent=0 // loop_header_branch
    %13 = sbr.rel (%p11) target = $region8
  $region5: #{inception_block_forward.6} parent=0 // loop_body
    %s15 = ssub.s32 %s10, 1
    %s16 = ssub.s32 %s10, 2
    %s23 = sadd.s32 1, %s18
    %p24 = scmp.ge.s32.totalorder %s23, 1
    %s25 = scalar_select %p24, 0, %s23
    %s26 = sadd.s32 1, %s17
    %s27 = scalar_select %p24, %s26, %s17
    %p28 = scmp.ge.s32.totalorder %s27, 2
    %s29 = scalar_select %p28, 0, %s27
    %s30 = ssub.s32 %s17, %s29
    %s31 = ssub.s32 %s18, %s25
    %s32 = sor.u32 %s30, %s31
    %p33 = scmp.eq.s32.totalorder %s32, 0
    %s35 = sadd.s32 %s34, 1
    %s36 = scalar_select %p33, %s34, %s35
    %p39 = pneg %p33
    %p40 = scmp.eq.s32.totalorder %s10, 1
    %p41 = por %p39, %p40
    %p42 = scmp.ne.s32.totalorder %s34, %s37
    %p43 = scmp.eq.s32.totalorder %s10, 0
    %p44 = por %p42, %p43
    %p45 = scmp.ne.s32.totalorder %s34, %s37
    %p46 = scmp.eq.s32.totalorder %s15, 1
    %p47 = por %p45, %p46
    %p48 = scmp.ne.s32.totalorder %s37, %s38
    %p49 = scmp.eq.s32.totalorder %s15, 0
    %p50 = por %p48, %p49
    %p51 = scmp.ne.s32.totalorder %s37, %s38
    %p52 = scmp.eq.s32.totalorder %s16, 1
    %p53 = por %p51, %p52
    %p55 = scmp.ne.s32.totalorder %s38, %s54
    %p56 = scmp.eq.s32.totalorder %s16, 0
    %p57 = por %p55, %p56
    %s58 = sadd.s32 %s18, 1
    %s59 = sadd.s32 %s25, 1
    %s60 = ssub.s32 %s17, %s29
    %s61 = ssub.s32 %s58, %s59
    %s62 = sor.u32 %s60, %s61
    %p63 = scmp.eq.s32.totalorder %s62, 0
    %s65 = sadd.s32 %s64, 1
    %s66 = scalar_select %p63, %s64, %s65
    %p69 = pneg %p63
    %p70 = scmp.eq.s32.totalorder %s10, 1
    %p71 = por %p69, %p70
    %p72 = scmp.ne.s32.totalorder %s64, %s67
    %p73 = scmp.eq.s32.totalorder %s10, 0
    %p74 = por %p72, %p73
    %p75 = scmp.ne.s32.totalorder %s64, %s67
    %p76 = scmp.eq.s32.totalorder %s15, 1
    %p77 = por %p75, %p76
    %p78 = scmp.ne.s32.totalorder %s67, %s68
    %p79 = scmp.eq.s32.totalorder %s15, 0
    %p80 = por %p78, %p79
    %p81 = scmp.ne.s32.totalorder %s67, %s68
    %p82 = scmp.eq.s32.totalorder %s16, 1
    %p83 = por %p81, %p82
    %p85 = scmp.ne.s32.totalorder %s68, %s84
    %p86 = scmp.eq.s32.totalorder %s16, 0
    %p87 = por %p85, %p86
    %s89 = sadd.s32 %s88, 1
    %p92 = scmp.eq.s32.totalorder %s10, 1
    %p93 = scmp.ne.s32.totalorder %s88, %s90
    %p94 = scmp.eq.s32.totalorder %s10, 0
    %p95 = por %p93, %p94
    %p96 = scmp.ne.s32.totalorder %s88, %s90
    %p97 = scmp.eq.s32.totalorder %s15, 1
    %p98 = por %p96, %p97
    %p99 = scmp.ne.s32.totalorder %s90, %s91
    %p100 = scmp.eq.s32.totalorder %s15, 0
    %p101 = por %p99, %p100
    %p102 = scmp.ne.s32.totalorder %s90, %s91
    %p103 = scmp.eq.s32.totalorder %s16, 1
    %p104 = por %p102, %p103
    %p106 = scmp.ne.s32.totalorder %s91, %s105
    %p107 = scmp.eq.s32.totalorder %s16, 0
    %p108 = por %p106, %p107
    %s110 = sadd.s32 %s109, 1
    %p113 = scmp.eq.s32.totalorder %s10, 1
    %p114 = scmp.ne.s32.totalorder %s109, %s111
    %p115 = scmp.eq.s32.totalorder %s10, 0
    %p116 = por %p114, %p115
    %p117 = scmp.ne.s32.totalorder %s109, %s111
    %p118 = scmp.eq.s32.totalorder %s15, 1
    %p119 = por %p117, %p118
    %p120 = scmp.ne.s32.totalorder %s111, %s112
    %p121 = scmp.eq.s32.totalorder %s15, 0
    %p122 = por %p120, %p121
    %p123 = scmp.ne.s32.totalorder %s111, %s112
    %p124 = scmp.eq.s32.totalorder %s16, 1
    %p125 = por %p123, %p124
    %p127 = scmp.ne.s32.totalorder %s112, %s126
    %p128 = scmp.eq.s32.totalorder %s16, 0
    %p129 = por %p127, %p128
    %s130 = ssub.s32 %s17, %s29
    %s131 = ssub.s32 %s18, %s25
    %s132 = sor.u32 %s130, %s131
    %p133 = scmp.eq.s32.totalorder %s132, 0
    %s135 = sadd.s32 %s134, 1
    %s136 = scalar_select %p133, %s134, %s135
    %p139 = pneg %p133
    %p140 = scmp.eq.s32.totalorder %s10, 1
    %p141 = por %p139, %p140
    %p142 = scmp.ne.s32.totalorder %s134, %s137
    %p143 = scmp.eq.s32.totalorder %s10, 0
    %p144 = por %p142, %p143
    %p145 = scmp.ne.s32.totalorder %s134, %s137
    %p146 = scmp.eq.s32.totalorder %s15, 1
    %p147 = por %p145, %p146
    %p148 = scmp.ne.s32.totalorder %s137, %s138
    %p149 = scmp.eq.s32.totalorder %s15, 0
    %p150 = por %p148, %p149
    %p151 = scmp.ne.s32.totalorder %s137, %s138
    %p152 = scmp.eq.s32.totalorder %s16, 1
    %p153 = por %p151, %p152
    %p155 = scmp.ne.s32.totalorder %s138, %s154
    %p156 = scmp.eq.s32.totalorder %s16, 0
    %p157 = por %p155, %p156
    %p158 = scmp.le.s32.totalorder 1, %s10
    %p159 = scmp.lt.s32.totalorder %s10, 3
    %p160 = pnand %p158, %p159
    %p161 = pneg %p160
    // Predicated region
    $region9: #{inception_block_forward.6} parent=5 // pred_check
      _
    $region10: #{inception_block_forward.6} parent=5 // pred_check_branch
      %163 = sbr.rel (%p160) target = $region12
    $region11: #{inception_block_forward.6} parent=5 // pred_region
      %s164 = ssub.s32 %s10, 1
      // Predicated region
      $region13: #{inception_block_forward.6} parent=11 // pred_check
        %p165 = pneg %p101
      $region14: #{inception_block_forward.6} parent=11 // pred_check_branch
        %167 = sbr.rel (%p165) target = $region16
      $region15: #{inception_block_forward.6} parent=11 // pred_region
        _
      $region16: #{inception_block_forward.6} parent=11 // pred_fallthru
        _
      // Predicated region
      $region17: #{inception_block_forward.6} parent=11 // pred_check
        %p168 = pneg %p122
      $region18: #{inception_block_forward.6} parent=11 // pred_check_branch
        %170 = sbr.rel (%p168) target = $region20
      $region19: #{inception_block_forward.6} parent=11 // pred_region
        _
      $region20: #{inception_block_forward.6} parent=11 // pred_fallthru
        _
    $region12: #{inception_block_forward.6} parent=5 // pred_fallthru
      _
    %p171 = scmp.lt.s32.totalorder %s10, 2
    // Predicated region
    $region21: #{inception_block_forward.6} parent=5 // pred_check
      %p172 = pneg %p171
    $region22: #{inception_block_forward.6} parent=5 // pred_check_branch
      %174 = sbr.rel (%p172) target = $region24
    $region23: #{inception_block_forward.6} parent=5 // pred_region
      // Predicated region
      $region25: #{inception_block_forward.6} parent=23 // pred_check
        %p175 = pneg %p44
      $region26: #{inception_block_forward.6} parent=23 // pred_check_branch
        %177 = sbr.rel (%p175) target = $region28
      $region27: #{inception_block_forward.6} parent=23 // pred_region
        %s178 = smul.u32 2, %s18
        %p179 = scmp.lt.s32.totalorder %s17, 1
        %s180 = scalar_select %p179, %s17, 1
        %p181 = scmp.lt.s32.totalorder %s178, 3
        %s182 = scalar_select %p181, %s178, 3
        %s183 = smul.addr %s180, 4
        %s184 = sadd.s32 %s182, %s183
        %s185 = smul.addr %s184, 4
        %s186 = scalar_lea.vmem %s0, %s185
        %s187 = smul.u32 2, %s18
      $region28: #{inception_block_forward.6} parent=23 // pred_fallthru
        _
      // Predicated region
      $region29: #{inception_block_forward.6} parent=23 // pred_check
        %p188 = pneg %p74
      $region30: #{inception_block_forward.6} parent=23 // pred_check_branch
        %190 = sbr.rel (%p188) target = $region32
      $region31: #{inception_block_forward.6} parent=23 // pred_region
        %s191 = sadd.s32 %s18, 1
        %s192 = smul.u32 2, %s191
        %p193 = scmp.lt.s32.totalorder %s17, 1
        %s194 = scalar_select %p193, %s17, 1
        %p195 = scmp.lt.s32.totalorder %s192, 3
        %s196 = scalar_select %p195, %s192, 3
        %s197 = smul.addr %s194, 4
        %s198 = sadd.s32 %s196, %s197
        %s199 = smul.addr %s198, 4
        %s200 = scalar_lea.vmem %s1, %s199
        %s201 = sadd.s32 %s18, 1
        %s202 = smul.u32 2, %s201
      $region32: #{inception_block_forward.6} parent=23 // pred_fallthru
        _
    $region24: #{inception_block_forward.6} parent=5 // pred_fallthru
      _
    %p203 = scmp.le.s32.totalorder 1, %s10
    %p204 = scmp.lt.s32.totalorder %s10, 3
    %p205 = pnand %p203, %p204
    %p206 = pneg %p205
    // Predicated region
    $region33: #{inception_block_forward.6} parent=5 // pred_check
      _
    $region34: #{inception_block_forward.6} parent=5 // pred_check_branch
      %208 = sbr.rel (%p205) target = $region36
    $region35: #{inception_block_forward.6} parent=5 // pred_region
      %s209 = ssub.s32 %s10, 1
      %s210 = smul.u32 2, %s20
      %p211 = scmp.lt.s32.totalorder %s19, 1
      %s212 = scalar_select %p211, %s19, 1
      %p213 = scmp.lt.s32.totalorder %s210, 3
      %s214 = scalar_select %p213, %s210, 3
      %s215 = smul.addr %s212, 4
      %s216 = sadd.s32 %s214, %s215
      %s217 = smul.addr %s216, 4
      %s218 = scalar_lea.vmem %s0, %s217
      %p219 = pneg %p50
      %p220 = pneg %p47
      %s221 = sadd.s32 %s20, 1
      %s222 = smul.u32 2, %s221
      %p223 = scmp.lt.s32.totalorder %s19, 1
      %s224 = scalar_select %p223, %s19, 1
      %p225 = scmp.lt.s32.totalorder %s222, 3
      %s226 = scalar_select %p225, %s222, 3
      %s227 = smul.addr %s224, 4
      %s228 = sadd.s32 %s226, %s227
      %s229 = smul.addr %s228, 4
      %s230 = scalar_lea.vmem %s1, %s229
      %p231 = pneg %p80
      %p232 = pneg %p77
      %p233 = pneg %p101
      %p234 = pneg %p98
      %p235 = pneg %p122
      %p236 = pneg %p119
      %p237 = pneg %p150
      %p238 = pneg %p147
      %s239 = smul.u32 2, %s20
      %p240 = scmp.lt.s32.totalorder %s19, 1
      %s241 = scalar_select %p240, %s19, 1
      %p242 = scmp.lt.s32.totalorder %s239, 1
      %s243 = scalar_select %p242, %s239, 1
      %s244 = smul.addr %s241, 2
      %s245 = sadd.s32 %s243, %s244
      %s246 = smul.addr %s245, 4
      %s247 = scalar_lea.vmem %s4, %s246
      %s248 = smul.u32 2, %s20
      %p249 = scmp.lt.s32.totalorder %s19, 1
      %s250 = scalar_select %p249, %s19, 1
      %p251 = scmp.lt.s32.totalorder %s248, 3
      %s252 = scalar_select %p251, %s248, 3
      %s253 = smul.addr %s250, 4
      %s254 = sadd.s32 %s252, %s253
      %s255 = smul.addr %s254, 4
      %s256 = scalar_lea.vmem %s0, %s255
      %s257 = smul.u32 2, %s20
      %s258 = sadd.s32 %s20, 1
      %s259 = smul.u32 2, %s258
      %p260 = scmp.lt.s32.totalorder %s19, 1
      %s261 = scalar_select %p260, %s19, 1
      %p262 = scmp.lt.s32.totalorder %s259, 3
      %s263 = scalar_select %p262, %s259, 3
      %s264 = smul.addr %s261, 4
      %s265 = sadd.s32 %s263, %s264
      %s266 = smul.addr %s265, 4
      %s267 = scalar_lea.vmem %s1, %s266
      %s268 = sadd.s32 %s20, 1
      %s269 = smul.u32 2, %s268
      %s270 = smul.u32 2, %s20
      %p271 = scmp.lt.s32.totalorder %s19, 1
      %s272 = scalar_select %p271, %s19, 1
      %p273 = scmp.lt.s32.totalorder %s270, 1
      %s274 = scalar_select %p273, %s270, 1
      %s275 = smul.addr %s272, 2
      %s276 = sadd.s32 %s274, %s275
      %s277 = smul.addr %s276, 4
      %s278 = scalar_lea.vmem %s4, %s277
      %s279 = smul.u32 2, %s20
      %v281 = vld [vmem:[%s256] sm:$0xf]
      %v282 = vld [vmem:[%s256 + $0x4] sm:$0xf]
      %v283 = vld [vmem:[%s267] sm:$0xf]
      %v284 = vld [vmem:[%s267 + $0x4] sm:$0xf]
      %v287 = vunpack.c.l.b16 %v281
      %v288 = vunpack.c.l.b16 %v282
      %v289 = vpack.c.b16 %v288, %v287
      %v292 = vunpack.c.l.b16 %v283
      %v293 = vunpack.c.l.b16 %v284
      %v294 = vpack.c.b16 %v293, %v292
      %v295 = vld [vmem:[%s2] sm:$0xf]
      %s296 = scalar_lea.vmem %s2, 4
      %v297 = vld [vmem:[%s296] sm:$0xf]
      %vm298 = vsmask.f32 7424
      %v300 = vshrl.u32 %v289, 16
      %v302 = vshll.u32 %v289, 16
      %v304 = vrot.slane %v302, 1
      %v305 = vor.u32 %v300, %v304
      %v307 = vshll.u32 %v294, 16
      %v309 = vrot.slane %v307, 1
      %v310 = vsel %vm298, %v305, %v309
      %vm311 = vcmask 64512
      %v313 = vsel %vm311, %v310, 0
      %vm315 = vcmask 1043456
      %v317 = vsel %vm315, %v297, 0
      %319 = vmatprep.subr.bf16.mxu0 0
      %320 = vmatpush1.bf16.msra.mxu0 %v317
      %321 = vmatprep.subr.bf16.mxu0 0
      %322 = vmatpush1.bf16.msra.mxu0 0
      %323 = vmatprep.subr.bf16.mxu0 0
      %324 = vmatpush1.bf16.msra.mxu0 0
      %325 = vmatprep.subr.bf16.mxu0 0
      %326 = vmatpush1.bf16.msra.mxu0 0
      %327 = vmatprep.subr.bf16.mxu0 0
      %328 = vmatpush1.bf16.msra.mxu0 0
      %329 = vmatprep.subr.bf16.mxu0 0
      %330 = vmatpush1.bf16.msra.mxu0 0
      %331 = vmatprep.subr.bf16.mxu0 0
      %332 = vmatpush1.bf16.msra.mxu0 0
      %333 = vmatprep.subr.bf16.mxu0 0
      %334 = vmatpush1.bf16.msra.mxu0 0
      %335 = vmatprep.subr.bf16.mxu0 0
      %336 = vmatpush1.bf16.msra.mxu0 0
      %337 = vmatprep.subr.bf16.mxu0 0
      %338 = vmatpush1.bf16.msra.mxu0 0
      %339 = vmatprep.subr.bf16.mxu0 0
      %340 = vmatpush1.bf16.msra.mxu0 0
      %341 = vmatprep.subr.bf16.mxu0 0
      %342 = vmatpush1.bf16.msra.mxu0 0
      %343 = vmatprep.subr.bf16.mxu0 0
      %344 = vmatpush1.bf16.msra.mxu0 0
      %345 = vmatprep.subr.bf16.mxu0 0
      %346 = vmatpush1.bf16.msra.mxu0 0
      %347 = vmatprep.subr.bf16.mxu0 0
      %348 = vmatpush1.bf16.msra.mxu0 0
      %349 = vmatprep.subr.bf16.mxu0 0
      %350 = vmatpush1.bf16.msra.mxu0 0
      %351 = vmatprep.mubr.bf16.mxu0 0
      %352 = vmatmul.mubr.bf16.gmra.mrb[0].mxu0 %v313
      %v353 = vpop.f32.mrb[0].mxu0
      %v354 = vadd.f32 0.0, %v353
      %v355 = vpop.f32.mrb[0].mxu0
      %v356 = vpop.f32.mrb[0].mxu0
      %v357 = vadd.f32 0.0, %v356
      %v358 = vpop.f32.mrb[0].mxu0
      %359 = vdwg.mxu0
      %v360 = vsel %vm311, %v289, 0
      %v363 = vsel %vm315, %v295, 0
      %365 = vmatprep.subr.bf16.mxu0 0
      %366 = vmatpush1.bf16.msra.mxu0 %v363
      %367 = vmatprep.subr.bf16.mxu0 0
      %368 = vmatpush1.bf16.msra.mxu0 0
      %369 = vmatprep.subr.bf16.mxu0 0
      %370 = vmatpush1.bf16.msra.mxu0 0
      %371 = vmatprep.subr.bf16.mxu0 0
      %372 = vmatpush1.bf16.msra.mxu0 0
      %373 = vmatprep.subr.bf16.mxu0 0
      %374 = vmatpush1.bf16.msra.mxu0 0
      %375 = vmatprep.subr.bf16.mxu0 0
      %376 = vmatpush1.bf16.msra.mxu0 0
      %377 = vmatprep.subr.bf16.mxu0 0
      %378 = vmatpush1.bf16.msra.mxu0 0
      %379 = vmatprep.subr.bf16.mxu0 0
      %380 = vmatpush1.bf16.msra.mxu0 0
      %381 = vmatprep.subr.bf16.mxu0 0
      %382 = vmatpush1.bf16.msra.mxu0 0
      %383 = vmatprep.subr.bf16.mxu0 0
      %384 = vmatpush1.bf16.msra.mxu0 0
      %385 = vmatprep.subr.bf16.mxu0 0
      %386 = vmatpush1.bf16.msra.mxu0 0
      %387 = vmatprep.subr.bf16.mxu0 0
      %388 = vmatpush1.bf16.msra.mxu0 0
      %389 = vmatprep.subr.bf16.mxu0 0
      %390 = vmatpush1.bf16.msra.mxu0 0
      %391 = vmatprep.subr.bf16.mxu0 0
      %392 = vmatpush1.bf16.msra.mxu0 0
      %393 = vmatprep.subr.bf16.mxu0 0
      %394 = vmatpush1.bf16.msra.mxu0 0
      %395 = vmatprep.subr.bf16.mxu0 0
      %396 = vmatpush1.bf16.msra.mxu0 0
      %397 = vmatprep.mubr.bf16.mxu0 0
      %398 = vmatmul.mubr.bf16.gmra.mrb[0].mxu0 %v360
      %v399 = vpop.f32.mrb[0].mxu0
      %v400 = vadd.f32 %v354, %v399
      %v401 = vpop.f32.mrb[0].mxu0
      %v402 = vpop.f32.mrb[0].mxu0
      %v403 = vadd.f32 %v357, %v402
      %v404 = vpop.f32.mrb[0].mxu0
      %405 = vdwg.mxu0
      %s406 = scalar_lea.vmem %s2, 8
      %v407 = vld [vmem:[%s406] sm:$0xf]
      %vm408 = vcmask 1046528
      %v409 = vrot.slane %v289, 1
      %v410 = vrot.slane %v294, 1
      %v411 = vsel %vm408, %v409, %v410
      %v413 = vsel %vm311, %v411, 0
      %v416 = vsel %vm315, %v407, 0
      %418 = vmatprep.subr.bf16.mxu0 0
      %419 = vmatpush1.bf16.msra.mxu0 %v416
      %420 = vmatprep.subr.bf16.mxu0 0
      %421 = vmatpush1.bf16.msra.mxu0 0
      %422 = vmatprep.subr.bf16.mxu0 0
      %423 = vmatpush1.bf16.msra.mxu0 0
      %424 = vmatprep.subr.bf16.mxu0 0
      %425 = vmatpush1.bf16.msra.mxu0 0
      %426 = vmatprep.subr.bf16.mxu0 0
      %427 = vmatpush1.bf16.msra.mxu0 0
      %428 = vmatprep.subr.bf16.mxu0 0
      %429 = vmatpush1.bf16.msra.mxu0 0
      %430 = vmatprep.subr.bf16.mxu0 0
      %431 = vmatpush1.bf16.msra.mxu0 0
      %432 = vmatprep.subr.bf16.mxu0 0
      %433 = vmatpush1.bf16.msra.mxu0 0
      %434 = vmatprep.subr.bf16.mxu0 0
      %435 = vmatpush1.bf16.msra.mxu0 0
      %436 = vmatprep.subr.bf16.mxu0 0
      %437 = vmatpush1.bf16.msra.mxu0 0
      %438 = vmatprep.subr.bf16.mxu0 0
      %439 = vmatpush1.bf16.msra.mxu0 0
      %440 = vmatprep.subr.bf16.mxu0 0
      %441 = vmatpush1.bf16.msra.mxu0 0
      %442 = vmatprep.subr.bf16.mxu0 0
      %443 = vmatpush1.bf16.msra.mxu0 0
      %444 = vmatprep.subr.bf16.mxu0 0
      %445 = vmatpush1.bf16.msra.mxu0 0
      %446 = vmatprep.subr.bf16.mxu0 0
      %447 = vmatpush1.bf16.msra.mxu0 0
      %448 = vmatprep.subr.bf16.mxu0 0
      %449 = vmatpush1.bf16.msra.mxu0 0
      %450 = vmatprep.mubr.bf16.mxu0 0
      %451 = vmatmul.mubr.bf16.gmra.mrb[0].mxu0 %v413
      %v452 = vpop.f32.mrb[0].mxu0
      %v453 = vadd.f32 0.0, %v452
      %v454 = vpop.f32.mrb[0].mxu0
      %v455 = vpop.f32.mrb[0].mxu0
      %v456 = vadd.f32 0.0, %v455
      %v457 = vpop.f32.mrb[0].mxu0
      %458 = vdwg.mxu0
      %v459 = vadd.f32 %v400, %v453
      %v460 = vadd.f32 %v403, %v456
      %v461 = vld [vmem:[%s3] sm:$0x1]
      %v463 = vlaneseq
      %v464 = vshrl.u32 %v463, 7
      %v465 = vsub.s32 0, %v464
      %v466 = vrot.slane %v461, %v465
      %v468 = vadd.f32 %v459, %v466
      %v469 = vadd.f32 %v460, %v466
      %v470 = vpack.c.bf16 %v469, %v468
      %v472 = vunpack.c.l.b16 %v470
      %v473 = vunpack.c.h.b16 %v470
      %v474 = vpack.c.b16 %v472, %v472
      %v475 = vpack.c.b16 %v473, %v473
      %vm478 = vcmask 257024
      %479 = vst.msk [vmem:[%s278] sm:$0xf] %vm478, %v474
      %480 = vst.msk [vmem:[%s278 + $0x4] sm:$0xf] %vm478, %v475
      %s481 = smul.u32 2, %s20
      %p482 = scmp.lt.s32.totalorder %s19, 1
      %s483 = scalar_select %p482, %s19, 1
      %p484 = scmp.lt.s32.totalorder %s481, 1
      %s485 = scalar_select %p484, %s481, 1
      %s486 = smul.addr %s483, 2
      %s487 = sadd.s32 %s485, %s486
      %s488 = smul.addr %s487, 4
      %s489 = scalar_lea.vmem %s4, %s488
      // Predicated region
      $region37: #{inception_block_forward.6} parent=35 // pred_check
        %p490 = pneg %p147
      $region38: #{inception_block_forward.6} parent=35 // pred_check_branch
        %492 = sbr.rel (%p490) target = $region40
      $region39: #{inception_block_forward.6} parent=35 // pred_region
        %s493 = smul.u32 2, %s20
      $region40: #{inception_block_forward.6} parent=35 // pred_fallthru
        _
    $region36: #{inception_block_forward.6} parent=5 // pred_fallthru
      _
    %p494 = scmp.le.s32.totalorder 2, %s10
    // Predicated region
    $region41: #{inception_block_forward.6} parent=5 // pred_check
      %p495 = pneg %p494
    $region42: #{inception_block_forward.6} parent=5 // pred_check_branch
      %497 = sbr.rel (%p495) target = $region44
    $region43: #{inception_block_forward.6} parent=5 // pred_region
      %s498 = ssub.s32 %s10, 2
      // Predicated region
      $region45: #{inception_block_forward.6} parent=43 // pred_check
        %p499 = pneg %p153
      $region46: #{inception_block_forward.6} parent=43 // pred_check_branch
        %501 = sbr.rel (%p499) target = $region48
      $region47: #{inception_block_forward.6} parent=43 // pred_region
        %s502 = smul.u32 2, %s22
        %p503 = scmp.lt.s32.totalorder %s21, 1
        %s504 = scalar_select %p503, %s21, 1
        %p505 = scmp.lt.s32.totalorder %s502, 1
        %s506 = scalar_select %p505, %s502, 1
        %s507 = smul.addr %s504, 2
        %s508 = sadd.s32 %s506, %s507
        %s509 = smul.addr %s508, 4
        %s510 = scalar_lea.vmem %s4, %s509
      $region48: #{inception_block_forward.6} parent=43 // pred_fallthru
        _
    $region44: #{inception_block_forward.6} parent=5 // pred_fallthru
      _
  $region6: #{inception_block_forward.6} parent=0 // loop_footer
    %s14 = sadd.s32 1, %s10
  $region7: #{inception_block_forward.6} parent=0 // loop_footer_branch
    %9 = sbr.rel target = $region3
  $region8: #{inception_block_forward.6} parent=0 // loop_exit
    _

// kernel: inception_block_forward.9
$region0: #{inception_block_forward.9}
  #allocation0 [shape = 'u32[]', space=smem, size = 0x4, offset = 0x4, fixed_abs, tag = 'smem constant byte address 0x4 - core index']
  #allocation1 [shape = 'u32[144,128]{1,0:T(1,128)}', space=vmem, size = 0x12000, scoped, tag = 'internal scratch']
  %s0 = inlined_call_operand.vmem [shape: bf16[2,32,32], index: 0, kind: input, shape index: {}, may-alias: {0,1}]
  %s1 = inlined_call_operand.vmem [shape: bf16[2,32,32], index: 1, kind: input, shape index: {}, may-alias: {0,1}]
  %s2 = inlined_call_operand.vmem [shape: bf16[5,32,32], index: 2, kind: input, shape index: {}]
  %s3 = inlined_call_operand.vmem [shape: f32[1,32], index: 3, kind: input, shape index: {}]
  %s4 = inlined_call_operand.vmem [shape: bf16[2,16,32], index: 4, kind: output, shape index: {}]
  %s5 = sld [smem:[#allocation0]]
  $region49: #{inception_block_forward.9} parent=0
    _
  %s7 = ssub.s32 1, %s5
  %s8 = scalar_select 0, %s7, %s5
  loop: start=0, step=1, limit=4
  $region2: #{inception_block_forward.9} parent=0 // loop_pre_header
    _
  $region3: #{inception_block_forward.9} parent=0 // loop_header
    %s10 = sphi 0, %s14
    %p11 = scmp.ge.s32.totalorder %s10, 4
    %s17 = sphi 0, %s29
    %s18 = sphi 0, %s25
    %s19 = sphi 0, %s17
    %s20 = sphi 0, %s18
    %s21 = sphi 0, %s19
    %s22 = sphi 0, %s20
    %s34 = sphi 0, %s36
    %s37 = sphi 0, %s34
    %s38 = sphi 0, %s37
    %s54 = sphi 0, %s38
    %s64 = sphi 0, %s66
    %s67 = sphi 0, %s64
    %s68 = sphi 0, %s67
    %s84 = sphi 0, %s68
    %s88 = sphi 0, %s88
    %s90 = sphi 0, %s88
    %s91 = sphi 0, %s90
    %s105 = sphi 0, %s91
    %s109 = sphi 0, %s109
    %s111 = sphi 0, %s109
    %s112 = sphi 0, %s111
    %s126 = sphi 0, %s112
    %s134 = sphi 0, %s136
    %s137 = sphi 0, %s134
    %s138 = sphi 0, %s137
    %s154 = sphi 0, %s138
  $region4: #{inception_block_forward.9} parent=0 // loop_header_branch
    %13 = sbr.rel (%p11) target = $region8
  $region5: #{inception_block_forward.9} parent=0 // loop_body
    %s15 = ssub.s32 %s10, 1
    %s16 = ssub.s32 %s10, 2
    %s23 = sadd.s32 1, %s18
    %p24 = scmp.ge.s32.totalorder %s23, 1
    %s25 = scalar_select %p24, 0, %s23
    %s26 = sadd.s32 1, %s17
    %s27 = scalar_select %p24, %s26, %s17
    %p28 = scmp.ge.s32.totalorder %s27, 2
    %s29 = scalar_select %p28, 0, %s27
    %s30 = ssub.s32 %s17, %s29
    %s31 = ssub.s32 %s18, %s25
    %s32 = sor.u32 %s30, %s31
    %p33 = scmp.eq.s32.totalorder %s32, 0
    %s35 = sadd.s32 %s34, 1
    %s36 = scalar_select %p33, %s34, %s35
    %p39 = pneg %p33
    %p40 = scmp.eq.s32.totalorder %s10, 1
    %p41 = por %p39, %p40
    %p42 = scmp.ne.s32.totalorder %s34, %s37
    %p43 = scmp.eq.s32.totalorder %s10, 0
    %p44 = por %p42, %p43
    %p45 = scmp.ne.s32.totalorder %s34, %s37
    %p46 = scmp.eq.s32.totalorder %s15, 1
    %p47 = por %p45, %p46
    %p48 = scmp.ne.s32.totalorder %s37, %s38
    %p49 = scmp.eq.s32.totalorder %s15, 0
    %p50 = por %p48, %p49
    %p51 = scmp.ne.s32.totalorder %s37, %s38
    %p52 = scmp.eq.s32.totalorder %s16, 1
    %p53 = por %p51, %p52
    %p55 = scmp.ne.s32.totalorder %s38, %s54
    %p56 = scmp.eq.s32.totalorder %s16, 0
    %p57 = por %p55, %p56
    %s58 = sadd.s32 %s18, 1
    %s59 = sadd.s32 %s25, 1
    %s60 = ssub.s32 %s17, %s29
    %s61 = ssub.s32 %s58, %s59
    %s62 = sor.u32 %s60, %s61
    %p63 = scmp.eq.s32.totalorder %s62, 0
    %s65 = sadd.s32 %s64, 1
    %s66 = scalar_select %p63, %s64, %s65
    %p69 = pneg %p63
    %p70 = scmp.eq.s32.totalorder %s10, 1
    %p71 = por %p69, %p70
    %p72 = scmp.ne.s32.totalorder %s64, %s67
    %p73 = scmp.eq.s32.totalorder %s10, 0
    %p74 = por %p72, %p73
    %p75 = scmp.ne.s32.totalorder %s64, %s67
    %p76 = scmp.eq.s32.totalorder %s15, 1
    %p77 = por %p75, %p76
    %p78 = scmp.ne.s32.totalorder %s67, %s68
    %p79 = scmp.eq.s32.totalorder %s15, 0
    %p80 = por %p78, %p79
    %p81 = scmp.ne.s32.totalorder %s67, %s68
    %p82 = scmp.eq.s32.totalorder %s16, 1
    %p83 = por %p81, %p82
    %p85 = scmp.ne.s32.totalorder %s68, %s84
    %p86 = scmp.eq.s32.totalorder %s16, 0
    %p87 = por %p85, %p86
    %s89 = sadd.s32 %s88, 1
    %p92 = scmp.eq.s32.totalorder %s10, 1
    %p93 = scmp.ne.s32.totalorder %s88, %s90
    %p94 = scmp.eq.s32.totalorder %s10, 0
    %p95 = por %p93, %p94
    %p96 = scmp.ne.s32.totalorder %s88, %s90
    %p97 = scmp.eq.s32.totalorder %s15, 1
    %p98 = por %p96, %p97
    %p99 = scmp.ne.s32.totalorder %s90, %s91
    %p100 = scmp.eq.s32.totalorder %s15, 0
    %p101 = por %p99, %p100
    %p102 = scmp.ne.s32.totalorder %s90, %s91
    %p103 = scmp.eq.s32.totalorder %s16, 1
    %p104 = por %p102, %p103
    %p106 = scmp.ne.s32.totalorder %s91, %s105
    %p107 = scmp.eq.s32.totalorder %s16, 0
    %p108 = por %p106, %p107
    %s110 = sadd.s32 %s109, 1
    %p113 = scmp.eq.s32.totalorder %s10, 1
    %p114 = scmp.ne.s32.totalorder %s109, %s111
    %p115 = scmp.eq.s32.totalorder %s10, 0
    %p116 = por %p114, %p115
    %p117 = scmp.ne.s32.totalorder %s109, %s111
    %p118 = scmp.eq.s32.totalorder %s15, 1
    %p119 = por %p117, %p118
    %p120 = scmp.ne.s32.totalorder %s111, %s112
    %p121 = scmp.eq.s32.totalorder %s15, 0
    %p122 = por %p120, %p121
    %p123 = scmp.ne.s32.totalorder %s111, %s112
    %p124 = scmp.eq.s32.totalorder %s16, 1
    %p125 = por %p123, %p124
    %p127 = scmp.ne.s32.totalorder %s112, %s126
    %p128 = scmp.eq.s32.totalorder %s16, 0
    %p129 = por %p127, %p128
    %s130 = ssub.s32 %s17, %s29
    %s131 = ssub.s32 %s18, %s25
    %s132 = sor.u32 %s130, %s131
    %p133 = scmp.eq.s32.totalorder %s132, 0
    %s135 = sadd.s32 %s134, 1
    %s136 = scalar_select %p133, %s134, %s135
    %p139 = pneg %p133
    %p140 = scmp.eq.s32.totalorder %s10, 1
    %p141 = por %p139, %p140
    %p142 = scmp.ne.s32.totalorder %s134, %s137
    %p143 = scmp.eq.s32.totalorder %s10, 0
    %p144 = por %p142, %p143
    %p145 = scmp.ne.s32.totalorder %s134, %s137
    %p146 = scmp.eq.s32.totalorder %s15, 1
    %p147 = por %p145, %p146
    %p148 = scmp.ne.s32.totalorder %s137, %s138
    %p149 = scmp.eq.s32.totalorder %s15, 0
    %p150 = por %p148, %p149
    %p151 = scmp.ne.s32.totalorder %s137, %s138
    %p152 = scmp.eq.s32.totalorder %s16, 1
    %p153 = por %p151, %p152
    %p155 = scmp.ne.s32.totalorder %s138, %s154
    %p156 = scmp.eq.s32.totalorder %s16, 0
    %p157 = por %p155, %p156
    %p158 = scmp.le.s32.totalorder 1, %s10
    %p159 = scmp.lt.s32.totalorder %s10, 3
    %p160 = pnand %p158, %p159
    %p161 = pneg %p160
    // Predicated region
    $region9: #{inception_block_forward.9} parent=5 // pred_check
      _
    $region10: #{inception_block_forward.9} parent=5 // pred_check_branch
      %163 = sbr.rel (%p160) target = $region12
    $region11: #{inception_block_forward.9} parent=5 // pred_region
      %s164 = ssub.s32 %s10, 1
      // Predicated region
      $region13: #{inception_block_forward.9} parent=11 // pred_check
        %p165 = pneg %p101
      $region14: #{inception_block_forward.9} parent=11 // pred_check_branch
        %167 = sbr.rel (%p165) target = $region16
      $region15: #{inception_block_forward.9} parent=11 // pred_region
        _
      $region16: #{inception_block_forward.9} parent=11 // pred_fallthru
        _
      // Predicated region
      $region17: #{inception_block_forward.9} parent=11 // pred_check
        %p168 = pneg %p122
      $region18: #{inception_block_forward.9} parent=11 // pred_check_branch
        %170 = sbr.rel (%p168) target = $region20
      $region19: #{inception_block_forward.9} parent=11 // pred_region
        _
      $region20: #{inception_block_forward.9} parent=11 // pred_fallthru
        _
    $region12: #{inception_block_forward.9} parent=5 // pred_fallthru
      _
    %p171 = scmp.lt.s32.totalorder %s10, 2
    // Predicated region
    $region21: #{inception_block_forward.9} parent=5 // pred_check
      %p172 = pneg %p171
    $region22: #{inception_block_forward.9} parent=5 // pred_check_branch
      %174 = sbr.rel (%p172) target = $region24
    $region23: #{inception_block_forward.9} parent=5 // pred_region
      // Predicated region
      $region25: #{inception_block_forward.9} parent=23 // pred_check
        %p175 = pneg %p44
      $region26: #{inception_block_forward.9} parent=23 // pred_check_branch
        %177 = sbr.rel (%p175) target = $region28
      $region27: #{inception_block_forward.9} parent=23 // pred_region
        %s178 = smul.u32 2, %s18
        %p179 = scmp.lt.s32.totalorder %s17, 1
        %s180 = scalar_select %p179, %s17, 1
        %p181 = scmp.lt.s32.totalorder %s178, 3
        %s182 = scalar_select %p181, %s178, 3
        %s183 = smul.addr %s180, 4
        %s184 = sadd.s32 %s182, %s183
        %s185 = smul.addr %s184, 4
        %s186 = scalar_lea.vmem %s0, %s185
        %s187 = smul.u32 2, %s18
      $region28: #{inception_block_forward.9} parent=23 // pred_fallthru
        _
      // Predicated region
      $region29: #{inception_block_forward.9} parent=23 // pred_check
        %p188 = pneg %p74
      $region30: #{inception_block_forward.9} parent=23 // pred_check_branch
        %190 = sbr.rel (%p188) target = $region32
      $region31: #{inception_block_forward.9} parent=23 // pred_region
        %s191 = sadd.s32 %s18, 1
        %s192 = smul.u32 2, %s191
        %p193 = scmp.lt.s32.totalorder %s17, 1
        %s194 = scalar_select %p193, %s17, 1
        %p195 = scmp.lt.s32.totalorder %s192, 3
        %s196 = scalar_select %p195, %s192, 3
        %s197 = smul.addr %s194, 4
        %s198 = sadd.s32 %s196, %s197
        %s199 = smul.addr %s198, 4
        %s200 = scalar_lea.vmem %s1, %s199
        %s201 = sadd.s32 %s18, 1
        %s202 = smul.u32 2, %s201
      $region32: #{inception_block_forward.9} parent=23 // pred_fallthru
        _
    $region24: #{inception_block_forward.9} parent=5 // pred_fallthru
      _
    %p203 = scmp.le.s32.totalorder 1, %s10
    %p204 = scmp.lt.s32.totalorder %s10, 3
    %p205 = pnand %p203, %p204
    %p206 = pneg %p205
    // Predicated region
    $region33: #{inception_block_forward.9} parent=5 // pred_check
      _
    $region34: #{inception_block_forward.9} parent=5 // pred_check_branch
      %208 = sbr.rel (%p205) target = $region36
    $region35: #{inception_block_forward.9} parent=5 // pred_region
      %s209 = ssub.s32 %s10, 1
      %s210 = smul.u32 2, %s20
      %p211 = scmp.lt.s32.totalorder %s19, 1
      %s212 = scalar_select %p211, %s19, 1
      %p213 = scmp.lt.s32.totalorder %s210, 3
      %s214 = scalar_select %p213, %s210, 3
      %s215 = smul.addr %s212, 4
      %s216 = sadd.s32 %s214, %s215
      %s217 = smul.addr %s216, 4
      %s218 = scalar_lea.vmem %s0, %s217
      %p219 = pneg %p50
      %p220 = pneg %p47
      %s221 = sadd.s32 %s20, 1
      %s222 = smul.u32 2, %s221
      %p223 = scmp.lt.s32.totalorder %s19, 1
      %s224 = scalar_select %p223, %s19, 1
      %p225 = scmp.lt.s32.totalorder %s222, 3
      %s226 = scalar_select %p225, %s222, 3
      %s227 = smul.addr %s224, 4
      %s228 = sadd.s32 %s226, %s227
      %s229 = smul.addr %s228, 4
      %s230 = scalar_lea.vmem %s1, %s229
      %p231 = pneg %p80
      %p232 = pneg %p77
      %p233 = pneg %p101
      %p234 = pneg %p98
      %p235 = pneg %p122
      %p236 = pneg %p119
      %p237 = pneg %p150
      %p238 = pneg %p147
      %s239 = smul.u32 2, %s20
      %p240 = scmp.lt.s32.totalorder %s19, 1
      %s241 = scalar_select %p240, %s19, 1
      %p242 = scmp.lt.s32.totalorder %s239, 1
      %s243 = scalar_select %p242, %s239, 1
      %s244 = smul.addr %s241, 2
      %s245 = sadd.s32 %s243, %s244
      %s246 = smul.addr %s245, 4
      %s247 = scalar_lea.vmem %s4, %s246
      %s248 = smul.u32 2, %s20
      %p249 = scmp.lt.s32.totalorder %s19, 1
      %s250 = scalar_select %p249, %s19, 1
      %p251 = scmp.lt.s32.totalorder %s248, 3
      %s252 = scalar_select %p251, %s248, 3
      %s253 = smul.addr %s250, 4
      %s254 = sadd.s32 %s252, %s253
      %s255 = smul.addr %s254, 4
      %s256 = scalar_lea.vmem %s0, %s255
      %s257 = smul.u32 2, %s20
      %s258 = sadd.s32 %s20, 1
      %s259 = smul.u32 2, %s258
      %p260 = scmp.lt.s32.totalorder %s19, 1
      %s261 = scalar_select %p260, %s19, 1
      %p262 = scmp.lt.s32.totalorder %s259, 3
      %s263 = scalar_select %p262, %s259, 3
      %s264 = smul.addr %s261, 4
      %s265 = sadd.s32 %s263, %s264
      %s266 = smul.addr %s265, 4
      %s267 = scalar_lea.vmem %s1, %s266
      %s268 = sadd.s32 %s20, 1
      %s269 = smul.u32 2, %s268
      %s270 = smul.u32 2, %s20
      %p271 = scmp.lt.s32.totalorder %s19, 1
      %s272 = scalar_select %p271, %s19, 1
      %p273 = scmp.lt.s32.totalorder %s270, 1
      %s274 = scalar_select %p273, %s270, 1
      %s275 = smul.addr %s272, 2
      %s276 = sadd.s32 %s274, %s275
      %s277 = smul.addr %s276, 4
      %s278 = scalar_lea.vmem %s4, %s277
      %s279 = smul.u32 2, %s20
      %v281 = vld [vmem:[%s256] sm:$0xf]
      %v282 = vld [vmem:[%s256 + $0x4] sm:$0xf]
      %v283 = vld [vmem:[%s267] sm:$0xf]
      %v284 = vld [vmem:[%s267 + $0x4] sm:$0xf]
      %v287 = vunpack.c.l.b16 %v281
      %v288 = vunpack.c.l.b16 %v282
      %v289 = vpack.c.b16 %v288, %v287
      %v292 = vunpack.c.l.b16 %v283
      %v293 = vunpack.c.l.b16 %v284
      %v294 = vpack.c.b16 %v293, %v292
      %v295 = vld [vmem:[%s2] sm:$0xf]
      %v296 = vld [vmem:[%s2 + $0x4] sm:$0xf]
      %v297 = vld [vmem:[%s2 + $0x8] sm:$0xf]
      %v298 = vld [vmem:[%s2 + $0xc] sm:$0xf]
      %s299 = scalar_lea.vmem %s2, 16
      %v300 = vld [vmem:[%s299] sm:$0xf]
      %v301 = vld [vmem:[%s299 + $0x4] sm:$0xf]
      %v302 = vld [vmem:[%s299 + $0x8] sm:$0xf]
      %v303 = vld [vmem:[%s299 + $0xc] sm:$0xf]
      %vm304 = vsmask.f32 7424
      %v306 = vshrl.u32 %v289, 16
      %v308 = vshll.u32 %v289, 16
      %v310 = vrot.slane %v308, 1
      %v311 = vor.u32 %v306, %v310
      %v313 = vshll.u32 %v294, 16
      %v315 = vrot.slane %v313, 1
      %v316 = vsel %vm304, %v311, %v315
      %v321 = vunpack.c.l.b16 %v300
      %v322 = vunpack.c.l.b16 %v301
      %v323 = vunpack.c.l.b16 %v302
      %v324 = vunpack.c.l.b16 %v303
      %v325 = vpack.c.b16 %v322, %v321
      %v326 = vpack.c.b16 %v324, %v323
      %vm329 = vcmask 261120
      %v331 = vsel %vm329, %v316, 0
      %333 = vmatprep.subr.bf16.mxu0 0
      %334 = vmatpush1.bf16.msra.mxu0 %v325
      %335 = vmatprep.subr.bf16.mxu0 0
      %336 = vmatpush1.bf16.msra.mxu0 %v326
      %337 = vmatprep.subr.bf16.mxu0 0
      %338 = vmatpush1.bf16.msra.mxu0 0
      %339 = vmatprep.subr.bf16.mxu0 0
      %340 = vmatpush1.bf16.msra.mxu0 0
      %341 = vmatprep.subr.bf16.mxu0 0
      %342 = vmatpush1.bf16.msra.mxu0 0
      %343 = vmatprep.subr.bf16.mxu0 0
      %344 = vmatpush1.bf16.msra.mxu0 0
      %345 = vmatprep.subr.bf16.mxu0 0
      %346 = vmatpush1.bf16.msra.mxu0 0
      %347 = vmatprep.subr.bf16.mxu0 0
      %348 = vmatpush1.bf16.msra.mxu0 0
      %349 = vmatprep.subr.bf16.mxu0 0
      %350 = vmatpush1.bf16.msra.mxu0 0
      %351 = vmatprep.subr.bf16.mxu0 0
      %352 = vmatpush1.bf16.msra.mxu0 0
      %353 = vmatprep.subr.bf16.mxu0 0
      %354 = vmatpush1.bf16.msra.mxu0 0
      %355 = vmatprep.subr.bf16.mxu0 0
      %356 = vmatpush1.bf16.msra.mxu0 0
      %357 = vmatprep.subr.bf16.mxu0 0
      %358 = vmatpush1.bf16.msra.mxu0 0
      %359 = vmatprep.subr.bf16.mxu0 0
      %360 = vmatpush1.bf16.msra.mxu0 0
      %361 = vmatprep.subr.bf16.mxu0 0
      %362 = vmatpush1.bf16.msra.mxu0 0
      %363 = vmatprep.subr.bf16.mxu0 0
      %364 = vmatpush1.bf16.msra.mxu0 0
      %365 = vmatprep.mubr.bf16.mxu0 0
      %366 = vmatmul.mubr.bf16.gmra.mrb[0].mxu0 %v331
      %v367 = vpop.f32.mrb[0].mxu0
      %v368 = vadd.f32 0.0, %v367
      %v369 = vpop.f32.mrb[0].mxu0
      %v370 = vpop.f32.mrb[0].mxu0
      %v371 = vadd.f32 0.0, %v370
      %v372 = vpop.f32.mrb[0].mxu0
      %373 = vdwg.mxu0
      %v378 = vunpack.c.l.b16 %v295
      %v379 = vunpack.c.l.b16 %v296
      %v380 = vunpack.c.l.b16 %v297
      %v381 = vunpack.c.l.b16 %v298
      %v382 = vpack.c.b16 %v379, %v378
      %v383 = vpack.c.b16 %v381, %v380
      %v386 = vsel %vm329, %v289, 0
      %388 = vmatprep.subr.bf16.mxu0 0
      %389 = vmatpush1.bf16.msra.mxu0 %v382
      %390 = vmatprep.subr.bf16.mxu0 0
      %391 = vmatpush1.bf16.msra.mxu0 %v383
      %392 = vmatprep.subr.bf16.mxu0 0
      %393 = vmatpush1.bf16.msra.mxu0 0
      %394 = vmatprep.subr.bf16.mxu0 0
      %395 = vmatpush1.bf16.msra.mxu0 0
      %396 = vmatprep.subr.bf16.mxu0 0
      %397 = vmatpush1.bf16.msra.mxu0 0
      %398 = vmatprep.subr.bf16.mxu0 0
      %399 = vmatpush1.bf16.msra.mxu0 0
      %400 = vmatprep.subr.bf16.mxu0 0
      %401 = vmatpush1.bf16.msra.mxu0 0
      %402 = vmatprep.subr.bf16.mxu0 0
      %403 = vmatpush1.bf16.msra.mxu0 0
      %404 = vmatprep.subr.bf16.mxu0 0
      %405 = vmatpush1.bf16.msra.mxu0 0
      %406 = vmatprep.subr.bf16.mxu0 0
      %407 = vmatpush1.bf16.msra.mxu0 0
      %408 = vmatprep.subr.bf16.mxu0 0
      %409 = vmatpush1.bf16.msra.mxu0 0
      %410 = vmatprep.subr.bf16.mxu0 0
      %411 = vmatpush1.bf16.msra.mxu0 0
      %412 = vmatprep.subr.bf16.mxu0 0
      %413 = vmatpush1.bf16.msra.mxu0 0
      %414 = vmatprep.subr.bf16.mxu0 0
      %415 = vmatpush1.bf16.msra.mxu0 0
      %416 = vmatprep.subr.bf16.mxu0 0
      %417 = vmatpush1.bf16.msra.mxu0 0
      %418 = vmatprep.subr.bf16.mxu0 0
      %419 = vmatpush1.bf16.msra.mxu0 0
      %420 = vmatprep.mubr.bf16.mxu0 0
      %421 = vmatmul.mubr.bf16.gmra.mrb[0].mxu0 %v386
      %v422 = vpop.f32.mrb[0].mxu0
      %v423 = vadd.f32 %v368, %v422
      %v424 = vpop.f32.mrb[0].mxu0
      %v425 = vpop.f32.mrb[0].mxu0
      %v426 = vadd.f32 %v371, %v425
      %v427 = vpop.f32.mrb[0].mxu0
      %428 = vdwg.mxu0
      %s429 = scalar_lea.vmem %s2, 32
      %v430 = vld [vmem:[%s429] sm:$0xf]
      %v431 = vld [vmem:[%s429 + $0x4] sm:$0xf]
      %v432 = vld [vmem:[%s429 + $0x8] sm:$0xf]
      %v433 = vld [vmem:[%s429 + $0xc] sm:$0xf]
      %vm434 = vcmask 1046528
      %v435 = vrot.slane %v289, 1
      %v436 = vrot.slane %v294, 1
      %v437 = vsel %vm434, %v435, %v436
      %v442 = vunpack.c.l.b16 %v430
      %v443 = vunpack.c.l.b16 %v431
      %v444 = vunpack.c.l.b16 %v432
      %v445 = vunpack.c.l.b16 %v433
      %v446 = vpack.c.b16 %v443, %v442
      %v447 = vpack.c.b16 %v445, %v444
      %v451 = vsel %vm329, %v437, 0
      %453 = vmatprep.subr.bf16.mxu0 0
      %454 = vmatpush1.bf16.msra.mxu0 %v446
      %455 = vmatprep.subr.bf16.mxu0 0
      %456 = vmatpush1.bf16.msra.mxu0 %v447
      %457 = vmatprep.subr.bf16.mxu0 0
      %458 = vmatpush1.bf16.msra.mxu0 0
      %459 = vmatprep.subr.bf16.mxu0 0
      %460 = vmatpush1.bf16.msra.mxu0 0
      %461 = vmatprep.subr.bf16.mxu0 0
      %462 = vmatpush1.bf16.msra.mxu0 0
      %463 = vmatprep.subr.bf16.mxu0 0
      %464 = vmatpush1.bf16.msra.mxu0 0
      %465 = vmatprep.subr.bf16.mxu0 0
      %466 = vmatpush1.bf16.msra.mxu0 0
      %467 = vmatprep.subr.bf16.mxu0 0
      %468 = vmatpush1.bf16.msra.mxu0 0
      %469 = vmatprep.subr.bf16.mxu0 0
      %470 = vmatpush1.bf16.msra.mxu0 0
      %471 = vmatprep.subr.bf16.mxu0 0
      %472 = vmatpush1.bf16.msra.mxu0 0
      %473 = vmatprep.subr.bf16.mxu0 0
      %474 = vmatpush1.bf16.msra.mxu0 0
      %475 = vmatprep.subr.bf16.mxu0 0
      %476 = vmatpush1.bf16.msra.mxu0 0
      %477 = vmatprep.subr.bf16.mxu0 0
      %478 = vmatpush1.bf16.msra.mxu0 0
      %479 = vmatprep.subr.bf16.mxu0 0
      %480 = vmatpush1.bf16.msra.mxu0 0
      %481 = vmatprep.subr.bf16.mxu0 0
      %482 = vmatpush1.bf16.msra.mxu0 0
      %483 = vmatprep.subr.bf16.mxu0 0
      %484 = vmatpush1.bf16.msra.mxu0 0
      %485 = vmatprep.mubr.bf16.mxu0 0
      %486 = vmatmul.mubr.bf16.gmra.mrb[0].mxu0 %v451
      %v487 = vpop.f32.mrb[0].mxu0
      %v488 = vadd.f32 0.0, %v487
      %v489 = vpop.f32.mrb[0].mxu0
      %v490 = vpop.f32.mrb[0].mxu0
      %v491 = vadd.f32 0.0, %v490
      %v492 = vpop.f32.mrb[0].mxu0
      %493 = vdwg.mxu0
      %v494 = vadd.f32 %v423, %v488
      %v495 = vadd.f32 %v426, %v491
      %s496 = scalar_lea.vmem %s2, 48
      %v497 = vld [vmem:[%s496] sm:$0xf]
      %v498 = vld [vmem:[%s496 + $0x4] sm:$0xf]
      %v499 = vld [vmem:[%s496 + $0x8] sm:$0xf]
      %v500 = vld [vmem:[%s496 + $0xc] sm:$0xf]
      %vm501 = vsmask.f32 6400
      %v502 = vrot.slane %v306, 1
      %v503 = vrot.slane %v308, 2
      %v504 = vor.u32 %v502, %v503
      %v505 = vshrl.u32 %v294, 16
      %v507 = vrot.slane %v505, 1
      %v508 = vrot.slane %v313, 2
      %v509 = vor.u32 %v507, %v508
      %v510 = vsel %vm501, %v504, %v509
      %v515 = vunpack.c.l.b16 %v497
      %v516 = vunpack.c.l.b16 %v498
      %v517 = vunpack.c.l.b16 %v499
      %v518 = vunpack.c.l.b16 %v500
      %v519 = vpack.c.b16 %v516, %v515
      %v520 = vpack.c.b16 %v518, %v517
      %v524 = vsel %vm329, %v510, 0
      %526 = vmatprep.subr.bf16.mxu0 0
      %527 = vmatpush1.bf16.msra.mxu0 %v519
      %528 = vmatprep.subr.bf16.mxu0 0
      %529 = vmatpush1.bf16.msra.mxu0 %v520
      %530 = vmatprep.subr.bf16.mxu0 0
      %531 = vmatpush1.bf16.msra.mxu0 0
      %532 = vmatprep.subr.bf16.mxu0 0
      %533 = vmatpush1.bf16.msra.mxu0 0
      %534 = vmatprep.subr.bf16.mxu0 0
      %535 = vmatpush1.bf16.msra.mxu0 0
      %536 = vmatprep.subr.bf16.mxu0 0
      %537 = vmatpush1.bf16.msra.mxu0 0
      %538 = vmatprep.subr.bf16.mxu0 0
      %539 = vmatpush1.bf16.msra.mxu0 0
      %540 = vmatprep.subr.bf16.mxu0 0
      %541 = vmatpush1.bf16.msra.mxu0 0
      %542 = vmatprep.subr.bf16.mxu0 0
      %543 = vmatpush1.bf16.msra.mxu0 0
      %544 = vmatprep.subr.bf16.mxu0 0
      %545 = vmatpush1.bf16.msra.mxu0 0
      %546 = vmatprep.subr.bf16.mxu0 0
      %547 = vmatpush1.bf16.msra.mxu0 0
      %548 = vmatprep.subr.bf16.mxu0 0
      %549 = vmatpush1.bf16.msra.mxu0 0
      %550 = vmatprep.subr.bf16.mxu0 0
      %551 = vmatpush1.bf16.msra.mxu0 0
      %552 = vmatprep.subr.bf16.mxu0 0
      %553 = vmatpush1.bf16.msra.mxu0 0
      %554 = vmatprep.subr.bf16.mxu0 0
      %555 = vmatpush1.bf16.msra.mxu0 0
      %556 = vmatprep.subr.bf16.mxu0 0
      %557 = vmatpush1.bf16.msra.mxu0 0
      %558 = vmatprep.mubr.bf16.mxu0 0
      %559 = vmatmul.mubr.bf16.gmra.mrb[0].mxu0 %v524
      %v560 = vpop.f32.mrb[0].mxu0
      %v561 = vadd.f32 0.0, %v560
      %v562 = vpop.f32.mrb[0].mxu0
      %v563 = vpop.f32.mrb[0].mxu0
      %v564 = vadd.f32 0.0, %v563
      %v565 = vpop.f32.mrb[0].mxu0
      %566 = vdwg.mxu0
      %v567 = vadd.f32 %v494, %v561
      %v568 = vadd.f32 %v495, %v564
      %s569 = scalar_lea.vmem %s2, 64
      %v570 = vld [vmem:[%s569] sm:$0xf]
      %v571 = vld [vmem:[%s569 + $0x4] sm:$0xf]
      %v572 = vld [vmem:[%s569 + $0x8] sm:$0xf]
      %v573 = vld [vmem:[%s569 + $0xc] sm:$0xf]
      %vm574 = vcmask 1045504
      %v575 = vrot.slane %v289, 2
      %v576 = vrot.slane %v294, 2
      %v577 = vsel %vm574, %v575, %v576
      %v582 = vunpack.c.l.b16 %v570
      %v583 = vunpack.c.l.b16 %v571
      %v584 = vunpack.c.l.b16 %v572
      %v585 = vunpack.c.l.b16 %v573
      %v586 = vpack.c.b16 %v583, %v582
      %v587 = vpack.c.b16 %v585, %v584
      %v591 = vsel %vm329, %v577, 0
      %593 = vmatprep.subr.bf16.mxu0 0
      %594 = vmatpush1.bf16.msra.mxu0 %v586
      %595 = vmatprep.subr.bf16.mxu0 0
      %596 = vmatpush1.bf16.msra.mxu0 %v587
      %597 = vmatprep.subr.bf16.mxu0 0
      %598 = vmatpush1.bf16.msra.mxu0 0
      %599 = vmatprep.subr.bf16.mxu0 0
      %600 = vmatpush1.bf16.msra.mxu0 0
      %601 = vmatprep.subr.bf16.mxu0 0
      %602 = vmatpush1.bf16.msra.mxu0 0
      %603 = vmatprep.subr.bf16.mxu0 0
      %604 = vmatpush1.bf16.msra.mxu0 0
      %605 = vmatprep.subr.bf16.mxu0 0
      %606 = vmatpush1.bf16.msra.mxu0 0
      %607 = vmatprep.subr.bf16.mxu0 0
      %608 = vmatpush1.bf16.msra.mxu0 0
      %609 = vmatprep.subr.bf16.mxu0 0
      %610 = vmatpush1.bf16.msra.mxu0 0
      %611 = vmatprep.subr.bf16.mxu0 0
      %612 = vmatpush1.bf16.msra.mxu0 0
      %613 = vmatprep.subr.bf16.mxu0 0
      %614 = vmatpush1.bf16.msra.mxu0 0
      %615 = vmatprep.subr.bf16.mxu0 0
      %616 = vmatpush1.bf16.msra.mxu0 0
      %617 = vmatprep.subr.bf16.mxu0 0
      %618 = vmatpush1.bf16.msra.mxu0 0
      %619 = vmatprep.subr.bf16.mxu0 0
      %620 = vmatpush1.bf16.msra.mxu0 0
      %621 = vmatprep.subr.bf16.mxu0 0
      %622 = vmatpush1.bf16.msra.mxu0 0
      %623 = vmatprep.subr.bf16.mxu0 0
      %624 = vmatpush1.bf16.msra.mxu0 0
      %625 = vmatprep.mubr.bf16.mxu0 0
      %626 = vmatmul.mubr.bf16.gmra.mrb[0].mxu0 %v591
      %v627 = vpop.f32.mrb[0].mxu0
      %v628 = vadd.f32 0.0, %v627
      %v629 = vpop.f32.mrb[0].mxu0
      %v630 = vpop.f32.mrb[0].mxu0
      %v631 = vadd.f32 0.0, %v630
      %v632 = vpop.f32.mrb[0].mxu0
      %633 = vdwg.mxu0
      %v634 = vadd.f32 %v567, %v628
      %v635 = vadd.f32 %v568, %v631
      %v636 = vld [vmem:[%s3] sm:$0x1]
      %v638 = vlaneseq
      %v639 = vshrl.u32 %v638, 7
      %v640 = vsub.s32 0, %v639
      %v641 = vrot.slane %v636, %v640
      %v643 = vadd.f32 %v634, %v641
      %v644 = vadd.f32 %v635, %v641
      %v645 = vmul.f32 %v643, 0.5
      %v646 = vmul.f32 %v644, 0.5
      %v647 = vmul.f32 %v643, 0.70710677
      %v648 = vmul.f32 %v644, 0.70710677
      %v649 = verf.f32.pop %v647
      %v650 = verf.f32.pop %v648
      %v651 = vadd.f32 %v649, 1.0
      %v652 = vadd.f32 %v650, 1.0
      %v653 = vmul.f32 %v645, %v651
      %v654 = vmul.f32 %v646, %v652
      %v655 = vpack.c.bf16 %v654, %v653
      %v657 = vunpack.c.l.b16 %v655
      %v658 = vunpack.c.h.b16 %v655
      %v659 = vpack.c.b16 %v657, %v657
      %v660 = vpack.c.b16 %v658, %v658
      %vm663 = vcmask 257024
      %664 = vst.msk [vmem:[%s278] sm:$0xf] %vm663, %v659
      %665 = vst.msk [vmem:[%s278 + $0x4] sm:$0xf] %vm663, %v660
      %s666 = smul.u32 2, %s20
      %p667 = scmp.lt.s32.totalorder %s19, 1
      %s668 = scalar_select %p667, %s19, 1
      %p669 = scmp.lt.s32.totalorder %s666, 1
      %s670 = scalar_select %p669, %s666, 1
      %s671 = smul.addr %s668, 2
      %s672 = sadd.s32 %s670, %s671
      %s673 = smul.addr %s672, 4
      %s674 = scalar_lea.vmem %s4, %s673
      // Predicated region
      $region37: #{inception_block_forward.9} parent=35 // pred_check
        %p675 = pneg %p147
      $region38: #{inception_block_forward.9} parent=35 // pred_check_branch
        %677 = sbr.rel (%p675) target = $region40
      $region39: #{inception_block_forward.9} parent=35 // pred_region
        %s678 = smul.u32 2, %s20
      $region40: #{inception_block_forward.9} parent=35 // pred_fallthru
        _
    $region36: #{inception_block_forward.9} parent=5 // pred_fallthru
      _
    %p679 = scmp.le.s32.totalorder 2, %s10
    // Predicated region
    $region41: #{inception_block_forward.9} parent=5 // pred_check
      %p680 = pneg %p679
    $region42: #{inception_block_forward.9} parent=5 // pred_check_branch
      %682 = sbr.rel (%p680) target = $region44
    $region43: #{inception_block_forward.9} parent=5 // pred_region
      %s683 = ssub.s32 %s10, 2
      // Predicated region
      $region45: #{inception_block_forward.9} parent=43 // pred_check
        %p684 = pneg %p153
      $region46: #{inception_block_forward.9} parent=43 // pred_check_branch
        %686 = sbr.rel (%p684) target = $region48
      $region47: #{inception_block_forward.9} parent=43 // pred_region
        %s687 = smul.u32 2, %s22
        %p688 = scmp.lt.s32.totalorder %s21, 1
        %s689 = scalar_select %p688, %s21, 1
        %p690 = scmp.lt.s32.totalorder %s687, 1
        %s691 = scalar_select %p690, %s687, 1
        %s692 = smul.addr %s689, 2
        %s693 = sadd.s32 %s691, %s692
        %s694 = smul.addr %s693, 4
        %s695 = scalar_lea.vmem %s4, %s694
      $region48: #{inception_block_forward.9} parent=43 // pred_fallthru
        _
    $region44: #{inception_block_forward.9} parent=5 // pred_fallthru
      _
  $region6: #{inception_block_forward.9} parent=0 // loop_footer
    %s14 = sadd.s32 1, %s10
  $region7: #{inception_block_forward.9} parent=0 // loop_footer_branch
    %9 = sbr.rel target = $region3
  $region8: #{inception_block_forward.9} parent=0 // loop_exit
    _

// kernel: inception_block_forward.7
$region0: #{inception_block_forward.7}
  #allocation0 [shape = 'u32[]', space=smem, size = 0x4, offset = 0x4, fixed_abs, tag = 'smem constant byte address 0x4 - core index']
  #allocation1 [shape = 'u32[144,128]{1,0:T(1,128)}', space=vmem, size = 0x12000, scoped, tag = 'internal scratch']
  %s0 = inlined_call_operand.vmem [shape: bf16[2,32,32], index: 0, kind: input, shape index: {}, may-alias: {0,1}]
  %s1 = inlined_call_operand.vmem [shape: bf16[2,32,32], index: 1, kind: input, shape index: {}, may-alias: {0,1}]
  %s2 = inlined_call_operand.vmem [shape: bf16[3,32,32], index: 2, kind: input, shape index: {}]
  %s3 = inlined_call_operand.vmem [shape: f32[1,32], index: 3, kind: input, shape index: {}]
  %s4 = inlined_call_operand.vmem [shape: bf16[2,16,32], index: 4, kind: output, shape index: {}]
  %s5 = sld [smem:[#allocation0]]
  $region49: #{inception_block_forward.7} parent=0
    _
  %s7 = ssub.s32 1, %s5
  %s8 = scalar_select 0, %s7, %s5
  loop: start=0, step=1, limit=4
  $region2: #{inception_block_forward.7} parent=0 // loop_pre_header
    _
  $region3: #{inception_block_forward.7} parent=0 // loop_header
    %s10 = sphi 0, %s14
    %p11 = scmp.ge.s32.totalorder %s10, 4
    %s17 = sphi 0, %s29
    %s18 = sphi 0, %s25
    %s19 = sphi 0, %s17
    %s20 = sphi 0, %s18
    %s21 = sphi 0, %s19
    %s22 = sphi 0, %s20
    %s34 = sphi 0, %s36
    %s37 = sphi 0, %s34
    %s38 = sphi 0, %s37
    %s54 = sphi 0, %s38
    %s64 = sphi 0, %s66
    %s67 = sphi 0, %s64
    %s68 = sphi 0, %s67
    %s84 = sphi 0, %s68
    %s88 = sphi 0, %s88
    %s90 = sphi 0, %s88
    %s91 = sphi 0, %s90
    %s105 = sphi 0, %s91
    %s109 = sphi 0, %s109
    %s111 = sphi 0, %s109
    %s112 = sphi 0, %s111
    %s126 = sphi 0, %s112
    %s134 = sphi 0, %s136
    %s137 = sphi 0, %s134
    %s138 = sphi 0, %s137
    %s154 = sphi 0, %s138
  $region4: #{inception_block_forward.7} parent=0 // loop_header_branch
    %13 = sbr.rel (%p11) target = $region8
  $region5: #{inception_block_forward.7} parent=0 // loop_body
    %s15 = ssub.s32 %s10, 1
    %s16 = ssub.s32 %s10, 2
    %s23 = sadd.s32 1, %s18
    %p24 = scmp.ge.s32.totalorder %s23, 1
    %s25 = scalar_select %p24, 0, %s23
    %s26 = sadd.s32 1, %s17
    %s27 = scalar_select %p24, %s26, %s17
    %p28 = scmp.ge.s32.totalorder %s27, 2
    %s29 = scalar_select %p28, 0, %s27
    %s30 = ssub.s32 %s17, %s29
    %s31 = ssub.s32 %s18, %s25
    %s32 = sor.u32 %s30, %s31
    %p33 = scmp.eq.s32.totalorder %s32, 0
    %s35 = sadd.s32 %s34, 1
    %s36 = scalar_select %p33, %s34, %s35
    %p39 = pneg %p33
    %p40 = scmp.eq.s32.totalorder %s10, 1
    %p41 = por %p39, %p40
    %p42 = scmp.ne.s32.totalorder %s34, %s37
    %p43 = scmp.eq.s32.totalorder %s10, 0
    %p44 = por %p42, %p43
    %p45 = scmp.ne.s32.totalorder %s34, %s37
    %p46 = scmp.eq.s32.totalorder %s15, 1
    %p47 = por %p45, %p46
    %p48 = scmp.ne.s32.totalorder %s37, %s38
    %p49 = scmp.eq.s32.totalorder %s15, 0
    %p50 = por %p48, %p49
    %p51 = scmp.ne.s32.totalorder %s37, %s38
    %p52 = scmp.eq.s32.totalorder %s16, 1
    %p53 = por %p51, %p52
    %p55 = scmp.ne.s32.totalorder %s38, %s54
    %p56 = scmp.eq.s32.totalorder %s16, 0
    %p57 = por %p55, %p56
    %s58 = sadd.s32 %s18, 1
    %s59 = sadd.s32 %s25, 1
    %s60 = ssub.s32 %s17, %s29
    %s61 = ssub.s32 %s58, %s59
    %s62 = sor.u32 %s60, %s61
    %p63 = scmp.eq.s32.totalorder %s62, 0
    %s65 = sadd.s32 %s64, 1
    %s66 = scalar_select %p63, %s64, %s65
    %p69 = pneg %p63
    %p70 = scmp.eq.s32.totalorder %s10, 1
    %p71 = por %p69, %p70
    %p72 = scmp.ne.s32.totalorder %s64, %s67
    %p73 = scmp.eq.s32.totalorder %s10, 0
    %p74 = por %p72, %p73
    %p75 = scmp.ne.s32.totalorder %s64, %s67
    %p76 = scmp.eq.s32.totalorder %s15, 1
    %p77 = por %p75, %p76
    %p78 = scmp.ne.s32.totalorder %s67, %s68
    %p79 = scmp.eq.s32.totalorder %s15, 0
    %p80 = por %p78, %p79
    %p81 = scmp.ne.s32.totalorder %s67, %s68
    %p82 = scmp.eq.s32.totalorder %s16, 1
    %p83 = por %p81, %p82
    %p85 = scmp.ne.s32.totalorder %s68, %s84
    %p86 = scmp.eq.s32.totalorder %s16, 0
    %p87 = por %p85, %p86
    %s89 = sadd.s32 %s88, 1
    %p92 = scmp.eq.s32.totalorder %s10, 1
    %p93 = scmp.ne.s32.totalorder %s88, %s90
    %p94 = scmp.eq.s32.totalorder %s10, 0
    %p95 = por %p93, %p94
    %p96 = scmp.ne.s32.totalorder %s88, %s90
    %p97 = scmp.eq.s32.totalorder %s15, 1
    %p98 = por %p96, %p97
    %p99 = scmp.ne.s32.totalorder %s90, %s91
    %p100 = scmp.eq.s32.totalorder %s15, 0
    %p101 = por %p99, %p100
    %p102 = scmp.ne.s32.totalorder %s90, %s91
    %p103 = scmp.eq.s32.totalorder %s16, 1
    %p104 = por %p102, %p103
    %p106 = scmp.ne.s32.totalorder %s91, %s105
    %p107 = scmp.eq.s32.totalorder %s16, 0
    %p108 = por %p106, %p107
    %s110 = sadd.s32 %s109, 1
    %p113 = scmp.eq.s32.totalorder %s10, 1
    %p114 = scmp.ne.s32.totalorder %s109, %s111
    %p115 = scmp.eq.s32.totalorder %s10, 0
    %p116 = por %p114, %p115
    %p117 = scmp.ne.s32.totalorder %s109, %s111
    %p118 = scmp.eq.s32.totalorder %s15, 1
    %p119 = por %p117, %p118
    %p120 = scmp.ne.s32.totalorder %s111, %s112
    %p121 = scmp.eq.s32.totalorder %s15, 0
    %p122 = por %p120, %p121
    %p123 = scmp.ne.s32.totalorder %s111, %s112
    %p124 = scmp.eq.s32.totalorder %s16, 1
    %p125 = por %p123, %p124
    %p127 = scmp.ne.s32.totalorder %s112, %s126
    %p128 = scmp.eq.s32.totalorder %s16, 0
    %p129 = por %p127, %p128
    %s130 = ssub.s32 %s17, %s29
    %s131 = ssub.s32 %s18, %s25
    %s132 = sor.u32 %s130, %s131
    %p133 = scmp.eq.s32.totalorder %s132, 0
    %s135 = sadd.s32 %s134, 1
    %s136 = scalar_select %p133, %s134, %s135
    %p139 = pneg %p133
    %p140 = scmp.eq.s32.totalorder %s10, 1
    %p141 = por %p139, %p140
    %p142 = scmp.ne.s32.totalorder %s134, %s137
    %p143 = scmp.eq.s32.totalorder %s10, 0
    %p144 = por %p142, %p143
    %p145 = scmp.ne.s32.totalorder %s134, %s137
    %p146 = scmp.eq.s32.totalorder %s15, 1
    %p147 = por %p145, %p146
    %p148 = scmp.ne.s32.totalorder %s137, %s138
    %p149 = scmp.eq.s32.totalorder %s15, 0
    %p150 = por %p148, %p149
    %p151 = scmp.ne.s32.totalorder %s137, %s138
    %p152 = scmp.eq.s32.totalorder %s16, 1
    %p153 = por %p151, %p152
    %p155 = scmp.ne.s32.totalorder %s138, %s154
    %p156 = scmp.eq.s32.totalorder %s16, 0
    %p157 = por %p155, %p156
    %p158 = scmp.le.s32.totalorder 1, %s10
    %p159 = scmp.lt.s32.totalorder %s10, 3
    %p160 = pnand %p158, %p159
    %p161 = pneg %p160
    // Predicated region
    $region9: #{inception_block_forward.7} parent=5 // pred_check
      _
    $region10: #{inception_block_forward.7} parent=5 // pred_check_branch
      %163 = sbr.rel (%p160) target = $region12
    $region11: #{inception_block_forward.7} parent=5 // pred_region
      %s164 = ssub.s32 %s10, 1
      // Predicated region
      $region13: #{inception_block_forward.7} parent=11 // pred_check
        %p165 = pneg %p101
      $region14: #{inception_block_forward.7} parent=11 // pred_check_branch
        %167 = sbr.rel (%p165) target = $region16
      $region15: #{inception_block_forward.7} parent=11 // pred_region
        _
      $region16: #{inception_block_forward.7} parent=11 // pred_fallthru
        _
      // Predicated region
      $region17: #{inception_block_forward.7} parent=11 // pred_check
        %p168 = pneg %p122
      $region18: #{inception_block_forward.7} parent=11 // pred_check_branch
        %170 = sbr.rel (%p168) target = $region20
      $region19: #{inception_block_forward.7} parent=11 // pred_region
        _
      $region20: #{inception_block_forward.7} parent=11 // pred_fallthru
        _
    $region12: #{inception_block_forward.7} parent=5 // pred_fallthru
      _
    %p171 = scmp.lt.s32.totalorder %s10, 2
    // Predicated region
    $region21: #{inception_block_forward.7} parent=5 // pred_check
      %p172 = pneg %p171
    $region22: #{inception_block_forward.7} parent=5 // pred_check_branch
      %174 = sbr.rel (%p172) target = $region24
    $region23: #{inception_block_forward.7} parent=5 // pred_region
      // Predicated region
      $region25: #{inception_block_forward.7} parent=23 // pred_check
        %p175 = pneg %p44
      $region26: #{inception_block_forward.7} parent=23 // pred_check_branch
        %177 = sbr.rel (%p175) target = $region28
      $region27: #{inception_block_forward.7} parent=23 // pred_region
        %s178 = smul.u32 2, %s18
        %p179 = scmp.lt.s32.totalorder %s17, 1
        %s180 = scalar_select %p179, %s17, 1
        %p181 = scmp.lt.s32.totalorder %s178, 3
        %s182 = scalar_select %p181, %s178, 3
        %s183 = smul.addr %s180, 4
        %s184 = sadd.s32 %s182, %s183
        %s185 = smul.addr %s184, 4
        %s186 = scalar_lea.vmem %s0, %s185
        %s187 = smul.u32 2, %s18
      $region28: #{inception_block_forward.7} parent=23 // pred_fallthru
        _
      // Predicated region
      $region29: #{inception_block_forward.7} parent=23 // pred_check
        %p188 = pneg %p74
      $region30: #{inception_block_forward.7} parent=23 // pred_check_branch
        %190 = sbr.rel (%p188) target = $region32
      $region31: #{inception_block_forward.7} parent=23 // pred_region
        %s191 = sadd.s32 %s18, 1
        %s192 = smul.u32 2, %s191
        %p193 = scmp.lt.s32.totalorder %s17, 1
        %s194 = scalar_select %p193, %s17, 1
        %p195 = scmp.lt.s32.totalorder %s192, 3
        %s196 = scalar_select %p195, %s192, 3
        %s197 = smul.addr %s194, 4
        %s198 = sadd.s32 %s196, %s197
        %s199 = smul.addr %s198, 4
        %s200 = scalar_lea.vmem %s1, %s199
        %s201 = sadd.s32 %s18, 1
        %s202 = smul.u32 2, %s201
      $region32: #{inception_block_forward.7} parent=23 // pred_fallthru
        _
    $region24: #{inception_block_forward.7} parent=5 // pred_fallthru
      _
    %p203 = scmp.le.s32.totalorder 1, %s10
    %p204 = scmp.lt.s32.totalorder %s10, 3
    %p205 = pnand %p203, %p204
    %p206 = pneg %p205
    // Predicated region
    $region33: #{inception_block_forward.7} parent=5 // pred_check
      _
    $region34: #{inception_block_forward.7} parent=5 // pred_check_branch
      %208 = sbr.rel (%p205) target = $region36
    $region35: #{inception_block_forward.7} parent=5 // pred_region
      %s209 = ssub.s32 %s10, 1
      %s210 = smul.u32 2, %s20
      %p211 = scmp.lt.s32.totalorder %s19, 1
      %s212 = scalar_select %p211, %s19, 1
      %p213 = scmp.lt.s32.totalorder %s210, 3
      %s214 = scalar_select %p213, %s210, 3
      %s215 = smul.addr %s212, 4
      %s216 = sadd.s32 %s214, %s215
      %s217 = smul.addr %s216, 4
      %s218 = scalar_lea.vmem %s0, %s217
      %p219 = pneg %p50
      %p220 = pneg %p47
      %s221 = sadd.s32 %s20, 1
      %s222 = smul.u32 2, %s221
      %p223 = scmp.lt.s32.totalorder %s19, 1
      %s224 = scalar_select %p223, %s19, 1
      %p225 = scmp.lt.s32.totalorder %s222, 3
      %s226 = scalar_select %p225, %s222, 3
      %s227 = smul.addr %s224, 4
      %s228 = sadd.s32 %s226, %s227
      %s229 = smul.addr %s228, 4
      %s230 = scalar_lea.vmem %s1, %s229
      %p231 = pneg %p80
      %p232 = pneg %p77
      %p233 = pneg %p101
      %p234 = pneg %p98
      %p235 = pneg %p122
      %p236 = pneg %p119
      %p237 = pneg %p150
      %p238 = pneg %p147
      %s239 = smul.u32 2, %s20
      %p240 = scmp.lt.s32.totalorder %s19, 1
      %s241 = scalar_select %p240, %s19, 1
      %p242 = scmp.lt.s32.totalorder %s239, 1
      %s243 = scalar_select %p242, %s239, 1
      %s244 = smul.addr %s241, 2
      %s245 = sadd.s32 %s243, %s244
      %s246 = smul.addr %s245, 4
      %s247 = scalar_lea.vmem %s4, %s246
      %s248 = smul.u32 2, %s20
      %p249 = scmp.lt.s32.totalorder %s19, 1
      %s250 = scalar_select %p249, %s19, 1
      %p251 = scmp.lt.s32.totalorder %s248, 3
      %s252 = scalar_select %p251, %s248, 3
      %s253 = smul.addr %s250, 4
      %s254 = sadd.s32 %s252, %s253
      %s255 = smul.addr %s254, 4
      %s256 = scalar_lea.vmem %s0, %s255
      %s257 = smul.u32 2, %s20
      %s258 = sadd.s32 %s20, 1
      %s259 = smul.u32 2, %s258
      %p260 = scmp.lt.s32.totalorder %s19, 1
      %s261 = scalar_select %p260, %s19, 1
      %p262 = scmp.lt.s32.totalorder %s259, 3
      %s263 = scalar_select %p262, %s259, 3
      %s264 = smul.addr %s261, 4
      %s265 = sadd.s32 %s263, %s264
      %s266 = smul.addr %s265, 4
      %s267 = scalar_lea.vmem %s1, %s266
      %s268 = sadd.s32 %s20, 1
      %s269 = smul.u32 2, %s268
      %s270 = smul.u32 2, %s20
      %p271 = scmp.lt.s32.totalorder %s19, 1
      %s272 = scalar_select %p271, %s19, 1
      %p273 = scmp.lt.s32.totalorder %s270, 1
      %s274 = scalar_select %p273, %s270, 1
      %s275 = smul.addr %s272, 2
      %s276 = sadd.s32 %s274, %s275
      %s277 = smul.addr %s276, 4
      %s278 = scalar_lea.vmem %s4, %s277
      %s279 = smul.u32 2, %s20
      %v281 = vld [vmem:[%s256] sm:$0xf]
      %v282 = vld [vmem:[%s256 + $0x4] sm:$0xf]
      %v283 = vld [vmem:[%s267] sm:$0xf]
      %v284 = vld [vmem:[%s267 + $0x4] sm:$0xf]
      %v287 = vunpack.c.l.b16 %v281
      %v288 = vunpack.c.l.b16 %v282
      %v289 = vpack.c.b16 %v288, %v287
      %v292 = vunpack.c.l.b16 %v283
      %v293 = vunpack.c.l.b16 %v284
      %v294 = vpack.c.b16 %v293, %v292
      %v295 = vld [vmem:[%s2] sm:$0xf]
      %v296 = vld [vmem:[%s2 + $0x4] sm:$0xf]
      %v297 = vld [vmem:[%s2 + $0x8] sm:$0xf]
      %v298 = vld [vmem:[%s2 + $0xc] sm:$0xf]
      %s299 = scalar_lea.vmem %s2, 16
      %v300 = vld [vmem:[%s299] sm:$0xf]
      %v301 = vld [vmem:[%s299 + $0x4] sm:$0xf]
      %v302 = vld [vmem:[%s299 + $0x8] sm:$0xf]
      %v303 = vld [vmem:[%s299 + $0xc] sm:$0xf]
      %vm304 = vsmask.f32 7424
      %v306 = vshrl.u32 %v289, 16
      %v308 = vshll.u32 %v289, 16
      %v310 = vrot.slane %v308, 1
      %v311 = vor.u32 %v306, %v310
      %v313 = vshll.u32 %v294, 16
      %v315 = vrot.slane %v313, 1
      %v316 = vsel %vm304, %v311, %v315
      %v321 = vunpack.c.l.b16 %v300
      %v322 = vunpack.c.l.b16 %v301
      %v323 = vunpack.c.l.b16 %v302
      %v324 = vunpack.c.l.b16 %v303
      %v325 = vpack.c.b16 %v322, %v321
      %v326 = vpack.c.b16 %v324, %v323
      %vm329 = vcmask 261120
      %v331 = vsel %vm329, %v316, 0
      %333 = vmatprep.subr.bf16.mxu0 0
      %334 = vmatpush1.bf16.msra.mxu0 %v325
      %335 = vmatprep.subr.bf16.mxu0 0
      %336 = vmatpush1.bf16.msra.mxu0 %v326
      %337 = vmatprep.subr.bf16.mxu0 0
      %338 = vmatpush1.bf16.msra.mxu0 0
      %339 = vmatprep.subr.bf16.mxu0 0
      %340 = vmatpush1.bf16.msra.mxu0 0
      %341 = vmatprep.subr.bf16.mxu0 0
      %342 = vmatpush1.bf16.msra.mxu0 0
      %343 = vmatprep.subr.bf16.mxu0 0
      %344 = vmatpush1.bf16.msra.mxu0 0
      %345 = vmatprep.subr.bf16.mxu0 0
      %346 = vmatpush1.bf16.msra.mxu0 0
      %347 = vmatprep.subr.bf16.mxu0 0
      %348 = vmatpush1.bf16.msra.mxu0 0
      %349 = vmatprep.subr.bf16.mxu0 0
      %350 = vmatpush1.bf16.msra.mxu0 0
      %351 = vmatprep.subr.bf16.mxu0 0
      %352 = vmatpush1.bf16.msra.mxu0 0
      %353 = vmatprep.subr.bf16.mxu0 0
      %354 = vmatpush1.bf16.msra.mxu0 0
      %355 = vmatprep.subr.bf16.mxu0 0
      %356 = vmatpush1.bf16.msra.mxu0 0
      %357 = vmatprep.subr.bf16.mxu0 0
      %358 = vmatpush1.bf16.msra.mxu0 0
      %359 = vmatprep.subr.bf16.mxu0 0
      %360 = vmatpush1.bf16.msra.mxu0 0
      %361 = vmatprep.subr.bf16.mxu0 0
      %362 = vmatpush1.bf16.msra.mxu0 0
      %363 = vmatprep.subr.bf16.mxu0 0
      %364 = vmatpush1.bf16.msra.mxu0 0
      %365 = vmatprep.mubr.bf16.mxu0 0
      %366 = vmatmul.mubr.bf16.gmra.mrb[0].mxu0 %v331
      %v367 = vpop.f32.mrb[0].mxu0
      %v368 = vadd.f32 0.0, %v367
      %v369 = vpop.f32.mrb[0].mxu0
      %v370 = vpop.f32.mrb[0].mxu0
      %v371 = vadd.f32 0.0, %v370
      %v372 = vpop.f32.mrb[0].mxu0
      %373 = vdwg.mxu0
      %v378 = vunpack.c.l.b16 %v295
      %v379 = vunpack.c.l.b16 %v296
      %v380 = vunpack.c.l.b16 %v297
      %v381 = vunpack.c.l.b16 %v298
      %v382 = vpack.c.b16 %v379, %v378
      %v383 = vpack.c.b16 %v381, %v380
      %v386 = vsel %vm329, %v289, 0
      %388 = vmatprep.subr.bf16.mxu0 0
      %389 = vmatpush1.bf16.msra.mxu0 %v382
      %390 = vmatprep.subr.bf16.mxu0 0
      %391 = vmatpush1.bf16.msra.mxu0 %v383
      %392 = vmatprep.subr.bf16.mxu0 0
      %393 = vmatpush1.bf16.msra.mxu0 0
      %394 = vmatprep.subr.bf16.mxu0 0
      %395 = vmatpush1.bf16.msra.mxu0 0
      %396 = vmatprep.subr.bf16.mxu0 0
      %397 = vmatpush1.bf16.msra.mxu0 0
      %398 = vmatprep.subr.bf16.mxu0 0
      %399 = vmatpush1.bf16.msra.mxu0 0
      %400 = vmatprep.subr.bf16.mxu0 0
      %401 = vmatpush1.bf16.msra.mxu0 0
      %402 = vmatprep.subr.bf16.mxu0 0
      %403 = vmatpush1.bf16.msra.mxu0 0
      %404 = vmatprep.subr.bf16.mxu0 0
      %405 = vmatpush1.bf16.msra.mxu0 0
      %406 = vmatprep.subr.bf16.mxu0 0
      %407 = vmatpush1.bf16.msra.mxu0 0
      %408 = vmatprep.subr.bf16.mxu0 0
      %409 = vmatpush1.bf16.msra.mxu0 0
      %410 = vmatprep.subr.bf16.mxu0 0
      %411 = vmatpush1.bf16.msra.mxu0 0
      %412 = vmatprep.subr.bf16.mxu0 0
      %413 = vmatpush1.bf16.msra.mxu0 0
      %414 = vmatprep.subr.bf16.mxu0 0
      %415 = vmatpush1.bf16.msra.mxu0 0
      %416 = vmatprep.subr.bf16.mxu0 0
      %417 = vmatpush1.bf16.msra.mxu0 0
      %418 = vmatprep.subr.bf16.mxu0 0
      %419 = vmatpush1.bf16.msra.mxu0 0
      %420 = vmatprep.mubr.bf16.mxu0 0
      %421 = vmatmul.mubr.bf16.gmra.mrb[0].mxu0 %v386
      %v422 = vpop.f32.mrb[0].mxu0
      %v423 = vadd.f32 %v368, %v422
      %v424 = vpop.f32.mrb[0].mxu0
      %v425 = vpop.f32.mrb[0].mxu0
      %v426 = vadd.f32 %v371, %v425
      %v427 = vpop.f32.mrb[0].mxu0
      %428 = vdwg.mxu0
      %s429 = scalar_lea.vmem %s2, 32
      %v430 = vld [vmem:[%s429] sm:$0xf]
      %v431 = vld [vmem:[%s429 + $0x4] sm:$0xf]
      %v432 = vld [vmem:[%s429 + $0x8] sm:$0xf]
      %v433 = vld [vmem:[%s429 + $0xc] sm:$0xf]
      %vm434 = vcmask 1046528
      %v435 = vrot.slane %v289, 1
      %v436 = vrot.slane %v294, 1
      %v437 = vsel %vm434, %v435, %v436
      %v442 = vunpack.c.l.b16 %v430
      %v443 = vunpack.c.l.b16 %v431
      %v444 = vunpack.c.l.b16 %v432
      %v445 = vunpack.c.l.b16 %v433
      %v446 = vpack.c.b16 %v443, %v442
      %v447 = vpack.c.b16 %v445, %v444
      %v451 = vsel %vm329, %v437, 0
      %453 = vmatprep.subr.bf16.mxu0 0
      %454 = vmatpush1.bf16.msra.mxu0 %v446
      %455 = vmatprep.subr.bf16.mxu0 0
      %456 = vmatpush1.bf16.msra.mxu0 %v447
      %457 = vmatprep.subr.bf16.mxu0 0
      %458 = vmatpush1.bf16.msra.mxu0 0
      %459 = vmatprep.subr.bf16.mxu0 0
      %460 = vmatpush1.bf16.msra.mxu0 0
      %461 = vmatprep.subr.bf16.mxu0 0
      %462 = vmatpush1.bf16.msra.mxu0 0
      %463 = vmatprep.subr.bf16.mxu0 0
      %464 = vmatpush1.bf16.msra.mxu0 0
      %465 = vmatprep.subr.bf16.mxu0 0
      %466 = vmatpush1.bf16.msra.mxu0 0
      %467 = vmatprep.subr.bf16.mxu0 0
      %468 = vmatpush1.bf16.msra.mxu0 0
      %469 = vmatprep.subr.bf16.mxu0 0
      %470 = vmatpush1.bf16.msra.mxu0 0
      %471 = vmatprep.subr.bf16.mxu0 0
      %472 = vmatpush1.bf16.msra.mxu0 0
      %473 = vmatprep.subr.bf16.mxu0 0
      %474 = vmatpush1.bf16.msra.mxu0 0
      %475 = vmatprep.subr.bf16.mxu0 0
      %476 = vmatpush1.bf16.msra.mxu0 0
      %477 = vmatprep.subr.bf16.mxu0 0
      %478 = vmatpush1.bf16.msra.mxu0 0
      %479 = vmatprep.subr.bf16.mxu0 0
      %480 = vmatpush1.bf16.msra.mxu0 0
      %481 = vmatprep.subr.bf16.mxu0 0
      %482 = vmatpush1.bf16.msra.mxu0 0
      %483 = vmatprep.subr.bf16.mxu0 0
      %484 = vmatpush1.bf16.msra.mxu0 0
      %485 = vmatprep.mubr.bf16.mxu0 0
      %486 = vmatmul.mubr.bf16.gmra.mrb[0].mxu0 %v451
      %v487 = vpop.f32.mrb[0].mxu0
      %v488 = vadd.f32 0.0, %v487
      %v489 = vpop.f32.mrb[0].mxu0
      %v490 = vpop.f32.mrb[0].mxu0
      %v491 = vadd.f32 0.0, %v490
      %v492 = vpop.f32.mrb[0].mxu0
      %493 = vdwg.mxu0
      %v494 = vadd.f32 %v423, %v488
      %v495 = vadd.f32 %v426, %v491
      %v496 = vld [vmem:[%s3] sm:$0x1]
      %v498 = vlaneseq
      %v499 = vshrl.u32 %v498, 7
      %v500 = vsub.s32 0, %v499
      %v501 = vrot.slane %v496, %v500
      %v503 = vadd.f32 %v494, %v501
      %v504 = vadd.f32 %v495, %v501
      %v505 = vmul.f32 %v503, 0.5
      %v506 = vmul.f32 %v504, 0.5
      %v507 = vmul.f32 %v503, 0.70710677
      %v508 = vmul.f32 %v504, 0.70710677
      %v509 = verf.f32.pop %v507
      %v510 = verf.f32.pop %v508
      %v511 = vadd.f32 %v509, 1.0
      %v512 = vadd.f32 %v510, 1.0
      %v513 = vmul.f32 %v505, %v511
      %v514 = vmul.f32 %v506, %v512
      %v515 = vpack.c.bf16 %v514, %v513
      %v517 = vunpack.c.l.b16 %v515
      %v518 = vunpack.c.h.b16 %v515
      %v519 = vpack.c.b16 %v517, %v517
      %v520 = vpack.c.b16 %v518, %v518
      %vm523 = vcmask 257024
      %524 = vst.msk [vmem:[%s278] sm:$0xf] %vm523, %v519
      %525 = vst.msk [vmem:[%s278 + $0x4] sm:$0xf] %vm523, %v520
      %s526 = smul.u32 2, %s20
      %p527 = scmp.lt.s32.totalorder %s19, 1
      %s528 = scalar_select %p527, %s19, 1
      %p529 = scmp.lt.s32.totalorder %s526, 1
      %s530 = scalar_select %p529, %s526, 1
      %s531 = smul.addr %s528, 2
      %s532 = sadd.s32 %s530, %s531
      %s533 = smul.addr %s532, 4
      %s534 = scalar_lea.vmem %s4, %s533
      // Predicated region
      $region37: #{inception_block_forward.7} parent=35 // pred_check
        %p535 = pneg %p147
      $region38: #{inception_block_forward.7} parent=35 // pred_check_branch
        %537 = sbr.rel (%p535) target = $region40
      $region39: #{inception_block_forward.7} parent=35 // pred_region
        %s538 = smul.u32 2, %s20
      $region40: #{inception_block_forward.7} parent=35 // pred_fallthru
        _
    $region36: #{inception_block_forward.7} parent=5 // pred_fallthru
      _
    %p539 = scmp.le.s32.totalorder 2, %s10
    // Predicated region
    $region41: #{inception_block_forward.7} parent=5 // pred_check
      %p540 = pneg %p539
    $region42: #{inception_block_forward.7} parent=5 // pred_check_branch
      %542 = sbr.rel (%p540) target = $region44
    $region43: #{inception_block_forward.7} parent=5 // pred_region
      %s543 = ssub.s32 %s10, 2
      // Predicated region
      $region45: #{inception_block_forward.7} parent=43 // pred_check
        %p544 = pneg %p153
      $region46: #{inception_block_forward.7} parent=43 // pred_check_branch
        %546 = sbr.rel (%p544) target = $region48
      $region47: #{inception_block_forward.7} parent=43 // pred_region
        %s547 = smul.u32 2, %s22
        %p548 = scmp.lt.s32.totalorder %s21, 1
        %s549 = scalar_select %p548, %s21, 1
        %p550 = scmp.lt.s32.totalorder %s547, 1
        %s551 = scalar_select %p550, %s547, 1
        %s552 = smul.addr %s549, 2
        %s553 = sadd.s32 %s551, %s552
        %s554 = smul.addr %s553, 4
        %s555 = scalar_lea.vmem %s4, %s554
      $region48: #{inception_block_forward.7} parent=43 // pred_fallthru
        _
    $region44: #{inception_block_forward.7} parent=5 // pred_fallthru
      _
  $region6: #{inception_block_forward.7} parent=0 // loop_footer
    %s14 = sadd.s32 1, %s10
  $region7: #{inception_block_forward.7} parent=0 // loop_footer_branch
    %9 = sbr.rel target = $region3
  $region8: #{inception_block_forward.7} parent=0 // loop_exit
    _

// kernel: inception_block_forward.10
$region0: #{inception_block_forward.10}
  #allocation0 [shape = 'u32[]', space=smem, size = 0x4, offset = 0x4, fixed_abs, tag = 'smem constant byte address 0x4 - core index']
  #allocation1 [shape = 'u32[144,128]{1,0:T(1,128)}', space=vmem, size = 0x12000, scoped, tag = 'internal scratch']
  %s0 = inlined_call_operand.vmem [shape: bf16[2,32,8], index: 0, kind: input, shape index: {}, may-alias: {0,1}]
  %s1 = inlined_call_operand.vmem [shape: bf16[2,32,8], index: 1, kind: input, shape index: {}, may-alias: {0,1}]
  %s2 = inlined_call_operand.vmem [shape: bf16[8,32], index: 2, kind: input, shape index: {}]
  %s3 = inlined_call_operand.vmem [shape: f32[1,32], index: 3, kind: input, shape index: {}]
  %s4 = inlined_call_operand.vmem [shape: bf16[2,16,32], index: 4, kind: output, shape index: {}]
  %s5 = sld [smem:[#allocation0]]
  $region49: #{inception_block_forward.10} parent=0
    _
  %s7 = ssub.s32 1, %s5
  %s8 = scalar_select 0, %s7, %s5
  loop: start=0, step=1, limit=4
  $region2: #{inception_block_forward.10} parent=0 // loop_pre_header
    _
  $region3: #{inception_block_forward.10} parent=0 // loop_header
    %s10 = sphi 0, %s14
    %p11 = scmp.ge.s32.totalorder %s10, 4
    %s17 = sphi 0, %s29
    %s18 = sphi 0, %s25
    %s19 = sphi 0, %s17
    %s20 = sphi 0, %s18
    %s21 = sphi 0, %s19
    %s22 = sphi 0, %s20
    %s34 = sphi 0, %s36
    %s37 = sphi 0, %s34
    %s38 = sphi 0, %s37
    %s54 = sphi 0, %s38
    %s64 = sphi 0, %s66
    %s67 = sphi 0, %s64
    %s68 = sphi 0, %s67
    %s84 = sphi 0, %s68
    %s88 = sphi 0, %s88
    %s90 = sphi 0, %s88
    %s91 = sphi 0, %s90
    %s105 = sphi 0, %s91
    %s109 = sphi 0, %s109
    %s111 = sphi 0, %s109
    %s112 = sphi 0, %s111
    %s126 = sphi 0, %s112
    %s134 = sphi 0, %s136
    %s137 = sphi 0, %s134
    %s138 = sphi 0, %s137
    %s154 = sphi 0, %s138
  $region4: #{inception_block_forward.10} parent=0 // loop_header_branch
    %13 = sbr.rel (%p11) target = $region8
  $region5: #{inception_block_forward.10} parent=0 // loop_body
    %s15 = ssub.s32 %s10, 1
    %s16 = ssub.s32 %s10, 2
    %s23 = sadd.s32 1, %s18
    %p24 = scmp.ge.s32.totalorder %s23, 1
    %s25 = scalar_select %p24, 0, %s23
    %s26 = sadd.s32 1, %s17
    %s27 = scalar_select %p24, %s26, %s17
    %p28 = scmp.ge.s32.totalorder %s27, 2
    %s29 = scalar_select %p28, 0, %s27
    %s30 = ssub.s32 %s17, %s29
    %s31 = ssub.s32 %s18, %s25
    %s32 = sor.u32 %s30, %s31
    %p33 = scmp.eq.s32.totalorder %s32, 0
    %s35 = sadd.s32 %s34, 1
    %s36 = scalar_select %p33, %s34, %s35
    %p39 = pneg %p33
    %p40 = scmp.eq.s32.totalorder %s10, 1
    %p41 = por %p39, %p40
    %p42 = scmp.ne.s32.totalorder %s34, %s37
    %p43 = scmp.eq.s32.totalorder %s10, 0
    %p44 = por %p42, %p43
    %p45 = scmp.ne.s32.totalorder %s34, %s37
    %p46 = scmp.eq.s32.totalorder %s15, 1
    %p47 = por %p45, %p46
    %p48 = scmp.ne.s32.totalorder %s37, %s38
    %p49 = scmp.eq.s32.totalorder %s15, 0
    %p50 = por %p48, %p49
    %p51 = scmp.ne.s32.totalorder %s37, %s38
    %p52 = scmp.eq.s32.totalorder %s16, 1
    %p53 = por %p51, %p52
    %p55 = scmp.ne.s32.totalorder %s38, %s54
    %p56 = scmp.eq.s32.totalorder %s16, 0
    %p57 = por %p55, %p56
    %s58 = sadd.s32 %s18, 1
    %s59 = sadd.s32 %s25, 1
    %s60 = ssub.s32 %s17, %s29
    %s61 = ssub.s32 %s58, %s59
    %s62 = sor.u32 %s60, %s61
    %p63 = scmp.eq.s32.totalorder %s62, 0
    %s65 = sadd.s32 %s64, 1
    %s66 = scalar_select %p63, %s64, %s65
    %p69 = pneg %p63
    %p70 = scmp.eq.s32.totalorder %s10, 1
    %p71 = por %p69, %p70
    %p72 = scmp.ne.s32.totalorder %s64, %s67
    %p73 = scmp.eq.s32.totalorder %s10, 0
    %p74 = por %p72, %p73
    %p75 = scmp.ne.s32.totalorder %s64, %s67
    %p76 = scmp.eq.s32.totalorder %s15, 1
    %p77 = por %p75, %p76
    %p78 = scmp.ne.s32.totalorder %s67, %s68
    %p79 = scmp.eq.s32.totalorder %s15, 0
    %p80 = por %p78, %p79
    %p81 = scmp.ne.s32.totalorder %s67, %s68
    %p82 = scmp.eq.s32.totalorder %s16, 1
    %p83 = por %p81, %p82
    %p85 = scmp.ne.s32.totalorder %s68, %s84
    %p86 = scmp.eq.s32.totalorder %s16, 0
    %p87 = por %p85, %p86
    %s89 = sadd.s32 %s88, 1
    %p92 = scmp.eq.s32.totalorder %s10, 1
    %p93 = scmp.ne.s32.totalorder %s88, %s90
    %p94 = scmp.eq.s32.totalorder %s10, 0
    %p95 = por %p93, %p94
    %p96 = scmp.ne.s32.totalorder %s88, %s90
    %p97 = scmp.eq.s32.totalorder %s15, 1
    %p98 = por %p96, %p97
    %p99 = scmp.ne.s32.totalorder %s90, %s91
    %p100 = scmp.eq.s32.totalorder %s15, 0
    %p101 = por %p99, %p100
    %p102 = scmp.ne.s32.totalorder %s90, %s91
    %p103 = scmp.eq.s32.totalorder %s16, 1
    %p104 = por %p102, %p103
    %p106 = scmp.ne.s32.totalorder %s91, %s105
    %p107 = scmp.eq.s32.totalorder %s16, 0
    %p108 = por %p106, %p107
    %s110 = sadd.s32 %s109, 1
    %p113 = scmp.eq.s32.totalorder %s10, 1
    %p114 = scmp.ne.s32.totalorder %s109, %s111
    %p115 = scmp.eq.s32.totalorder %s10, 0
    %p116 = por %p114, %p115
    %p117 = scmp.ne.s32.totalorder %s109, %s111
    %p118 = scmp.eq.s32.totalorder %s15, 1
    %p119 = por %p117, %p118
    %p120 = scmp.ne.s32.totalorder %s111, %s112
    %p121 = scmp.eq.s32.totalorder %s15, 0
    %p122 = por %p120, %p121
    %p123 = scmp.ne.s32.totalorder %s111, %s112
    %p124 = scmp.eq.s32.totalorder %s16, 1
    %p125 = por %p123, %p124
    %p127 = scmp.ne.s32.totalorder %s112, %s126
    %p128 = scmp.eq.s32.totalorder %s16, 0
    %p129 = por %p127, %p128
    %s130 = ssub.s32 %s17, %s29
    %s131 = ssub.s32 %s18, %s25
    %s132 = sor.u32 %s130, %s131
    %p133 = scmp.eq.s32.totalorder %s132, 0
    %s135 = sadd.s32 %s134, 1
    %s136 = scalar_select %p133, %s134, %s135
    %p139 = pneg %p133
    %p140 = scmp.eq.s32.totalorder %s10, 1
    %p141 = por %p139, %p140
    %p142 = scmp.ne.s32.totalorder %s134, %s137
    %p143 = scmp.eq.s32.totalorder %s10, 0
    %p144 = por %p142, %p143
    %p145 = scmp.ne.s32.totalorder %s134, %s137
    %p146 = scmp.eq.s32.totalorder %s15, 1
    %p147 = por %p145, %p146
    %p148 = scmp.ne.s32.totalorder %s137, %s138
    %p149 = scmp.eq.s32.totalorder %s15, 0
    %p150 = por %p148, %p149
    %p151 = scmp.ne.s32.totalorder %s137, %s138
    %p152 = scmp.eq.s32.totalorder %s16, 1
    %p153 = por %p151, %p152
    %p155 = scmp.ne.s32.totalorder %s138, %s154
    %p156 = scmp.eq.s32.totalorder %s16, 0
    %p157 = por %p155, %p156
    %p158 = scmp.le.s32.totalorder 1, %s10
    %p159 = scmp.lt.s32.totalorder %s10, 3
    %p160 = pnand %p158, %p159
    %p161 = pneg %p160
    // Predicated region
    $region9: #{inception_block_forward.10} parent=5 // pred_check
      _
    $region10: #{inception_block_forward.10} parent=5 // pred_check_branch
      %163 = sbr.rel (%p160) target = $region12
    $region11: #{inception_block_forward.10} parent=5 // pred_region
      %s164 = ssub.s32 %s10, 1
      // Predicated region
      $region13: #{inception_block_forward.10} parent=11 // pred_check
        %p165 = pneg %p101
      $region14: #{inception_block_forward.10} parent=11 // pred_check_branch
        %167 = sbr.rel (%p165) target = $region16
      $region15: #{inception_block_forward.10} parent=11 // pred_region
        _
      $region16: #{inception_block_forward.10} parent=11 // pred_fallthru
        _
      // Predicated region
      $region17: #{inception_block_forward.10} parent=11 // pred_check
        %p168 = pneg %p122
      $region18: #{inception_block_forward.10} parent=11 // pred_check_branch
        %170 = sbr.rel (%p168) target = $region20
      $region19: #{inception_block_forward.10} parent=11 // pred_region
        _
      $region20: #{inception_block_forward.10} parent=11 // pred_fallthru
        _
    $region12: #{inception_block_forward.10} parent=5 // pred_fallthru
      _
    %p171 = scmp.lt.s32.totalorder %s10, 2
    // Predicated region
    $region21: #{inception_block_forward.10} parent=5 // pred_check
      %p172 = pneg %p171
    $region22: #{inception_block_forward.10} parent=5 // pred_check_branch
      %174 = sbr.rel (%p172) target = $region24
    $region23: #{inception_block_forward.10} parent=5 // pred_region
      // Predicated region
      $region25: #{inception_block_forward.10} parent=23 // pred_check
        %p175 = pneg %p44
      $region26: #{inception_block_forward.10} parent=23 // pred_check_branch
        %177 = sbr.rel (%p175) target = $region28
      $region27: #{inception_block_forward.10} parent=23 // pred_region
        %s178 = smul.u32 2, %s18
        %p179 = scmp.lt.s32.totalorder %s17, 1
        %s180 = scalar_select %p179, %s17, 1
        %p181 = scmp.lt.s32.totalorder %s178, 3
        %s182 = scalar_select %p181, %s178, 3
        %s183 = smul.addr %s180, 4
        %s184 = sadd.s32 %s182, %s183
        %s185 = smul.addr %s184, 4
        %s186 = scalar_lea.vmem %s0, %s185
        %s187 = smul.u32 2, %s18
      $region28: #{inception_block_forward.10} parent=23 // pred_fallthru
        _
      // Predicated region
      $region29: #{inception_block_forward.10} parent=23 // pred_check
        %p188 = pneg %p74
      $region30: #{inception_block_forward.10} parent=23 // pred_check_branch
        %190 = sbr.rel (%p188) target = $region32
      $region31: #{inception_block_forward.10} parent=23 // pred_region
        %s191 = sadd.s32 %s18, 1
        %s192 = smul.u32 2, %s191
        %p193 = scmp.lt.s32.totalorder %s17, 1
        %s194 = scalar_select %p193, %s17, 1
        %p195 = scmp.lt.s32.totalorder %s192, 3
        %s196 = scalar_select %p195, %s192, 3
        %s197 = smul.addr %s194, 4
        %s198 = sadd.s32 %s196, %s197
        %s199 = smul.addr %s198, 4
        %s200 = scalar_lea.vmem %s1, %s199
        %s201 = sadd.s32 %s18, 1
        %s202 = smul.u32 2, %s201
      $region32: #{inception_block_forward.10} parent=23 // pred_fallthru
        _
    $region24: #{inception_block_forward.10} parent=5 // pred_fallthru
      _
    %p203 = scmp.le.s32.totalorder 1, %s10
    %p204 = scmp.lt.s32.totalorder %s10, 3
    %p205 = pnand %p203, %p204
    %p206 = pneg %p205
    // Predicated region
    $region33: #{inception_block_forward.10} parent=5 // pred_check
      _
    $region34: #{inception_block_forward.10} parent=5 // pred_check_branch
      %208 = sbr.rel (%p205) target = $region36
    $region35: #{inception_block_forward.10} parent=5 // pred_region
      %s209 = ssub.s32 %s10, 1
      %s210 = smul.u32 2, %s20
      %p211 = scmp.lt.s32.totalorder %s19, 1
      %s212 = scalar_select %p211, %s19, 1
      %p213 = scmp.lt.s32.totalorder %s210, 3
      %s214 = scalar_select %p213, %s210, 3
      %s215 = smul.addr %s212, 4
      %s216 = sadd.s32 %s214, %s215
      %s217 = smul.addr %s216, 4
      %s218 = scalar_lea.vmem %s0, %s217
      %p219 = pneg %p50
      %p220 = pneg %p47
      %s221 = sadd.s32 %s20, 1
      %s222 = smul.u32 2, %s221
      %p223 = scmp.lt.s32.totalorder %s19, 1
      %s224 = scalar_select %p223, %s19, 1
      %p225 = scmp.lt.s32.totalorder %s222, 3
      %s226 = scalar_select %p225, %s222, 3
      %s227 = smul.addr %s224, 4
      %s228 = sadd.s32 %s226, %s227
      %s229 = smul.addr %s228, 4
      %s230 = scalar_lea.vmem %s1, %s229
      %p231 = pneg %p80
      %p232 = pneg %p77
      %p233 = pneg %p101
      %p234 = pneg %p98
      %p235 = pneg %p122
      %p236 = pneg %p119
      %p237 = pneg %p150
      %p238 = pneg %p147
      %s239 = smul.u32 2, %s20
      %p240 = scmp.lt.s32.totalorder %s19, 1
      %s241 = scalar_select %p240, %s19, 1
      %p242 = scmp.lt.s32.totalorder %s239, 1
      %s243 = scalar_select %p242, %s239, 1
      %s244 = smul.addr %s241, 2
      %s245 = sadd.s32 %s243, %s244
      %s246 = smul.addr %s245, 4
      %s247 = scalar_lea.vmem %s4, %s246
      %s248 = smul.u32 2, %s20
      %p249 = scmp.lt.s32.totalorder %s19, 1
      %s250 = scalar_select %p249, %s19, 1
      %p251 = scmp.lt.s32.totalorder %s248, 3
      %s252 = scalar_select %p251, %s248, 3
      %s253 = smul.addr %s250, 4
      %s254 = sadd.s32 %s252, %s253
      %s255 = smul.addr %s254, 4
      %s256 = scalar_lea.vmem %s0, %s255
      %s257 = smul.u32 2, %s20
      %s258 = sadd.s32 %s20, 1
      %s259 = smul.u32 2, %s258
      %p260 = scmp.lt.s32.totalorder %s19, 1
      %s261 = scalar_select %p260, %s19, 1
      %p262 = scmp.lt.s32.totalorder %s259, 3
      %s263 = scalar_select %p262, %s259, 3
      %s264 = smul.addr %s261, 4
      %s265 = sadd.s32 %s263, %s264
      %s266 = smul.addr %s265, 4
      %s267 = scalar_lea.vmem %s1, %s266
      %s268 = sadd.s32 %s20, 1
      %s269 = smul.u32 2, %s268
      %s270 = smul.u32 2, %s20
      %p271 = scmp.lt.s32.totalorder %s19, 1
      %s272 = scalar_select %p271, %s19, 1
      %p273 = scmp.lt.s32.totalorder %s270, 1
      %s274 = scalar_select %p273, %s270, 1
      %s275 = smul.addr %s272, 2
      %s276 = sadd.s32 %s274, %s275
      %s277 = smul.addr %s276, 4
      %s278 = scalar_lea.vmem %s4, %s277
      %s279 = smul.u32 2, %s20
      %v281 = vld [vmem:[%s256] sm:$0xf]
      %v282 = vld [vmem:[%s256 + $0x4] sm:$0xf]
      %v283 = vld [vmem:[%s267] sm:$0xf]
      %v284 = vld [vmem:[%s267 + $0x4] sm:$0xf]
      %v287 = vunpack.c.l.b16 %v281
      %v288 = vunpack.c.l.b16 %v282
      %v289 = vpack.c.b16 %v288, %v287
      %v293 = vunpack.c.l.b16 %v283
      %v294 = vunpack.c.l.b16 %v284
      %v295 = vpack.c.b16 %v294, %v293
      %vm296 = vsmask.f32 7424
      %v298 = vshrl.u32 %v289, 16
      %v300 = vshll.u32 %v289, 16
      %v302 = vrot.slane %v300, 1
      %v303 = vor.u32 %v298, %v302
      %v305 = vshll.u32 %v295, 16
      %v307 = vrot.slane %v305, 1
      %v308 = vsel %vm296, %v303, %v307
      %v310 = vmax.bf16 %v289, %v308
      %vm311 = vcmask 1046528
      %v312 = vrot.slane %v289, 1
      %v313 = vrot.slane %v295, 1
      %v314 = vsel %vm311, %v312, %v313
      %v316 = vmax.bf16 %v310, %v314
      %v317 = vunpack.c.l.bf16 %v316
      %v318 = vunpack.c.h.bf16 %v316
      %v319 = vmul.f32 %v317, 0.5
      %v320 = vmul.f32 %v318, 0.5
      %v321 = vmul.f32 %v317, 0.70710677
      %v322 = vmul.f32 %v318, 0.70710677
      %v323 = verf.f32.pop %v321
      %v324 = verf.f32.pop %v322
      %v325 = vadd.f32 %v323, 1.0
      %v326 = vadd.f32 %v324, 1.0
      %v327 = vmul.f32 %v319, %v325
      %v328 = vmul.f32 %v320, %v326
      %v329 = vpack.c.bf16 %v328, %v327
      %v330 = vld [vmem:[%s2] sm:$0xf]
      %v331 = vld [vmem:[%s3] sm:$0x1]
      %v333 = vlaneseq
      %v334 = vshrl.u32 %v333, 7
      %v335 = vsub.s32 0, %v334
      %v336 = vrot.slane %v331, %v335
      %vm338 = vcmask 64512
      %v340 = vsel %vm338, %v329, 0
      %vm342 = vcmask 1043456
      %v344 = vsel %vm342, %v330, 0
      %346 = vmatprep.subr.bf16.mxu0 0
      %347 = vmatpush1.bf16.msra.mxu0 %v344
      %348 = vmatprep.subr.bf16.mxu0 0
      %349 = vmatpush1.bf16.msra.mxu0 0
      %350 = vmatprep.subr.bf16.mxu0 0
      %351 = vmatpush1.bf16.msra.mxu0 0
      %352 = vmatprep.subr.bf16.mxu0 0
      %353 = vmatpush1.bf16.msra.mxu0 0
      %354 = vmatprep.subr.bf16.mxu0 0
      %355 = vmatpush1.bf16.msra.mxu0 0
      %356 = vmatprep.subr.bf16.mxu0 0
      %357 = vmatpush1.bf16.msra.mxu0 0
      %358 = vmatprep.subr.bf16.mxu0 0
      %359 = vmatpush1.bf16.msra.mxu0 0
      %360 = vmatprep.subr.bf16.mxu0 0
      %361 = vmatpush1.bf16.msra.mxu0 0
      %362 = vmatprep.subr.bf16.mxu0 0
      %363 = vmatpush1.bf16.msra.mxu0 0
      %364 = vmatprep.subr.bf16.mxu0 0
      %365 = vmatpush1.bf16.msra.mxu0 0
      %366 = vmatprep.subr.bf16.mxu0 0
      %367 = vmatpush1.bf16.msra.mxu0 0
      %368 = vmatprep.subr.bf16.mxu0 0
      %369 = vmatpush1.bf16.msra.mxu0 0
      %370 = vmatprep.subr.bf16.mxu0 0
      %371 = vmatpush1.bf16.msra.mxu0 0
      %372 = vmatprep.subr.bf16.mxu0 0
      %373 = vmatpush1.bf16.msra.mxu0 0
      %374 = vmatprep.subr.bf16.mxu0 0
      %375 = vmatpush1.bf16.msra.mxu0 0
      %376 = vmatprep.subr.bf16.mxu0 0
      %377 = vmatpush1.bf16.msra.mxu0 0
      %378 = vmatprep.mubr.bf16.mxu0 0
      %379 = vmatmul.mubr.bf16.gmra.mrb[0].mxu0 %v340
      %v380 = vpop.f32.mrb[0].mxu0
      %v381 = vadd.f32 %v336, %v380
      %v382 = vpop.f32.mrb[0].mxu0
      %v383 = vpop.f32.mrb[0].mxu0
      %v384 = vadd.f32 %v336, %v383
      %v385 = vpop.f32.mrb[0].mxu0
      %386 = vdwg.mxu0
      %v387 = vpack.c.bf16 %v384, %v381
      %v389 = vunpack.c.l.b16 %v387
      %v390 = vunpack.c.h.b16 %v387
      %v391 = vpack.c.b16 %v389, %v389
      %v392 = vpack.c.b16 %v390, %v390
      %vm395 = vcmask 257024
      %396 = vst.msk [vmem:[%s278] sm:$0xf] %vm395, %v391
      %397 = vst.msk [vmem:[%s278 + $0x4] sm:$0xf] %vm395, %v392
      %s398 = smul.u32 2, %s20
      %p399 = scmp.lt.s32.totalorder %s19, 1
      %s400 = scalar_select %p399, %s19, 1
      %p401 = scmp.lt.s32.totalorder %s398, 1
      %s402 = scalar_select %p401, %s398, 1
      %s403 = smul.addr %s400, 2
      %s404 = sadd.s32 %s402, %s403
      %s405 = smul.addr %s404, 4
      %s406 = scalar_lea.vmem %s4, %s405
      // Predicated region
      $region37: #{inception_block_forward.10} parent=35 // pred_check
        %p407 = pneg %p147
      $region38: #{inception_block_forward.10} parent=35 // pred_check_branch
        %409 = sbr.rel (%p407) target = $region40
      $region39: #{inception_block_forward.10} parent=35 // pred_region
        %s410 = smul.u32 2, %s20
      $region40: #{inception_block_forward.10} parent=35 // pred_fallthru
        _
    $region36: #{inception_block_forward.10} parent=5 // pred_fallthru
      _
    %p411 = scmp.le.s32.totalorder 2, %s10
    // Predicated region
    $region41: #{inception_block_forward.10} parent=5 // pred_check
      %p412 = pneg %p411
    $region42: #{inception_block_forward.10} parent=5 // pred_check_branch
      %414 = sbr.rel (%p412) target = $region44
    $region43: #{inception_block_forward.10} parent=5 // pred_region
      %s415 = ssub.s32 %s10, 2
      // Predicated region
      $region45: #{inception_block_forward.10} parent=43 // pred_check
        %p416 = pneg %p153
      $region46: #{inception_block_forward.10} parent=43 // pred_check_branch
        %418 = sbr.rel (%p416) target = $region48
      $region47: #{inception_block_forward.10} parent=43 // pred_region
        %s419 = smul.u32 2, %s22
        %p420 = scmp.lt.s32.totalorder %s21, 1
        %s421 = scalar_select %p420, %s21, 1
        %p422 = scmp.lt.s32.totalorder %s419, 1
        %s423 = scalar_select %p422, %s419, 1
        %s424 = smul.addr %s421, 2
        %s425 = sadd.s32 %s423, %s424
        %s426 = smul.addr %s425, 4
        %s427 = scalar_lea.vmem %s4, %s426
      $region48: #{inception_block_forward.10} parent=43 // pred_fallthru
        _
    $region44: #{inception_block_forward.10} parent=5 // pred_fallthru
      _
  $region6: #{inception_block_forward.10} parent=0 // loop_footer
    %s14 = sadd.s32 1, %s10
  $region7: #{inception_block_forward.10} parent=0 // loop_footer_branch
    %9 = sbr.rel target = $region3
  $region8: #{inception_block_forward.10} parent=0 // loop_exit
    _

// kernel: inception_block_forward.11
$region0: #{inception_block_forward.11}
  #allocation0 [shape = 'u32[]', space=smem, size = 0x4, offset = 0x4, fixed_abs, tag = 'smem constant byte address 0x4 - core index']
  #allocation1 [shape = 'u32[144,128]{1,0:T(1,128)}', space=vmem, size = 0x12000, scoped, tag = 'internal scratch']
  %s0 = inlined_call_operand.vmem [shape: bf16[2,32,96], index: 0, kind: input, shape index: {}, may-alias: {0,1}]
  %s1 = inlined_call_operand.vmem [shape: bf16[2,32,96], index: 1, kind: input, shape index: {}, may-alias: {0,1}]
  %s2 = inlined_call_operand.vmem [shape: bf16[3,96,8], index: 2, kind: input, shape index: {}]
  %s3 = inlined_call_operand.vmem [shape: f32[1,8], index: 3, kind: input, shape index: {}]
  %s4 = inlined_call_operand.vmem [shape: f32[2,16,8], index: 4, kind: input, shape index: {}]
  %s5 = inlined_call_operand.vmem [shape: f32[2,16,8], index: 5, kind: output, shape index: {}]
  %s6 = sld [smem:[#allocation0]]
  $region53: #{inception_block_forward.11} parent=0
    _
  %s8 = ssub.s32 1, %s6
  %s9 = scalar_select 0, %s8, %s6
  loop: start=0, step=1, limit=4
  $region2: #{inception_block_forward.11} parent=0 // loop_pre_header
    _
  $region3: #{inception_block_forward.11} parent=0 // loop_header
    %s11 = sphi 0, %s15
    %p12 = scmp.ge.s32.totalorder %s11, 4
    %s18 = sphi 0, %s30
    %s19 = sphi 0, %s26
    %s20 = sphi 0, %s18
    %s21 = sphi 0, %s19
    %s22 = sphi 0, %s20
    %s23 = sphi 0, %s21
    %s35 = sphi 0, %s37
    %s38 = sphi 0, %s35
    %s39 = sphi 0, %s38
    %s55 = sphi 0, %s39
    %s65 = sphi 0, %s67
    %s68 = sphi 0, %s65
    %s69 = sphi 0, %s68
    %s85 = sphi 0, %s69
    %s89 = sphi 0, %s89
    %s91 = sphi 0, %s89
    %s92 = sphi 0, %s91
    %s106 = sphi 0, %s92
    %s110 = sphi 0, %s110
    %s112 = sphi 0, %s110
    %s113 = sphi 0, %s112
    %s127 = sphi 0, %s113
    %s135 = sphi 0, %s137
    %s138 = sphi 0, %s135
    %s139 = sphi 0, %s138
    %s155 = sphi 0, %s139
    %s163 = sphi 0, %s165
    %s166 = sphi 0, %s163
    %s167 = sphi 0, %s166
    %s183 = sphi 0, %s167
  $region4: #{inception_block_forward.11} parent=0 // loop_header_branch
    %14 = sbr.rel (%p12) target = $region8
  $region5: #{inception_block_forward.11} parent=0 // loop_body
    %s16 = ssub.s32 %s11, 1
    %s17 = ssub.s32 %s11, 2
    %s24 = sadd.s32 1, %s19
    %p25 = scmp.ge.s32.totalorder %s24, 1
    %s26 = scalar_select %p25, 0, %s24
    %s27 = sadd.s32 1, %s18
    %s28 = scalar_select %p25, %s27, %s18
    %p29 = scmp.ge.s32.totalorder %s28, 2
    %s30 = scalar_select %p29, 0, %s28
    %s31 = ssub.s32 %s18, %s30
    %s32 = ssub.s32 %s19, %s26
    %s33 = sor.u32 %s31, %s32
    %p34 = scmp.eq.s32.totalorder %s33, 0
    %s36 = sadd.s32 %s35, 1
    %s37 = scalar_select %p34, %s35, %s36
    %p40 = pneg %p34
    %p41 = scmp.eq.s32.totalorder %s11, 1
    %p42 = por %p40, %p41
    %p43 = scmp.ne.s32.totalorder %s35, %s38
    %p44 = scmp.eq.s32.totalorder %s11, 0
    %p45 = por %p43, %p44
    %p46 = scmp.ne.s32.totalorder %s35, %s38
    %p47 = scmp.eq.s32.totalorder %s16, 1
    %p48 = por %p46, %p47
    %p49 = scmp.ne.s32.totalorder %s38, %s39
    %p50 = scmp.eq.s32.totalorder %s16, 0
    %p51 = por %p49, %p50
    %p52 = scmp.ne.s32.totalorder %s38, %s39
    %p53 = scmp.eq.s32.totalorder %s17, 1
    %p54 = por %p52, %p53
    %p56 = scmp.ne.s32.totalorder %s39, %s55
    %p57 = scmp.eq.s32.totalorder %s17, 0
    %p58 = por %p56, %p57
    %s59 = sadd.s32 %s19, 1
    %s60 = sadd.s32 %s26, 1
    %s61 = ssub.s32 %s18, %s30
    %s62 = ssub.s32 %s59, %s60
    %s63 = sor.u32 %s61, %s62
    %p64 = scmp.eq.s32.totalorder %s63, 0
    %s66 = sadd.s32 %s65, 1
    %s67 = scalar_select %p64, %s65, %s66
    %p70 = pneg %p64
    %p71 = scmp.eq.s32.totalorder %s11, 1
    %p72 = por %p70, %p71
    %p73 = scmp.ne.s32.totalorder %s65, %s68
    %p74 = scmp.eq.s32.totalorder %s11, 0
    %p75 = por %p73, %p74
    %p76 = scmp.ne.s32.totalorder %s65, %s68
    %p77 = scmp.eq.s32.totalorder %s16, 1
    %p78 = por %p76, %p77
    %p79 = scmp.ne.s32.totalorder %s68, %s69
    %p80 = scmp.eq.s32.totalorder %s16, 0
    %p81 = por %p79, %p80
    %p82 = scmp.ne.s32.totalorder %s68, %s69
    %p83 = scmp.eq.s32.totalorder %s17, 1
    %p84 = por %p82, %p83
    %p86 = scmp.ne.s32.totalorder %s69, %s85
    %p87 = scmp.eq.s32.totalorder %s17, 0
    %p88 = por %p86, %p87
    %s90 = sadd.s32 %s89, 1
    %p93 = scmp.eq.s32.totalorder %s11, 1
    %p94 = scmp.ne.s32.totalorder %s89, %s91
    %p95 = scmp.eq.s32.totalorder %s11, 0
    %p96 = por %p94, %p95
    %p97 = scmp.ne.s32.totalorder %s89, %s91
    %p98 = scmp.eq.s32.totalorder %s16, 1
    %p99 = por %p97, %p98
    %p100 = scmp.ne.s32.totalorder %s91, %s92
    %p101 = scmp.eq.s32.totalorder %s16, 0
    %p102 = por %p100, %p101
    %p103 = scmp.ne.s32.totalorder %s91, %s92
    %p104 = scmp.eq.s32.totalorder %s17, 1
    %p105 = por %p103, %p104
    %p107 = scmp.ne.s32.totalorder %s92, %s106
    %p108 = scmp.eq.s32.totalorder %s17, 0
    %p109 = por %p107, %p108
    %s111 = sadd.s32 %s110, 1
    %p114 = scmp.eq.s32.totalorder %s11, 1
    %p115 = scmp.ne.s32.totalorder %s110, %s112
    %p116 = scmp.eq.s32.totalorder %s11, 0
    %p117 = por %p115, %p116
    %p118 = scmp.ne.s32.totalorder %s110, %s112
    %p119 = scmp.eq.s32.totalorder %s16, 1
    %p120 = por %p118, %p119
    %p121 = scmp.ne.s32.totalorder %s112, %s113
    %p122 = scmp.eq.s32.totalorder %s16, 0
    %p123 = por %p121, %p122
    %p124 = scmp.ne.s32.totalorder %s112, %s113
    %p125 = scmp.eq.s32.totalorder %s17, 1
    %p126 = por %p124, %p125
    %p128 = scmp.ne.s32.totalorder %s113, %s127
    %p129 = scmp.eq.s32.totalorder %s17, 0
    %p130 = por %p128, %p129
    %s131 = ssub.s32 %s18, %s30
    %s132 = ssub.s32 %s19, %s26
    %s133 = sor.u32 %s131, %s132
    %p134 = scmp.eq.s32.totalorder %s133, 0
    %s136 = sadd.s32 %s135, 1
    %s137 = scalar_select %p134, %s135, %s136
    %p140 = pneg %p134
    %p141 = scmp.eq.s32.totalorder %s11, 1
    %p142 = por %p140, %p141
    %p143 = scmp.ne.s32.totalorder %s135, %s138
    %p144 = scmp.eq.s32.totalorder %s11, 0
    %p145 = por %p143, %p144
    %p146 = scmp.ne.s32.totalorder %s135, %s138
    %p147 = scmp.eq.s32.totalorder %s16, 1
    %p148 = por %p146, %p147
    %p149 = scmp.ne.s32.totalorder %s138, %s139
    %p150 = scmp.eq.s32.totalorder %s16, 0
    %p151 = por %p149, %p150
    %p152 = scmp.ne.s32.totalorder %s138, %s139
    %p153 = scmp.eq.s32.totalorder %s17, 1
    %p154 = por %p152, %p153
    %p156 = scmp.ne.s32.totalorder %s139, %s155
    %p157 = scmp.eq.s32.totalorder %s17, 0
    %p158 = por %p156, %p157
    %s159 = ssub.s32 %s18, %s30
    %s160 = ssub.s32 %s19, %s26
    %s161 = sor.u32 %s159, %s160
    %p162 = scmp.eq.s32.totalorder %s161, 0
    %s164 = sadd.s32 %s163, 1
    %s165 = scalar_select %p162, %s163, %s164
    %p168 = pneg %p162
    %p169 = scmp.eq.s32.totalorder %s11, 1
    %p170 = por %p168, %p169
    %p171 = scmp.ne.s32.totalorder %s163, %s166
    %p172 = scmp.eq.s32.totalorder %s11, 0
    %p173 = por %p171, %p172
    %p174 = scmp.ne.s32.totalorder %s163, %s166
    %p175 = scmp.eq.s32.totalorder %s16, 1
    %p176 = por %p174, %p175
    %p177 = scmp.ne.s32.totalorder %s166, %s167
    %p178 = scmp.eq.s32.totalorder %s16, 0
    %p179 = por %p177, %p178
    %p180 = scmp.ne.s32.totalorder %s166, %s167
    %p181 = scmp.eq.s32.totalorder %s17, 1
    %p182 = por %p180, %p181
    %p184 = scmp.ne.s32.totalorder %s167, %s183
    %p185 = scmp.eq.s32.totalorder %s17, 0
    %p186 = por %p184, %p185
    %p187 = scmp.le.s32.totalorder 1, %s11
    %p188 = scmp.lt.s32.totalorder %s11, 3
    %p189 = pnand %p187, %p188
    %p190 = pneg %p189
    // Predicated region
    $region9: #{inception_block_forward.11} parent=5 // pred_check
      _
    $region10: #{inception_block_forward.11} parent=5 // pred_check_branch
      %192 = sbr.rel (%p189) target = $region12
    $region11: #{inception_block_forward.11} parent=5 // pred_region
      %s193 = ssub.s32 %s11, 1
      // Predicated region
      $region13: #{inception_block_forward.11} parent=11 // pred_check
        %p194 = pneg %p102
      $region14: #{inception_block_forward.11} parent=11 // pred_check_branch
        %196 = sbr.rel (%p194) target = $region16
      $region15: #{inception_block_forward.11} parent=11 // pred_region
        _
      $region16: #{inception_block_forward.11} parent=11 // pred_fallthru
        _
      // Predicated region
      $region17: #{inception_block_forward.11} parent=11 // pred_check
        %p197 = pneg %p123
      $region18: #{inception_block_forward.11} parent=11 // pred_check_branch
        %199 = sbr.rel (%p197) target = $region20
      $region19: #{inception_block_forward.11} parent=11 // pred_region
        _
      $region20: #{inception_block_forward.11} parent=11 // pred_fallthru
        _
    $region12: #{inception_block_forward.11} parent=5 // pred_fallthru
      _
    %p200 = scmp.lt.s32.totalorder %s11, 2
    // Predicated region
    $region21: #{inception_block_forward.11} parent=5 // pred_check
      %p201 = pneg %p200
    $region22: #{inception_block_forward.11} parent=5 // pred_check_branch
      %203 = sbr.rel (%p201) target = $region24
    $region23: #{inception_block_forward.11} parent=5 // pred_region
      // Predicated region
      $region25: #{inception_block_forward.11} parent=23 // pred_check
        %p204 = pneg %p45
      $region26: #{inception_block_forward.11} parent=23 // pred_check_branch
        %206 = sbr.rel (%p204) target = $region28
      $region27: #{inception_block_forward.11} parent=23 // pred_region
        %s207 = smul.u32 2, %s19
        %p208 = scmp.lt.s32.totalorder %s18, 1
        %s209 = scalar_select %p208, %s18, 1
        %p210 = scmp.lt.s32.totalorder %s207, 3
        %s211 = scalar_select %p210, %s207, 3
        %s212 = smul.addr %s209, 4
        %s213 = sadd.s32 %s211, %s212
        %s214 = smul.addr %s213, 4
        %s215 = scalar_lea.vmem %s0, %s214
        %s216 = smul.u32 2, %s19
      $region28: #{inception_block_forward.11} parent=23 // pred_fallthru
        _
      // Predicated region
      $region29: #{inception_block_forward.11} parent=23 // pred_check
        %p217 = pneg %p75
      $region30: #{inception_block_forward.11} parent=23 // pred_check_branch
        %219 = sbr.rel (%p217) target = $region32
      $region31: #{inception_block_forward.11} parent=23 // pred_region
        %s220 = sadd.s32 %s19, 1
        %s221 = smul.u32 2, %s220
        %p222 = scmp.lt.s32.totalorder %s18, 1
        %s223 = scalar_select %p222, %s18, 1
        %p224 = scmp.lt.s32.totalorder %s221, 3
        %s225 = scalar_select %p224, %s221, 3
        %s226 = smul.addr %s223, 4
        %s227 = sadd.s32 %s225, %s226
        %s228 = smul.addr %s227, 4
        %s229 = scalar_lea.vmem %s1, %s228
        %s230 = sadd.s32 %s19, 1
        %s231 = smul.u32 2, %s230
      $region32: #{inception_block_forward.11} parent=23 // pred_fallthru
        _
      // Predicated region
      $region33: #{inception_block_forward.11} parent=23 // pred_check
        %p232 = pneg %p145
      $region34: #{inception_block_forward.11} parent=23 // pred_check_branch
        %234 = sbr.rel (%p232) target = $region36
      $region35: #{inception_block_forward.11} parent=23 // pred_region
        %s235 = smul.u32 2, %s19
        %p236 = scmp.lt.s32.totalorder %s18, 1
        %s237 = scalar_select %p236, %s18, 1
        %p238 = scmp.lt.s32.totalorder %s235, 1
        %s239 = scalar_select %p238, %s235, 1
        %s240 = smul.addr %s237, 2
        %s241 = sadd.s32 %s239, %s240
        %s242 = smul.addr %s241, 8
        %s243 = scalar_lea.vmem %s4, %s242
        %s244 = smul.u32 2, %s19
      $region36: #{inception_block_forward.11} parent=23 // pred_fallthru
        _
    $region24: #{inception_block_forward.11} parent=5 // pred_fallthru
      _
    %p245 = scmp.le.s32.totalorder 1, %s11
    %p246 = scmp.lt.s32.totalorder %s11, 3
    %p247 = pnand %p245, %p246
    %p248 = pneg %p247
    // Predicated region
    $region37: #{inception_block_forward.11} parent=5 // pred_check
      _
    $region38: #{inception_block_forward.11} parent=5 // pred_check_branch
      %250 = sbr.rel (%p247) target = $region40
    $region39: #{inception_block_forward.11} parent=5 // pred_region
      %s251 = ssub.s32 %s11, 1
      %s252 = smul.u32 2, %s21
      %p253 = scmp.lt.s32.totalorder %s20, 1
      %s254 = scalar_select %p253, %s20, 1
      %p255 = scmp.lt.s32.totalorder %s252, 3
      %s256 = scalar_select %p255, %s252, 3
      %s257 = smul.addr %s254, 4
      %s258 = sadd.s32 %s256, %s257
      %s259 = smul.addr %s258, 4
      %s260 = scalar_lea.vmem %s0, %s259
      %p261 = pneg %p51
      %p262 = pneg %p48
      %s263 = sadd.s32 %s21, 1
      %s264 = smul.u32 2, %s263
      %p265 = scmp.lt.s32.totalorder %s20, 1
      %s266 = scalar_select %p265, %s20, 1
      %p267 = scmp.lt.s32.totalorder %s264, 3
      %s268 = scalar_select %p267, %s264, 3
      %s269 = smul.addr %s266, 4
      %s270 = sadd.s32 %s268, %s269
      %s271 = smul.addr %s270, 4
      %s272 = scalar_lea.vmem %s1, %s271
      %p273 = pneg %p81
      %p274 = pneg %p78
      %p275 = pneg %p102
      %p276 = pneg %p99
      %p277 = pneg %p123
      %p278 = pneg %p120
      %s279 = smul.u32 2, %s21
      %p280 = scmp.lt.s32.totalorder %s20, 1
      %s281 = scalar_select %p280, %s20, 1
      %p282 = scmp.lt.s32.totalorder %s279, 1
      %s283 = scalar_select %p282, %s279, 1
      %s284 = smul.addr %s281, 2
      %s285 = sadd.s32 %s283, %s284
      %s286 = smul.addr %s285, 8
      %s287 = scalar_lea.vmem %s4, %s286
      %p288 = pneg %p151
      %p289 = pneg %p148
      %p290 = pneg %p179
      %p291 = pneg %p176
      %s292 = smul.u32 2, %s21
      %p293 = scmp.lt.s32.totalorder %s20, 1
      %s294 = scalar_select %p293, %s20, 1
      %p295 = scmp.lt.s32.totalorder %s292, 1
      %s296 = scalar_select %p295, %s292, 1
      %s297 = smul.addr %s294, 2
      %s298 = sadd.s32 %s296, %s297
      %s299 = smul.addr %s298, 8
      %s300 = scalar_lea.vmem %s5, %s299
      %s301 = smul.u32 2, %s21
      %p302 = scmp.lt.s32.totalorder %s20, 1
      %s303 = scalar_select %p302, %s20, 1
      %p304 = scmp.lt.s32.totalorder %s301, 3
      %s305 = scalar_select %p304, %s301, 3
      %s306 = smul.addr %s303, 4
      %s307 = sadd.s32 %s305, %s306
      %s308 = smul.addr %s307, 4
      %s309 = scalar_lea.vmem %s0, %s308
      %s310 = smul.u32 2, %s21
      %s311 = sadd.s32 %s21, 1
      %s312 = smul.u32 2, %s311
      %p313 = scmp.lt.s32.totalorder %s20, 1
      %s314 = scalar_select %p313, %s20, 1
      %p315 = scmp.lt.s32.totalorder %s312, 3
      %s316 = scalar_select %p315, %s312, 3
      %s317 = smul.addr %s314, 4
      %s318 = sadd.s32 %s316, %s317
      %s319 = smul.addr %s318, 4
      %s320 = scalar_lea.vmem %s1, %s319
      %s321 = sadd.s32 %s21, 1
      %s322 = smul.u32 2, %s321
      %s323 = smul.u32 2, %s21
      %p324 = scmp.lt.s32.totalorder %s20, 1
      %s325 = scalar_select %p324, %s20, 1
      %p326 = scmp.lt.s32.totalorder %s323, 1
      %s327 = scalar_select %p326, %s323, 1
      %s328 = smul.addr %s325, 2
      %s329 = sadd.s32 %s327, %s328
      %s330 = smul.addr %s329, 8
      %s331 = scalar_lea.vmem %s4, %s330
      %s332 = smul.u32 2, %s21
      %s333 = smul.u32 2, %s21
      %p334 = scmp.lt.s32.totalorder %s20, 1
      %s335 = scalar_select %p334, %s20, 1
      %p336 = scmp.lt.s32.totalorder %s333, 1
      %s337 = scalar_select %p336, %s333, 1
      %s338 = smul.addr %s335, 2
      %s339 = sadd.s32 %s337, %s338
      %s340 = smul.addr %s339, 8
      %s341 = scalar_lea.vmem %s5, %s340
      %s342 = smul.u32 2, %s21
      %v344 = vld [vmem:[%s309] sm:$0xf]
      %v345 = vld [vmem:[%s309 + $0x4] sm:$0xf]
      %v346 = vld [vmem:[%s320] sm:$0xf]
      %v347 = vld [vmem:[%s320 + $0x4] sm:$0xf]
      %v350 = vunpack.c.l.b16 %v344
      %v351 = vunpack.c.l.b16 %v345
      %v352 = vpack.c.b16 %v351, %v350
      %v355 = vunpack.c.l.b16 %v346
      %v356 = vunpack.c.l.b16 %v347
      %v357 = vpack.c.b16 %v356, %v355
      %v358 = vld [vmem:[%s2] sm:$0xf]
      %v359 = vld [vmem:[%s2 + $0x4] sm:$0xf]
      %v360 = vld [vmem:[%s2 + $0x8] sm:$0xf]
      %v361 = vld [vmem:[%s2 + $0xc] sm:$0xf]
      %v362 = vld [vmem:[%s2 + $0x10] sm:$0xf]
      %v363 = vld [vmem:[%s2 + $0x14] sm:$0xf]
      %v364 = vld [vmem:[%s2 + $0x18] sm:$0xf]
      %v365 = vld [vmem:[%s2 + $0x1c] sm:$0xf]
      %v366 = vld [vmem:[%s2 + $0x20] sm:$0xf]
      %v367 = vld [vmem:[%s2 + $0x24] sm:$0xf]
      %v368 = vld [vmem:[%s2 + $0x28] sm:$0xf]
      %v369 = vld [vmem:[%s2 + $0x2c] sm:$0xf]
      %s370 = scalar_lea.vmem %s2, 48
      %v371 = vld [vmem:[%s370] sm:$0xf]
      %v372 = vld [vmem:[%s370 + $0x4] sm:$0xf]
      %v373 = vld [vmem:[%s370 + $0x8] sm:$0xf]
      %v374 = vld [vmem:[%s370 + $0xc] sm:$0xf]
      %v375 = vld [vmem:[%s370 + $0x10] sm:$0xf]
      %v376 = vld [vmem:[%s370 + $0x14] sm:$0xf]
      %v377 = vld [vmem:[%s370 + $0x18] sm:$0xf]
      %v378 = vld [vmem:[%s370 + $0x1c] sm:$0xf]
      %v379 = vld [vmem:[%s370 + $0x20] sm:$0xf]
      %v380 = vld [vmem:[%s370 + $0x24] sm:$0xf]
      %v381 = vld [vmem:[%s370 + $0x28] sm:$0xf]
      %v382 = vld [vmem:[%s370 + $0x2c] sm:$0xf]
      %vm383 = vsmask.f32 7424
      %v385 = vshrl.u32 %v352, 16
      %v387 = vshll.u32 %v352, 16
      %v389 = vrot.slane %v387, 1
      %v390 = vor.u32 %v385, %v389
      %v392 = vshll.u32 %v357, 16
      %v394 = vrot.slane %v392, 1
      %v395 = vsel %vm383, %v390, %v394
      %v408 = vunpack.c.l.b16 %v371
      %v409 = vunpack.c.l.b16 %v372
      %v410 = vunpack.c.l.b16 %v373
      %v411 = vunpack.c.l.b16 %v374
      %v412 = vunpack.c.l.b16 %v375
      %v413 = vunpack.c.l.b16 %v376
      %v414 = vunpack.c.l.b16 %v377
      %v415 = vunpack.c.l.b16 %v378
      %v416 = vunpack.c.l.b16 %v379
      %v417 = vunpack.c.l.b16 %v380
      %v418 = vunpack.c.l.b16 %v381
      %v419 = vunpack.c.l.b16 %v382
      %v420 = vpack.c.b16 %v409, %v408
      %v421 = vpack.c.b16 %v411, %v410
      %v422 = vpack.c.b16 %v413, %v412
      %v423 = vpack.c.b16 %v415, %v414
      %v424 = vpack.c.b16 %v417, %v416
      %v425 = vpack.c.b16 %v419, %v418
      %vm432 = vcmask 785408
      %v434 = vsel %vm432, %v395, 0
      %436 = vmatprep.subr.bf16.mxu0 0
      %437 = vmatpush1.bf16.msra.mxu0 %v420
      %438 = vmatprep.subr.bf16.mxu0 0
      %439 = vmatpush1.bf16.msra.mxu0 %v421
      %440 = vmatprep.subr.bf16.mxu0 0
      %441 = vmatpush1.bf16.msra.mxu0 %v422
      %442 = vmatprep.subr.bf16.mxu0 0
      %443 = vmatpush1.bf16.msra.mxu0 %v423
      %444 = vmatprep.subr.bf16.mxu0 0
      %445 = vmatpush1.bf16.msra.mxu0 %v424
      %446 = vmatprep.subr.bf16.mxu0 0
      %447 = vmatpush1.bf16.msra.mxu0 %v425
      %448 = vmatprep.subr.bf16.mxu0 0
      %449 = vmatpush1.bf16.msra.mxu0 0
      %450 = vmatprep.subr.bf16.mxu0 0
      %451 = vmatpush1.bf16.msra.mxu0 0
      %452 = vmatprep.subr.bf16.mxu0 0
      %453 = vmatpush1.bf16.msra.mxu0 0
      %454 = vmatprep.subr.bf16.mxu0 0
      %455 = vmatpush1.bf16.msra.mxu0 0
      %456 = vmatprep.subr.bf16.mxu0 0
      %457 = vmatpush1.bf16.msra.mxu0 0
      %458 = vmatprep.subr.bf16.mxu0 0
      %459 = vmatpush1.bf16.msra.mxu0 0
      %460 = vmatprep.subr.bf16.mxu0 0
      %461 = vmatpush1.bf16.msra.mxu0 0
      %462 = vmatprep.subr.bf16.mxu0 0
      %463 = vmatpush1.bf16.msra.mxu0 0
      %464 = vmatprep.subr.bf16.mxu0 0
      %465 = vmatpush1.bf16.msra.mxu0 0
      %466 = vmatprep.subr.bf16.mxu0 0
      %467 = vmatpush1.bf16.msra.mxu0 0
      %468 = vmatprep.mubr.bf16.mxu0 0
      %469 = vmatmul.mubr.bf16.gmra.mrb[0].mxu0 %v434
      %v470 = vpop.f32.mrb[0].mxu0
      %v471 = vadd.f32 0.0, %v470
      %v472 = vpop.f32.mrb[0].mxu0
      %v473 = vpop.f32.mrb[0].mxu0
      %v474 = vadd.f32 0.0, %v473
      %v475 = vpop.f32.mrb[0].mxu0
      %476 = vdwg.mxu0
      %v489 = vunpack.c.l.b16 %v358
      %v490 = vunpack.c.l.b16 %v359
      %v491 = vunpack.c.l.b16 %v360
      %v492 = vunpack.c.l.b16 %v361
      %v493 = vunpack.c.l.b16 %v362
      %v494 = vunpack.c.l.b16 %v363
      %v495 = vunpack.c.l.b16 %v364
      %v496 = vunpack.c.l.b16 %v365
      %v497 = vunpack.c.l.b16 %v366
      %v498 = vunpack.c.l.b16 %v367
      %v499 = vunpack.c.l.b16 %v368
      %v500 = vunpack.c.l.b16 %v369
      %v501 = vpack.c.b16 %v490, %v489
      %v502 = vpack.c.b16 %v492, %v491
      %v503 = vpack.c.b16 %v494, %v493
      %v504 = vpack.c.b16 %v496, %v495
      %v505 = vpack.c.b16 %v498, %v497
      %v506 = vpack.c.b16 %v500, %v499
      %v513 = vsel %vm432, %v352, 0
      %515 = vmatprep.subr.bf16.mxu0 0
      %516 = vmatpush1.bf16.msra.mxu0 %v501
      %517 = vmatprep.subr.bf16.mxu0 0
      %518 = vmatpush1.bf16.msra.mxu0 %v502
      %519 = vmatprep.subr.bf16.mxu0 0
      %520 = vmatpush1.bf16.msra.mxu0 %v503
      %521 = vmatprep.subr.bf16.mxu0 0
      %522 = vmatpush1.bf16.msra.mxu0 %v504
      %523 = vmatprep.subr.bf16.mxu0 0
      %524 = vmatpush1.bf16.msra.mxu0 %v505
      %525 = vmatprep.subr.bf16.mxu0 0
      %526 = vmatpush1.bf16.msra.mxu0 %v506
      %527 = vmatprep.subr.bf16.mxu0 0
      %528 = vmatpush1.bf16.msra.mxu0 0
      %529 = vmatprep.subr.bf16.mxu0 0
      %530 = vmatpush1.bf16.msra.mxu0 0
      %531 = vmatprep.subr.bf16.mxu0 0
      %532 = vmatpush1.bf16.msra.mxu0 0
      %533 = vmatprep.subr.bf16.mxu0 0
      %534 = vmatpush1.bf16.msra.mxu0 0
      %535 = vmatprep.subr.bf16.mxu0 0
      %536 = vmatpush1.bf16.msra.mxu0 0
      %537 = vmatprep.subr.bf16.mxu0 0
      %538 = vmatpush1.bf16.msra.mxu0 0
      %539 = vmatprep.subr.bf16.mxu0 0
      %540 = vmatpush1.bf16.msra.mxu0 0
      %541 = vmatprep.subr.bf16.mxu0 0
      %542 = vmatpush1.bf16.msra.mxu0 0
      %543 = vmatprep.subr.bf16.mxu0 0
      %544 = vmatpush1.bf16.msra.mxu0 0
      %545 = vmatprep.subr.bf16.mxu0 0
      %546 = vmatpush1.bf16.msra.mxu0 0
      %547 = vmatprep.mubr.bf16.mxu0 0
      %548 = vmatmul.mubr.bf16.gmra.mrb[0].mxu0 %v513
      %v549 = vpop.f32.mrb[0].mxu0
      %v550 = vadd.f32 %v471, %v549
      %v551 = vpop.f32.mrb[0].mxu0
      %v552 = vpop.f32.mrb[0].mxu0
      %v553 = vadd.f32 %v474, %v552
      %v554 = vpop.f32.mrb[0].mxu0
      %555 = vdwg.mxu0
      %s556 = scalar_lea.vmem %s2, 96
      %v557 = vld [vmem:[%s556] sm:$0xf]
      %v558 = vld [vmem:[%s556 + $0x4] sm:$0xf]
      %v559 = vld [vmem:[%s556 + $0x8] sm:$0xf]
      %v560 = vld [vmem:[%s556 + $0xc] sm:$0xf]
      %v561 = vld [vmem:[%s556 + $0x10] sm:$0xf]
      %v562 = vld [vmem:[%s556 + $0x14] sm:$0xf]
      %v563 = vld [vmem:[%s556 + $0x18] sm:$0xf]
      %v564 = vld [vmem:[%s556 + $0x1c] sm:$0xf]
      %v565 = vld [vmem:[%s556 + $0x20] sm:$0xf]
      %v566 = vld [vmem:[%s556 + $0x24] sm:$0xf]
      %v567 = vld [vmem:[%s556 + $0x28] sm:$0xf]
      %v568 = vld [vmem:[%s556 + $0x2c] sm:$0xf]
      %vm569 = vcmask 1046528
      %v570 = vrot.slane %v352, 1
      %v571 = vrot.slane %v357, 1
      %v572 = vsel %vm569, %v570, %v571
      %v585 = vunpack.c.l.b16 %v557
      %v586 = vunpack.c.l.b16 %v558
      %v587 = vunpack.c.l.b16 %v559
      %v588 = vunpack.c.l.b16 %v560
      %v589 = vunpack.c.l.b16 %v561
      %v590 = vunpack.c.l.b16 %v562
      %v591 = vunpack.c.l.b16 %v563
      %v592 = vunpack.c.l.b16 %v564
      %v593 = vunpack.c.l.b16 %v565
      %v594 = vunpack.c.l.b16 %v566
      %v595 = vunpack.c.l.b16 %v567
      %v596 = vunpack.c.l.b16 %v568
      %v597 = vpack.c.b16 %v586, %v585
      %v598 = vpack.c.b16 %v588, %v587
      %v599 = vpack.c.b16 %v590, %v589
      %v600 = vpack.c.b16 %v592, %v591
      %v601 = vpack.c.b16 %v594, %v593
      %v602 = vpack.c.b16 %v596, %v595
      %v610 = vsel %vm432, %v572, 0
      %612 = vmatprep.subr.bf16.mxu0 0
      %613 = vmatpush1.bf16.msra.mxu0 %v597
      %614 = vmatprep.subr.bf16.mxu0 0
      %615 = vmatpush1.bf16.msra.mxu0 %v598
      %616 = vmatprep.subr.bf16.mxu0 0
      %617 = vmatpush1.bf16.msra.mxu0 %v599
      %618 = vmatprep.subr.bf16.mxu0 0
      %619 = vmatpush1.bf16.msra.mxu0 %v600
      %620 = vmatprep.subr.bf16.mxu0 0
      %621 = vmatpush1.bf16.msra.mxu0 %v601
      %622 = vmatprep.subr.bf16.mxu0 0
      %623 = vmatpush1.bf16.msra.mxu0 %v602
      %624 = vmatprep.subr.bf16.mxu0 0
      %625 = vmatpush1.bf16.msra.mxu0 0
      %626 = vmatprep.subr.bf16.mxu0 0
      %627 = vmatpush1.bf16.msra.mxu0 0
      %628 = vmatprep.subr.bf16.mxu0 0
      %629 = vmatpush1.bf16.msra.mxu0 0
      %630 = vmatprep.subr.bf16.mxu0 0
      %631 = vmatpush1.bf16.msra.mxu0 0
      %632 = vmatprep.subr.bf16.mxu0 0
      %633 = vmatpush1.bf16.msra.mxu0 0
      %634 = vmatprep.subr.bf16.mxu0 0
      %635 = vmatpush1.bf16.msra.mxu0 0
      %636 = vmatprep.subr.bf16.mxu0 0
      %637 = vmatpush1.bf16.msra.mxu0 0
      %638 = vmatprep.subr.bf16.mxu0 0
      %639 = vmatpush1.bf16.msra.mxu0 0
      %640 = vmatprep.subr.bf16.mxu0 0
      %641 = vmatpush1.bf16.msra.mxu0 0
      %642 = vmatprep.subr.bf16.mxu0 0
      %643 = vmatpush1.bf16.msra.mxu0 0
      %644 = vmatprep.mubr.bf16.mxu0 0
      %645 = vmatmul.mubr.bf16.gmra.mrb[0].mxu0 %v610
      %v646 = vpop.f32.mrb[0].mxu0
      %v647 = vadd.f32 0.0, %v646
      %v648 = vpop.f32.mrb[0].mxu0
      %v649 = vpop.f32.mrb[0].mxu0
      %v650 = vadd.f32 0.0, %v649
      %v651 = vpop.f32.mrb[0].mxu0
      %652 = vdwg.mxu0
      %v653 = vadd.f32 %v550, %v647
      %v654 = vadd.f32 %v553, %v650
      %v655 = vld [vmem:[%s3] sm:$0x1]
      %v657 = vlaneseq
      %v658 = vshrl.u32 %v657, 7
      %v659 = vsub.s32 0, %v658
      %v660 = vrot.slane %v655, %v659
      %v662 = vadd.f32 %v653, %v660
      %v663 = vadd.f32 %v654, %v660
      %v664 = vld [vmem:[%s331] sm:$0xff]
      %v665 = vld [vmem:[%s331 + $0x8] sm:$0xff]
      %v666 = vadd.f32 %v662, %v664
      %v667 = vadd.f32 %v663, %v665
      %vm668 = vcmask 64512
      %669 = vst.msk [vmem:[%s341] sm:$0xff] %vm668, %v666
      %670 = vst.msk [vmem:[%s341 + $0x8] sm:$0xff] %vm668, %v667
      %s671 = smul.u32 2, %s21
      %p672 = scmp.lt.s32.totalorder %s20, 1
      %s673 = scalar_select %p672, %s20, 1
      %p674 = scmp.lt.s32.totalorder %s671, 1
      %s675 = scalar_select %p674, %s671, 1
      %s676 = smul.addr %s673, 2
      %s677 = sadd.s32 %s675, %s676
      %s678 = smul.addr %s677, 8
      %s679 = scalar_lea.vmem %s5, %s678
      // Predicated region
      $region41: #{inception_block_forward.11} parent=39 // pred_check
        %p680 = pneg %p176
      $region42: #{inception_block_forward.11} parent=39 // pred_check_branch
        %682 = sbr.rel (%p680) target = $region44
      $region43: #{inception_block_forward.11} parent=39 // pred_region
        %s683 = smul.u32 2, %s21
      $region44: #{inception_block_forward.11} parent=39 // pred_fallthru
        _
    $region40: #{inception_block_forward.11} parent=5 // pred_fallthru
      _
    %p684 = scmp.le.s32.totalorder 2, %s11
    // Predicated region
    $region45: #{inception_block_forward.11} parent=5 // pred_check
      %p685 = pneg %p684
    $region46: #{inception_block_forward.11} parent=5 // pred_check_branch
      %687 = sbr.rel (%p685) target = $region48
    $region47: #{inception_block_forward.11} parent=5 // pred_region
      %s688 = ssub.s32 %s11, 2
      // Predicated region
      $region49: #{inception_block_forward.11} parent=47 // pred_check
        %p689 = pneg %p182
      $region50: #{inception_block_forward.11} parent=47 // pred_check_branch
        %691 = sbr.rel (%p689) target = $region52
      $region51: #{inception_block_forward.11} parent=47 // pred_region
        %s692 = smul.u32 2, %s23
        %p693 = scmp.lt.s32.totalorder %s22, 1
        %s694 = scalar_select %p693, %s22, 1
        %p695 = scmp.lt.s32.totalorder %s692, 1
        %s696 = scalar_select %p695, %s692, 1
        %s697 = smul.addr %s694, 2
        %s698 = sadd.s32 %s696, %s697
        %s699 = smul.addr %s698, 8
        %s700 = scalar_lea.vmem %s5, %s699
      $region52: #{inception_block_forward.11} parent=47 // pred_fallthru
        _
    $region48: #{inception_block_forward.11} parent=5 // pred_fallthru
      _
  $region6: #{inception_block_forward.11} parent=0 // loop_footer
    %s15 = sadd.s32 1, %s11
  $region7: #{inception_block_forward.11} parent=0 // loop_footer_branch
    %10 = sbr.rel target = $region3
  $region8: #{inception_block_forward.11} parent=0 // loop_exit
    _

</llo_original>
